<compile_context>
chip_gen: v6e
topology: v6e:2x2x1
jax: 0.10.0
libtpu: 0.0.40
codegen_flags: <defaults>
</compile_context>

<pallas_src>
import functools
from dataclasses import dataclass

import jax
import jax.numpy as jnp
from jax.experimental import pallas as pl


# ----------------------------------------------------------------------------
# Config (small but structurally faithful to bert-base + resize_token_embeddings)
# ----------------------------------------------------------------------------
@dataclass(frozen=True)
class BertConfig:
    vocab: int = 30524          # resize_token_embeddings(30524)
    max_pos: int = 64
    type_vocab: int = 2
    hidden: int = 32
    n_heads: int = 4
    head_dim: int = 8
    intermediate: int = 64
    n_layers: int = 2
    n_classes: int = 3
    ln_eps: float = 1e-12


# ----------------------------------------------------------------------------
# In-kernel helpers (operate on values, everything stays in VMEM / vregs)
# ----------------------------------------------------------------------------
def _layer_norm(x, g, b, eps):
    mu = jnp.mean(x, axis=-1, keepdims=True)
    var = jnp.mean((x - mu) * (x - mu), axis=-1, keepdims=True)
    return (x - mu) * jax.lax.rsqrt(var + eps) * g + b


def _gelu(x):
    # exact (erf) GELU, as in HF BERT
    return 0.5 * x * (1.0 + jax.lax.erf(x * 0.7071067811865476))


def _attention(q, k, v, mask_add, B, S, nH, d, scale):
    """q,k,v: (B*S, nH*d); mask_add: (B,1,S) additive mask -> (B*S, nH*d)."""
    q3 = q.reshape(B, S, nH * d)
    k3 = k.reshape(B, S, nH * d)
    v3 = v.reshape(B, S, nH * d)
    ctx = []
    for h in range(nH):                               # static unroll, nH=4
        sl = slice(h * d, (h + 1) * d)
        qh, kh, vh = q3[..., sl], k3[..., sl], v3[..., sl]
        s = jnp.einsum("bqd,bkd->bqk", qh, kh,
                       preferred_element_type=jnp.float32) * scale
        s = s + mask_add                              # broadcasts over query rows
        s = s - jnp.max(s, axis=-1, keepdims=True)
        p = jnp.exp(s)
        p = p * pl.reciprocal(jnp.sum(p, axis=-1, keepdims=True), approx=True)
        ctx.append(jnp.einsum("bqk,bkd->bqd", p, vh,
                              preferred_element_type=jnp.float32))
    return jnp.concatenate(ctx, axis=-1).reshape(B * S, nH * d)


# ----------------------------------------------------------------------------
# Single fused kernel: embeddings-LN -> encoder -> pooler -> classifier -> loss
# ----------------------------------------------------------------------------
def _bert_fused_kernel(emb_ref, mask_ref, onehot_ref,
                       eg_ref, eb_ref,
                       qkvw_ref, qkvb_ref, ow_ref, ob_ref,
                       l1g_ref, l1b_ref,
                       iw_ref, ib_ref, fw_ref, fb_ref,
                       l2g_ref, l2b_ref,
                       pw_ref, pb_ref, cw_ref, cb_ref,
                       logits_ref, loss_ref,
                       *, cfg: BertConfig, B, S):
    H, nH, d = cfg.hidden, cfg.n_heads, cfg.head_dim
    eps = cfg.ln_eps
    scale = 1.0 / (d ** 0.5)

    mask_add = mask_ref[...]                          # (B, 1, S) additive mask

    # ---- embeddings: word+pos+type already summed outside; LayerNorm here ----
    x = _layer_norm(emb_ref[...], eg_ref[...], eb_ref[...], eps)   # (B*S, H)

    # ---- encoder layers (weights stacked on a leading layer axis) ----
    for l in range(cfg.n_layers):                     # static unroll, 2 layers
        qkv = jnp.dot(x, qkvw_ref[l],
                      preferred_element_type=jnp.float32) + qkvb_ref[l]
        q = qkv[:, 0:H]
        k = qkv[:, H:2 * H]
        v = qkv[:, 2 * H:3 * H]
        ctx = _attention(q, k, v, mask_add, B, S, nH, d, scale)
        attn_out = jnp.dot(ctx, ow_ref[l],
                           preferred_element_type=jnp.float32) + ob_ref[l]
        # TODO(synk): dropout layers are identity here (inference / p=0 semantics).
        x = _layer_norm(attn_out + x, l1g_ref[l], l1b_ref[l], eps)

        ffn = _gelu(jnp.dot(x, iw_ref[l],
                            preferred_element_type=jnp.float32) + ib_ref[l])
        ffn = jnp.dot(ffn, fw_ref[l],
                      preferred_element_type=jnp.float32) + fb_ref[l]
        x = _layer_norm(ffn + x, l2g_ref[l], l2b_ref[l], eps)

    # ---- pooler: dense + tanh on the [CLS] row of every sequence ----
    cls_rows = jnp.concatenate([x[b * S:b * S + 1, :] for b in range(B)], axis=0)
    pooled = jnp.tanh(jnp.dot(cls_rows, pw_ref[...],
                              preferred_element_type=jnp.float32) + pb_ref[...])

    # ---- classifier head (logits stay in vregs until this single store) ----
    logits = jnp.dot(pooled, cw_ref[...],
                     preferred_element_type=jnp.float32) + cb_ref[...]   # (B, 3)
    logits_ref[...] = logits

    # ---- cross-entropy loss (labels provided as a one-hot matrix) ----
    z = logits - jnp.max(logits, axis=-1, keepdims=True)
    logp = z - jnp.log(jnp.sum(jnp.exp(z), axis=-1, keepdims=True))
    nll = -jnp.sum(logp * onehot_ref[...], axis=-1, keepdims=True)       # (B, 1)
    loss_ref[...] = jnp.mean(nll, keepdims=True)                         # (1, 1)


# ----------------------------------------------------------------------------
# Parameter init (deterministic, BERT-style N(0, 0.02)); layer weights stacked
# ----------------------------------------------------------------------------
def init_params(key, cfg: BertConfig):
    keys = iter(jax.random.split(key, 32))

    def nrm(shape):
        return 0.02 * jax.random.normal(next(keys), shape, jnp.float32)

    H, I, NL = cfg.hidden, cfg.intermediate, cfg.n_layers
    return {
        "word_emb": nrm((cfg.vocab, H)),
        "pos_emb": nrm((cfg.max_pos, H)),
        "type_emb": nrm((cfg.type_vocab, H)),
        "emb_ln_g": jnp.ones((1, H), jnp.float32),
        "emb_ln_b": jnp.zeros((1, H), jnp.float32),
        "pool_w": nrm((H, H)),
        "pool_b": jnp.zeros((1, H), jnp.float32),
        "cls_w": nrm((H, cfg.n_classes)),
        "cls_b": jnp.zeros((1, cfg.n_classes), jnp.float32),
        "layers": {
            # fused QKV projection: [q_w | k_w | v_w] -> (NL, H, 3H)
            "qkv_w": nrm((NL, H, 3 * H)),
            "qkv_b": jnp.zeros((NL, 1, 3 * H), jnp.float32),
            "o_w": nrm((NL, H, H)),
            "o_b": jnp.zeros((NL, 1, H), jnp.float32),
            "ln1_g": jnp.ones((NL, 1, H), jnp.float32),
            "ln1_b": jnp.zeros((NL, 1, H), jnp.float32),
            "i_w": nrm((NL, H, I)),
            "i_b": jnp.zeros((NL, 1, I), jnp.float32),
            "f_w": nrm((NL, I, H)),
            "f_b": jnp.zeros((NL, 1, H), jnp.float32),
            "ln2_g": jnp.ones((NL, 1, H), jnp.float32),
            "ln2_b": jnp.zeros((NL, 1, H), jnp.float32),
        },
    }


# ----------------------------------------------------------------------------
# Forward: one fused pallas_call; only the tiny embedding gather stays in XLA
# ----------------------------------------------------------------------------
def sentiment_classifier_forward(params, input_ids, attention_mask, label_ids,
                                 cfg: BertConfig):
    B, S = input_ids.shape
    H = cfg.hidden

    # XLA glue: 16-row embedding gather + broadcast sum (one small fusion).
    # TODO(synk): could be fused into the kernel via scalar-prefetched input_ids
    # and per-row DMAs from an HBM-resident embedding table.
    word = jnp.take(params["word_emb"], input_ids, axis=0)          # (B, S, H)
    pos = params["pos_emb"][:S][None, :, :]                         # (1, S, H)
    tok = params["type_emb"][0][None, None, :]                      # token_type_ids = 0
    emb_sum = (word + pos + tok).reshape(B * S, H)

    # HF-style additive extended attention mask: (1 - mask) * -10000
    mask_add = ((1.0 - attention_mask.astype(jnp.float32)) * -10000.0
                ).reshape(B, 1, S)
    onehot = jax.nn.one_hot(label_ids, cfg.n_classes, dtype=jnp.float32)

    L = params["layers"]
    kernel = functools.partial(_bert_fused_kernel, cfg=cfg, B=B, S=S)
    logits, loss = pl.pallas_call(
        kernel,
        out_shape=(jax.ShapeDtypeStruct((B, cfg.n_classes), jnp.float32),
                   jax.ShapeDtypeStruct((1, 1), jnp.float32)),
    )(emb_sum, mask_add, onehot,
      params["emb_ln_g"], params["emb_ln_b"],
      L["qkv_w"], L["qkv_b"], L["o_w"], L["o_b"],
      L["ln1_g"], L["ln1_b"],
      L["i_w"], L["i_b"], L["f_w"], L["f_b"],
      L["ln2_g"], L["ln2_b"],
      params["pool_w"], params["pool_b"],
      params["cls_w"], params["cls_b"])

    return {"loss": loss[0, 0], "logits": logits}


# ----------------------------------------------------------------------------
# Main
# ----------------------------------------------------------------------------
if __name__ == "__main__":
    cfg = BertConfig()
    B, S = 2, 8

    key = jax.random.PRNGKey(0)
    k_param, k_ids, k_lbl = jax.random.split(key, 3)

    params = init_params(k_param, cfg)

    input_ids = jax.random.randint(k_ids, (B, S), 0, cfg.vocab, dtype=jnp.int32)
    attention_mask = jnp.ones((B, S), jnp.int32).at[1, S - 2:].set(0)  # some padding
    label_ids = jax.random.randint(k_lbl, (B,), 0, cfg.n_classes, dtype=jnp.int32)

    fwd = jax.jit(functools.partial(sentiment_classifier_forward, cfg=cfg))
    outputs = fwd(params, input_ids, attention_mask, label_ids)
    jax.block_until_ready(outputs)

    assert outputs["logits"].shape == (B, cfg.n_classes)
    assert outputs["loss"].shape == ()
    print("KERNEL_OK")
</pallas_src>

<mosaic_0001>
module attributes {stable_mosaic.version = 11 : i64} {
  func.func @_bert_fused_kernel(%arg0: memref<16x32xf32, #tpu.memory_space<vmem>>, %arg1: memref<2x1x8xf32, #tpu.memory_space<vmem>>, %arg2: memref<2x3xf32, #tpu.memory_space<vmem>>, %arg3: memref<1x32xf32, #tpu.memory_space<vmem>>, %arg4: memref<1x32xf32, #tpu.memory_space<vmem>>, %arg5: memref<2x32x96xf32, #tpu.memory_space<vmem>>, %arg6: memref<2x1x96xf32, #tpu.memory_space<vmem>>, %arg7: memref<2x32x32xf32, #tpu.memory_space<vmem>>, %arg8: memref<2x1x32xf32, #tpu.memory_space<vmem>>, %arg9: memref<2x1x32xf32, #tpu.memory_space<vmem>>, %arg10: memref<2x1x32xf32, #tpu.memory_space<vmem>>, %arg11: memref<2x32x64xf32, #tpu.memory_space<vmem>>, %arg12: memref<2x1x64xf32, #tpu.memory_space<vmem>>, %arg13: memref<2x64x32xf32, #tpu.memory_space<vmem>>, %arg14: memref<2x1x32xf32, #tpu.memory_space<vmem>>, %arg15: memref<2x1x32xf32, #tpu.memory_space<vmem>>, %arg16: memref<2x1x32xf32, #tpu.memory_space<vmem>>, %arg17: memref<32x32xf32, #tpu.memory_space<vmem>>, %arg18: memref<1x32xf32, #tpu.memory_space<vmem>>, %arg19: memref<32x3xf32, #tpu.memory_space<vmem>>, %arg20: memref<1x3xf32, #tpu.memory_space<vmem>>, %arg21: memref<2x3xf32, #tpu.memory_space<vmem>>, %arg22: memref<1x1xf32, #tpu.memory_space<vmem>>) attributes {dimension_semantics = [], scalar_prefetch = 0 : i64, scratch_operands = 0 : i64, tpu.core_type = #tpu.core_type<tc>} {
    %c0 = arith.constant 0 : index
    %c0_0 = arith.constant 0 : index
    %c0_1 = arith.constant 0 : index
    %0 = vector.load %arg1[%c0, %c0_0, %c0_1] : memref<2x1x8xf32, #tpu.memory_space<vmem>>, vector<2x1x8xf32>
    %c0_2 = arith.constant 0 : index
    %c0_3 = arith.constant 0 : index
    %1 = vector.load %arg0[%c0_2, %c0_3] : memref<16x32xf32, #tpu.memory_space<vmem>>, vector<16x32xf32>
    %c0_4 = arith.constant 0 : index
    %c0_5 = arith.constant 0 : index
    %2 = vector.load %arg3[%c0_4, %c0_5] : memref<1x32xf32, #tpu.memory_space<vmem>>, vector<1x32xf32>
    %c0_6 = arith.constant 0 : index
    %c0_7 = arith.constant 0 : index
    %3 = vector.load %arg4[%c0_6, %c0_7] : memref<1x32xf32, #tpu.memory_space<vmem>>, vector<1x32xf32>
    %cst = arith.constant dense<0.000000e+00> : vector<16xf32>
    %4 = vector.multi_reduction <add>, %1, %cst [1] : vector<16x32xf32> to vector<16xf32>
    %5 = vector.shape_cast %4 : vector<16xf32> to vector<16x1xf32>
    %cst_8 = arith.constant 3.200000e+01 : f32
    %6 = vector.broadcast %cst_8 : f32 to vector<16x1xf32>
    %7 = arith.divf %5, %6 : vector<16x1xf32>
    %8 = vector.broadcast %7 : vector<16x1xf32> to vector<16x32xf32>
    %9 = arith.subf %1, %8 : vector<16x32xf32>
    %10 = vector.broadcast %7 : vector<16x1xf32> to vector<16x32xf32>
    %11 = arith.subf %1, %10 : vector<16x32xf32>
    %12 = arith.mulf %9, %11 : vector<16x32xf32>
    %cst_9 = arith.constant dense<0.000000e+00> : vector<16xf32>
    %13 = vector.multi_reduction <add>, %12, %cst_9 [1] : vector<16x32xf32> to vector<16xf32>
    %14 = vector.shape_cast %13 : vector<16xf32> to vector<16x1xf32>
    %cst_10 = arith.constant 3.200000e+01 : f32
    %15 = vector.broadcast %cst_10 : f32 to vector<16x1xf32>
    %16 = arith.divf %14, %15 : vector<16x1xf32>
    %17 = vector.broadcast %7 : vector<16x1xf32> to vector<16x32xf32>
    %18 = arith.subf %1, %17 : vector<16x32xf32>
    %cst_11 = arith.constant 9.99999996E-13 : f32
    %19 = vector.broadcast %cst_11 : f32 to vector<16x1xf32>
    %20 = arith.addf %16, %19 : vector<16x1xf32>
    %21 = math.rsqrt %20 : vector<16x1xf32>
    %22 = vector.broadcast %21 : vector<16x1xf32> to vector<16x32xf32>
    %23 = arith.mulf %18, %22 : vector<16x32xf32>
    %24 = vector.broadcast %2 : vector<1x32xf32> to vector<16x32xf32>
    %25 = arith.mulf %23, %24 : vector<16x32xf32>
    %26 = vector.broadcast %3 : vector<1x32xf32> to vector<16x32xf32>
    %27 = arith.addf %25, %26 : vector<16x32xf32>
    %c0_12 = arith.constant 0 : index
    %c0_13 = arith.constant 0 : index
    %c0_14 = arith.constant 0 : index
    %28 = vector.load %arg5[%c0_12, %c0_13, %c0_14] : memref<2x32x96xf32, #tpu.memory_space<vmem>>, vector<1x32x96xf32>
    %29 = vector.shape_cast %28 : vector<1x32x96xf32> to vector<32x96xf32>
    %cst_15 = arith.constant dense<0.000000e+00> : vector<16x96xf32>
    %30 = tpu.matmul %27, %29, %cst_15 {dimension_numbers = #tpu.dot_dimension_numbers<[1], [0], [0], [1], [0, 0, 1, 1], [], []>} : vector<16x32xf32>, vector<32x96xf32>, vector<16x96xf32> -> vector<16x96xf32>
    %c0_16 = arith.constant 0 : index
    %c0_17 = arith.constant 0 : index
    %c0_18 = arith.constant 0 : index
    %31 = vector.load %arg6[%c0_16, %c0_17, %c0_18] : memref<2x1x96xf32, #tpu.memory_space<vmem>>, vector<1x1x96xf32>
    %32 = vector.shape_cast %31 : vector<1x1x96xf32> to vector<1x96xf32>
    %33 = vector.broadcast %32 : vector<1x96xf32> to vector<16x96xf32>
    %34 = arith.addf %30, %33 : vector<16x96xf32>
    %35 = vector.extract_strided_slice %34 {offsets = [0, 0], sizes = [16, 32], strides = [1, 1]} : vector<16x96xf32> to vector<16x32xf32>
    %36 = vector.extract_strided_slice %34 {offsets = [0, 32], sizes = [16, 32], strides = [1, 1]} : vector<16x96xf32> to vector<16x32xf32>
    %37 = vector.extract_strided_slice %34 {offsets = [0, 64], sizes = [16, 32], strides = [1, 1]} : vector<16x96xf32> to vector<16x32xf32>
    %38 = vector.shape_cast %35 : vector<16x32xf32> to vector<2x8x32xf32>
    %39 = vector.shape_cast %36 : vector<16x32xf32> to vector<2x8x32xf32>
    %40 = vector.shape_cast %37 : vector<16x32xf32> to vector<2x8x32xf32>
    %41 = vector.extract_strided_slice %38 {offsets = [0, 0, 0], sizes = [2, 8, 8], strides = [1, 1, 1]} : vector<2x8x32xf32> to vector<2x8x8xf32>
    %42 = vector.extract_strided_slice %39 {offsets = [0, 0, 0], sizes = [2, 8, 8], strides = [1, 1, 1]} : vector<2x8x32xf32> to vector<2x8x8xf32>
    %43 = vector.extract_strided_slice %40 {offsets = [0, 0, 0], sizes = [2, 8, 8], strides = [1, 1, 1]} : vector<2x8x32xf32> to vector<2x8x8xf32>
    "tpu.trace_start"() <{level = 10 : i32, message = "bqd,bkd->bqk"}> : () -> ()
    %cst_19 = arith.constant dense<0.000000e+00> : vector<2x8x8xf32>
    %44 = tpu.matmul %41, %42, %cst_19 {dimension_numbers = #tpu.dot_dimension_numbers<[2], [2], [1], [1], [0, 0, 0, 1, 1, 1], [0], [0]>} : vector<2x8x8xf32>, vector<2x8x8xf32>, vector<2x8x8xf32> -> vector<2x8x8xf32>
    "tpu.trace_stop"() : () -> ()
    %cst_20 = arith.constant 0.353553385 : f32
    %45 = vector.broadcast %cst_20 : f32 to vector<2x8x8xf32>
    %46 = arith.mulf %44, %45 : vector<2x8x8xf32>
    %47 = vector.broadcast %0 : vector<2x1x8xf32> to vector<2x8x8xf32>
    %48 = arith.addf %46, %47 : vector<2x8x8xf32>
    %cst_21 = arith.constant dense<0xFF800000> : vector<2x8xf32>
    %49 = vector.multi_reduction <maximumf>, %48, %cst_21 [2] : vector<2x8x8xf32> to vector<2x8xf32>
    %50 = vector.shape_cast %49 : vector<2x8xf32> to vector<2x8x1xf32>
    %51 = vector.broadcast %50 : vector<2x8x1xf32> to vector<2x8x8xf32>
    %52 = arith.subf %48, %51 : vector<2x8x8xf32>
    %53 = math.exp %52 : vector<2x8x8xf32>
    %cst_22 = arith.constant dense<0.000000e+00> : vector<2x8xf32>
    %54 = vector.multi_reduction <add>, %53, %cst_22 [2] : vector<2x8x8xf32> to vector<2x8xf32>
    %55 = vector.shape_cast %54 : vector<2x8xf32> to vector<2x8x1xf32>
    %56 = tpu.reciprocal %55 {approx = true} : vector<2x8x1xf32> -> vector<2x8x1xf32>
    %57 = vector.broadcast %56 : vector<2x8x1xf32> to vector<2x8x8xf32>
    %58 = arith.mulf %53, %57 : vector<2x8x8xf32>
    "tpu.trace_start"() <{level = 10 : i32, message = "bqk,bkd->bqd"}> : () -> ()
    %cst_23 = arith.constant dense<0.000000e+00> : vector<2x8x8xf32>
    %59 = tpu.matmul %58, %43, %cst_23 {dimension_numbers = #tpu.dot_dimension_numbers<[2], [1], [1], [2], [0, 0, 0, 1, 1, 2], [0], [0]>} : vector<2x8x8xf32>, vector<2x8x8xf32>, vector<2x8x8xf32> -> vector<2x8x8xf32>
    "tpu.trace_stop"() : () -> ()
    %60 = vector.extract_strided_slice %38 {offsets = [0, 0, 8], sizes = [2, 8, 8], strides = [1, 1, 1]} : vector<2x8x32xf32> to vector<2x8x8xf32>
    %61 = vector.extract_strided_slice %39 {offsets = [0, 0, 8], sizes = [2, 8, 8], strides = [1, 1, 1]} : vector<2x8x32xf32> to vector<2x8x8xf32>
    %62 = vector.extract_strided_slice %40 {offsets = [0, 0, 8], sizes = [2, 8, 8], strides = [1, 1, 1]} : vector<2x8x32xf32> to vector<2x8x8xf32>
    "tpu.trace_start"() <{level = 10 : i32, message = "bqd,bkd->bqk"}> : () -> ()
    %cst_24 = arith.constant dense<0.000000e+00> : vector<2x8x8xf32>
    %63 = tpu.matmul %60, %61, %cst_24 {dimension_numbers = #tpu.dot_dimension_numbers<[2], [2], [1], [1], [0, 0, 0, 1, 1, 1], [0], [0]>} : vector<2x8x8xf32>, vector<2x8x8xf32>, vector<2x8x8xf32> -> vector<2x8x8xf32>
    "tpu.trace_stop"() : () -> ()
    %cst_25 = arith.constant 0.353553385 : f32
    %64 = vector.broadcast %cst_25 : f32 to vector<2x8x8xf32>
    %65 = arith.mulf %63, %64 : vector<2x8x8xf32>
    %66 = vector.broadcast %0 : vector<2x1x8xf32> to vector<2x8x8xf32>
    %67 = arith.addf %65, %66 : vector<2x8x8xf32>
    %cst_26 = arith.constant dense<0xFF800000> : vector<2x8xf32>
    %68 = vector.multi_reduction <maximumf>, %67, %cst_26 [2] : vector<2x8x8xf32> to vector<2x8xf32>
    %69 = vector.shape_cast %68 : vector<2x8xf32> to vector<2x8x1xf32>
    %70 = vector.broadcast %69 : vector<2x8x1xf32> to vector<2x8x8xf32>
    %71 = arith.subf %67, %70 : vector<2x8x8xf32>
    %72 = math.exp %71 : vector<2x8x8xf32>
    %cst_27 = arith.constant dense<0.000000e+00> : vector<2x8xf32>
    %73 = vector.multi_reduction <add>, %72, %cst_27 [2] : vector<2x8x8xf32> to vector<2x8xf32>
    %74 = vector.shape_cast %73 : vector<2x8xf32> to vector<2x8x1xf32>
    %75 = tpu.reciprocal %74 {approx = true} : vector<2x8x1xf32> -> vector<2x8x1xf32>
    %76 = vector.broadcast %75 : vector<2x8x1xf32> to vector<2x8x8xf32>
    %77 = arith.mulf %72, %76 : vector<2x8x8xf32>
    "tpu.trace_start"() <{level = 10 : i32, message = "bqk,bkd->bqd"}> : () -> ()
    %cst_28 = arith.constant dense<0.000000e+00> : vector<2x8x8xf32>
    %78 = tpu.matmul %77, %62, %cst_28 {dimension_numbers = #tpu.dot_dimension_numbers<[2], [1], [1], [2], [0, 0, 0, 1, 1, 2], [0], [0]>} : vector<2x8x8xf32>, vector<2x8x8xf32>, vector<2x8x8xf32> -> vector<2x8x8xf32>
    "tpu.trace_stop"() : () -> ()
    %79 = vector.extract_strided_slice %38 {offsets = [0, 0, 16], sizes = [2, 8, 8], strides = [1, 1, 1]} : vector<2x8x32xf32> to vector<2x8x8xf32>
    %80 = vector.extract_strided_slice %39 {offsets = [0, 0, 16], sizes = [2, 8, 8], strides = [1, 1, 1]} : vector<2x8x32xf32> to vector<2x8x8xf32>
    %81 = vector.extract_strided_slice %40 {offsets = [0, 0, 16], sizes = [2, 8, 8], strides = [1, 1, 1]} : vector<2x8x32xf32> to vector<2x8x8xf32>
    "tpu.trace_start"() <{level = 10 : i32, message = "bqd,bkd->bqk"}> : () -> ()
    %cst_29 = arith.constant dense<0.000000e+00> : vector<2x8x8xf32>
    %82 = tpu.matmul %79, %80, %cst_29 {dimension_numbers = #tpu.dot_dimension_numbers<[2], [2], [1], [1], [0, 0, 0, 1, 1, 1], [0], [0]>} : vector<2x8x8xf32>, vector<2x8x8xf32>, vector<2x8x8xf32> -> vector<2x8x8xf32>
    "tpu.trace_stop"() : () -> ()
    %cst_30 = arith.constant 0.353553385 : f32
    %83 = vector.broadcast %cst_30 : f32 to vector<2x8x8xf32>
    %84 = arith.mulf %82, %83 : vector<2x8x8xf32>
    %85 = vector.broadcast %0 : vector<2x1x8xf32> to vector<2x8x8xf32>
    %86 = arith.addf %84, %85 : vector<2x8x8xf32>
    %cst_31 = arith.constant dense<0xFF800000> : vector<2x8xf32>
    %87 = vector.multi_reduction <maximumf>, %86, %cst_31 [2] : vector<2x8x8xf32> to vector<2x8xf32>
    %88 = vector.shape_cast %87 : vector<2x8xf32> to vector<2x8x1xf32>
    %89 = vector.broadcast %88 : vector<2x8x1xf32> to vector<2x8x8xf32>
    %90 = arith.subf %86, %89 : vector<2x8x8xf32>
    %91 = math.exp %90 : vector<2x8x8xf32>
    %cst_32 = arith.constant dense<0.000000e+00> : vector<2x8xf32>
    %92 = vector.multi_reduction <add>, %91, %cst_32 [2] : vector<2x8x8xf32> to vector<2x8xf32>
    %93 = vector.shape_cast %92 : vector<2x8xf32> to vector<2x8x1xf32>
    %94 = tpu.reciprocal %93 {approx = true} : vector<2x8x1xf32> -> vector<2x8x1xf32>
    %95 = vector.broadcast %94 : vector<2x8x1xf32> to vector<2x8x8xf32>
    %96 = arith.mulf %91, %95 : vector<2x8x8xf32>
    "tpu.trace_start"() <{level = 10 : i32, message = "bqk,bkd->bqd"}> : () -> ()
    %cst_33 = arith.constant dense<0.000000e+00> : vector<2x8x8xf32>
    %97 = tpu.matmul %96, %81, %cst_33 {dimension_numbers = #tpu.dot_dimension_numbers<[2], [1], [1], [2], [0, 0, 0, 1, 1, 2], [0], [0]>} : vector<2x8x8xf32>, vector<2x8x8xf32>, vector<2x8x8xf32> -> vector<2x8x8xf32>
    "tpu.trace_stop"() : () -> ()
    %98 = vector.extract_strided_slice %38 {offsets = [0, 0, 24], sizes = [2, 8, 8], strides = [1, 1, 1]} : vector<2x8x32xf32> to vector<2x8x8xf32>
    %99 = vector.extract_strided_slice %39 {offsets = [0, 0, 24], sizes = [2, 8, 8], strides = [1, 1, 1]} : vector<2x8x32xf32> to vector<2x8x8xf32>
    %100 = vector.extract_strided_slice %40 {offsets = [0, 0, 24], sizes = [2, 8, 8], strides = [1, 1, 1]} : vector<2x8x32xf32> to vector<2x8x8xf32>
    "tpu.trace_start"() <{level = 10 : i32, message = "bqd,bkd->bqk"}> : () -> ()
    %cst_34 = arith.constant dense<0.000000e+00> : vector<2x8x8xf32>
    %101 = tpu.matmul %98, %99, %cst_34 {dimension_numbers = #tpu.dot_dimension_numbers<[2], [2], [1], [1], [0, 0, 0, 1, 1, 1], [0], [0]>} : vector<2x8x8xf32>, vector<2x8x8xf32>, vector<2x8x8xf32> -> vector<2x8x8xf32>
    "tpu.trace_stop"() : () -> ()
    %cst_35 = arith.constant 0.353553385 : f32
    %102 = vector.broadcast %cst_35 : f32 to vector<2x8x8xf32>
    %103 = arith.mulf %101, %102 : vector<2x8x8xf32>
    %104 = vector.broadcast %0 : vector<2x1x8xf32> to vector<2x8x8xf32>
    %105 = arith.addf %103, %104 : vector<2x8x8xf32>
    %cst_36 = arith.constant dense<0xFF800000> : vector<2x8xf32>
    %106 = vector.multi_reduction <maximumf>, %105, %cst_36 [2] : vector<2x8x8xf32> to vector<2x8xf32>
    %107 = vector.shape_cast %106 : vector<2x8xf32> to vector<2x8x1xf32>
    %108 = vector.broadcast %107 : vector<2x8x1xf32> to vector<2x8x8xf32>
    %109 = arith.subf %105, %108 : vector<2x8x8xf32>
    %110 = math.exp %109 : vector<2x8x8xf32>
    %cst_37 = arith.constant dense<0.000000e+00> : vector<2x8xf32>
    %111 = vector.multi_reduction <add>, %110, %cst_37 [2] : vector<2x8x8xf32> to vector<2x8xf32>
    %112 = vector.shape_cast %111 : vector<2x8xf32> to vector<2x8x1xf32>
    %113 = tpu.reciprocal %112 {approx = true} : vector<2x8x1xf32> -> vector<2x8x1xf32>
    %114 = vector.broadcast %113 : vector<2x8x1xf32> to vector<2x8x8xf32>
    %115 = arith.mulf %110, %114 : vector<2x8x8xf32>
    "tpu.trace_start"() <{level = 10 : i32, message = "bqk,bkd->bqd"}> : () -> ()
    %cst_38 = arith.constant dense<0.000000e+00> : vector<2x8x8xf32>
    %116 = tpu.matmul %115, %100, %cst_38 {dimension_numbers = #tpu.dot_dimension_numbers<[2], [1], [1], [2], [0, 0, 0, 1, 1, 2], [0], [0]>} : vector<2x8x8xf32>, vector<2x8x8xf32>, vector<2x8x8xf32> -> vector<2x8x8xf32>
    "tpu.trace_stop"() : () -> ()
    %117 = tpu.concatenate %59, %78, %97, %116 in 2 : vector<2x8x8xf32>, vector<2x8x8xf32>, vector<2x8x8xf32>, vector<2x8x8xf32> -> vector<2x8x32xf32>
    %118 = vector.shape_cast %117 : vector<2x8x32xf32> to vector<16x32xf32>
    %c0_39 = arith.constant 0 : index
    %c0_40 = arith.constant 0 : index
    %c0_41 = arith.constant 0 : index
    %119 = vector.load %arg7[%c0_39, %c0_40, %c0_41] : memref<2x32x32xf32, #tpu.memory_space<vmem>>, vector<1x32x32xf32>
    %120 = vector.shape_cast %119 : vector<1x32x32xf32> to vector<32x32xf32>
    %cst_42 = arith.constant dense<0.000000e+00> : vector<16x32xf32>
    %121 = tpu.matmul %118, %120, %cst_42 {dimension_numbers = #tpu.dot_dimension_numbers<[1], [0], [0], [1], [0, 0, 1, 1], [], []>} : vector<16x32xf32>, vector<32x32xf32>, vector<16x32xf32> -> vector<16x32xf32>
    %c0_43 = arith.constant 0 : index
    %c0_44 = arith.constant 0 : index
    %c0_45 = arith.constant 0 : index
    %122 = vector.load %arg8[%c0_43, %c0_44, %c0_45] : memref<2x1x32xf32, #tpu.memory_space<vmem>>, vector<1x1x32xf32>
    %123 = vector.shape_cast %122 : vector<1x1x32xf32> to vector<1x32xf32>
    %124 = vector.broadcast %123 : vector<1x32xf32> to vector<16x32xf32>
    %125 = arith.addf %121, %124 : vector<16x32xf32>
    %126 = arith.addf %125, %27 : vector<16x32xf32>
    %c0_46 = arith.constant 0 : index
    %c0_47 = arith.constant 0 : index
    %c0_48 = arith.constant 0 : index
    %127 = vector.load %arg9[%c0_46, %c0_47, %c0_48] : memref<2x1x32xf32, #tpu.memory_space<vmem>>, vector<1x1x32xf32>
    %128 = vector.shape_cast %127 : vector<1x1x32xf32> to vector<1x32xf32>
    %c0_49 = arith.constant 0 : index
    %c0_50 = arith.constant 0 : index
    %c0_51 = arith.constant 0 : index
    %129 = vector.load %arg10[%c0_49, %c0_50, %c0_51] : memref<2x1x32xf32, #tpu.memory_space<vmem>>, vector<1x1x32xf32>
    %130 = vector.shape_cast %129 : vector<1x1x32xf32> to vector<1x32xf32>
    %cst_52 = arith.constant dense<0.000000e+00> : vector<16xf32>
    %131 = vector.multi_reduction <add>, %126, %cst_52 [1] : vector<16x32xf32> to vector<16xf32>
    %132 = vector.shape_cast %131 : vector<16xf32> to vector<16x1xf32>
    %cst_53 = arith.constant 3.200000e+01 : f32
    %133 = vector.broadcast %cst_53 : f32 to vector<16x1xf32>
    %134 = arith.divf %132, %133 : vector<16x1xf32>
    %135 = vector.broadcast %134 : vector<16x1xf32> to vector<16x32xf32>
    %136 = arith.subf %126, %135 : vector<16x32xf32>
    %137 = vector.broadcast %134 : vector<16x1xf32> to vector<16x32xf32>
    %138 = arith.subf %126, %137 : vector<16x32xf32>
    %139 = arith.mulf %136, %138 : vector<16x32xf32>
    %cst_54 = arith.constant dense<0.000000e+00> : vector<16xf32>
    %140 = vector.multi_reduction <add>, %139, %cst_54 [1] : vector<16x32xf32> to vector<16xf32>
    %141 = vector.shape_cast %140 : vector<16xf32> to vector<16x1xf32>
    %cst_55 = arith.constant 3.200000e+01 : f32
    %142 = vector.broadcast %cst_55 : f32 to vector<16x1xf32>
    %143 = arith.divf %141, %142 : vector<16x1xf32>
    %144 = vector.broadcast %134 : vector<16x1xf32> to vector<16x32xf32>
    %145 = arith.subf %126, %144 : vector<16x32xf32>
    %cst_56 = arith.constant 9.99999996E-13 : f32
    %146 = vector.broadcast %cst_56 : f32 to vector<16x1xf32>
    %147 = arith.addf %143, %146 : vector<16x1xf32>
    %148 = math.rsqrt %147 : vector<16x1xf32>
    %149 = vector.broadcast %148 : vector<16x1xf32> to vector<16x32xf32>
    %150 = arith.mulf %145, %149 : vector<16x32xf32>
    %151 = vector.broadcast %128 : vector<1x32xf32> to vector<16x32xf32>
    %152 = arith.mulf %150, %151 : vector<16x32xf32>
    %153 = vector.broadcast %130 : vector<1x32xf32> to vector<16x32xf32>
    %154 = arith.addf %152, %153 : vector<16x32xf32>
    %c0_57 = arith.constant 0 : index
    %c0_58 = arith.constant 0 : index
    %c0_59 = arith.constant 0 : index
    %155 = vector.load %arg11[%c0_57, %c0_58, %c0_59] : memref<2x32x64xf32, #tpu.memory_space<vmem>>, vector<1x32x64xf32>
    %156 = vector.shape_cast %155 : vector<1x32x64xf32> to vector<32x64xf32>
    %cst_60 = arith.constant dense<0.000000e+00> : vector<16x64xf32>
    %157 = tpu.matmul %154, %156, %cst_60 {dimension_numbers = #tpu.dot_dimension_numbers<[1], [0], [0], [1], [0, 0, 1, 1], [], []>} : vector<16x32xf32>, vector<32x64xf32>, vector<16x64xf32> -> vector<16x64xf32>
    %c0_61 = arith.constant 0 : index
    %c0_62 = arith.constant 0 : index
    %c0_63 = arith.constant 0 : index
    %158 = vector.load %arg12[%c0_61, %c0_62, %c0_63] : memref<2x1x64xf32, #tpu.memory_space<vmem>>, vector<1x1x64xf32>
    %159 = vector.shape_cast %158 : vector<1x1x64xf32> to vector<1x64xf32>
    %160 = vector.broadcast %159 : vector<1x64xf32> to vector<16x64xf32>
    %161 = arith.addf %157, %160 : vector<16x64xf32>
    %cst_64 = arith.constant 5.000000e-01 : f32
    %162 = vector.broadcast %cst_64 : f32 to vector<16x64xf32>
    %163 = arith.mulf %162, %161 : vector<16x64xf32>
    %cst_65 = arith.constant 0.707106769 : f32
    %164 = vector.broadcast %cst_65 : f32 to vector<16x64xf32>
    %165 = arith.mulf %161, %164 : vector<16x64xf32>
    %166 = math.erf %165 : vector<16x64xf32>
    %cst_66 = arith.constant 1.000000e+00 : f32
    %167 = vector.broadcast %cst_66 : f32 to vector<16x64xf32>
    %168 = arith.addf %167, %166 : vector<16x64xf32>
    %169 = arith.mulf %163, %168 : vector<16x64xf32>
    %c0_67 = arith.constant 0 : index
    %c0_68 = arith.constant 0 : index
    %c0_69 = arith.constant 0 : index
    %170 = vector.load %arg13[%c0_67, %c0_68, %c0_69] : memref<2x64x32xf32, #tpu.memory_space<vmem>>, vector<1x64x32xf32>
    %171 = vector.shape_cast %170 : vector<1x64x32xf32> to vector<64x32xf32>
    %cst_70 = arith.constant dense<0.000000e+00> : vector<16x32xf32>
    %172 = tpu.matmul %169, %171, %cst_70 {dimension_numbers = #tpu.dot_dimension_numbers<[1], [0], [0], [1], [0, 0, 1, 1], [], []>} : vector<16x64xf32>, vector<64x32xf32>, vector<16x32xf32> -> vector<16x32xf32>
    %c0_71 = arith.constant 0 : index
    %c0_72 = arith.constant 0 : index
    %c0_73 = arith.constant 0 : index
    %173 = vector.load %arg14[%c0_71, %c0_72, %c0_73] : memref<2x1x32xf32, #tpu.memory_space<vmem>>, vector<1x1x32xf32>
    %174 = vector.shape_cast %173 : vector<1x1x32xf32> to vector<1x32xf32>
    %175 = vector.broadcast %174 : vector<1x32xf32> to vector<16x32xf32>
    %176 = arith.addf %172, %175 : vector<16x32xf32>
    %177 = arith.addf %176, %154 : vector<16x32xf32>
    %c0_74 = arith.constant 0 : index
    %c0_75 = arith.constant 0 : index
    %c0_76 = arith.constant 0 : index
    %178 = vector.load %arg15[%c0_74, %c0_75, %c0_76] : memref<2x1x32xf32, #tpu.memory_space<vmem>>, vector<1x1x32xf32>
    %179 = vector.shape_cast %178 : vector<1x1x32xf32> to vector<1x32xf32>
    %c0_77 = arith.constant 0 : index
    %c0_78 = arith.constant 0 : index
    %c0_79 = arith.constant 0 : index
    %180 = vector.load %arg16[%c0_77, %c0_78, %c0_79] : memref<2x1x32xf32, #tpu.memory_space<vmem>>, vector<1x1x32xf32>
    %181 = vector.shape_cast %180 : vector<1x1x32xf32> to vector<1x32xf32>
    %cst_80 = arith.constant dense<0.000000e+00> : vector<16xf32>
    %182 = vector.multi_reduction <add>, %177, %cst_80 [1] : vector<16x32xf32> to vector<16xf32>
    %183 = vector.shape_cast %182 : vector<16xf32> to vector<16x1xf32>
    %cst_81 = arith.constant 3.200000e+01 : f32
    %184 = vector.broadcast %cst_81 : f32 to vector<16x1xf32>
    %185 = arith.divf %183, %184 : vector<16x1xf32>
    %186 = vector.broadcast %185 : vector<16x1xf32> to vector<16x32xf32>
    %187 = arith.subf %177, %186 : vector<16x32xf32>
    %188 = vector.broadcast %185 : vector<16x1xf32> to vector<16x32xf32>
    %189 = arith.subf %177, %188 : vector<16x32xf32>
    %190 = arith.mulf %187, %189 : vector<16x32xf32>
    %cst_82 = arith.constant dense<0.000000e+00> : vector<16xf32>
    %191 = vector.multi_reduction <add>, %190, %cst_82 [1] : vector<16x32xf32> to vector<16xf32>
    %192 = vector.shape_cast %191 : vector<16xf32> to vector<16x1xf32>
    %cst_83 = arith.constant 3.200000e+01 : f32
    %193 = vector.broadcast %cst_83 : f32 to vector<16x1xf32>
    %194 = arith.divf %192, %193 : vector<16x1xf32>
    %195 = vector.broadcast %185 : vector<16x1xf32> to vector<16x32xf32>
    %196 = arith.subf %177, %195 : vector<16x32xf32>
    %cst_84 = arith.constant 9.99999996E-13 : f32
    %197 = vector.broadcast %cst_84 : f32 to vector<16x1xf32>
    %198 = arith.addf %194, %197 : vector<16x1xf32>
    %199 = math.rsqrt %198 : vector<16x1xf32>
    %200 = vector.broadcast %199 : vector<16x1xf32> to vector<16x32xf32>
    %201 = arith.mulf %196, %200 : vector<16x32xf32>
    %202 = vector.broadcast %179 : vector<1x32xf32> to vector<16x32xf32>
    %203 = arith.mulf %201, %202 : vector<16x32xf32>
    %204 = vector.broadcast %181 : vector<1x32xf32> to vector<16x32xf32>
    %205 = arith.addf %203, %204 : vector<16x32xf32>
    %c1 = arith.constant 1 : index
    %c0_85 = arith.constant 0 : index
    %c0_86 = arith.constant 0 : index
    %206 = vector.load %arg5[%c1, %c0_85, %c0_86] : memref<2x32x96xf32, #tpu.memory_space<vmem>>, vector<1x32x96xf32>
    %207 = vector.shape_cast %206 : vector<1x32x96xf32> to vector<32x96xf32>
    %cst_87 = arith.constant dense<0.000000e+00> : vector<16x96xf32>
    %208 = tpu.matmul %205, %207, %cst_87 {dimension_numbers = #tpu.dot_dimension_numbers<[1], [0], [0], [1], [0, 0, 1, 1], [], []>} : vector<16x32xf32>, vector<32x96xf32>, vector<16x96xf32> -> vector<16x96xf32>
    %c1_88 = arith.constant 1 : index
    %c0_89 = arith.constant 0 : index
    %c0_90 = arith.constant 0 : index
    %209 = vector.load %arg6[%c1_88, %c0_89, %c0_90] : memref<2x1x96xf32, #tpu.memory_space<vmem>>, vector<1x1x96xf32>
    %210 = vector.shape_cast %209 : vector<1x1x96xf32> to vector<1x96xf32>
    %211 = vector.broadcast %210 : vector<1x96xf32> to vector<16x96xf32>
    %212 = arith.addf %208, %211 : vector<16x96xf32>
    %213 = vector.extract_strided_slice %212 {offsets = [0, 0], sizes = [16, 32], strides = [1, 1]} : vector<16x96xf32> to vector<16x32xf32>
    %214 = vector.extract_strided_slice %212 {offsets = [0, 32], sizes = [16, 32], strides = [1, 1]} : vector<16x96xf32> to vector<16x32xf32>
    %215 = vector.extract_strided_slice %212 {offsets = [0, 64], sizes = [16, 32], strides = [1, 1]} : vector<16x96xf32> to vector<16x32xf32>
    %216 = vector.shape_cast %213 : vector<16x32xf32> to vector<2x8x32xf32>
    %217 = vector.shape_cast %214 : vector<16x32xf32> to vector<2x8x32xf32>
    %218 = vector.shape_cast %215 : vector<16x32xf32> to vector<2x8x32xf32>
    %219 = vector.extract_strided_slice %216 {offsets = [0, 0, 0], sizes = [2, 8, 8], strides = [1, 1, 1]} : vector<2x8x32xf32> to vector<2x8x8xf32>
    %220 = vector.extract_strided_slice %217 {offsets = [0, 0, 0], sizes = [2, 8, 8], strides = [1, 1, 1]} : vector<2x8x32xf32> to vector<2x8x8xf32>
    %221 = vector.extract_strided_slice %218 {offsets = [0, 0, 0], sizes = [2, 8, 8], strides = [1, 1, 1]} : vector<2x8x32xf32> to vector<2x8x8xf32>
    "tpu.trace_start"() <{level = 10 : i32, message = "bqd,bkd->bqk"}> : () -> ()
    %cst_91 = arith.constant dense<0.000000e+00> : vector<2x8x8xf32>
    %222 = tpu.matmul %219, %220, %cst_91 {dimension_numbers = #tpu.dot_dimension_numbers<[2], [2], [1], [1], [0, 0, 0, 1, 1, 1], [0], [0]>} : vector<2x8x8xf32>, vector<2x8x8xf32>, vector<2x8x8xf32> -> vector<2x8x8xf32>
    "tpu.trace_stop"() : () -> ()
    %cst_92 = arith.constant 0.353553385 : f32
    %223 = vector.broadcast %cst_92 : f32 to vector<2x8x8xf32>
    %224 = arith.mulf %222, %223 : vector<2x8x8xf32>
    %225 = vector.broadcast %0 : vector<2x1x8xf32> to vector<2x8x8xf32>
    %226 = arith.addf %224, %225 : vector<2x8x8xf32>
    %cst_93 = arith.constant dense<0xFF800000> : vector<2x8xf32>
    %227 = vector.multi_reduction <maximumf>, %226, %cst_93 [2] : vector<2x8x8xf32> to vector<2x8xf32>
    %228 = vector.shape_cast %227 : vector<2x8xf32> to vector<2x8x1xf32>
    %229 = vector.broadcast %228 : vector<2x8x1xf32> to vector<2x8x8xf32>
    %230 = arith.subf %226, %229 : vector<2x8x8xf32>
    %231 = math.exp %230 : vector<2x8x8xf32>
    %cst_94 = arith.constant dense<0.000000e+00> : vector<2x8xf32>
    %232 = vector.multi_reduction <add>, %231, %cst_94 [2] : vector<2x8x8xf32> to vector<2x8xf32>
    %233 = vector.shape_cast %232 : vector<2x8xf32> to vector<2x8x1xf32>
    %234 = tpu.reciprocal %233 {approx = true} : vector<2x8x1xf32> -> vector<2x8x1xf32>
    %235 = vector.broadcast %234 : vector<2x8x1xf32> to vector<2x8x8xf32>
    %236 = arith.mulf %231, %235 : vector<2x8x8xf32>
    "tpu.trace_start"() <{level = 10 : i32, message = "bqk,bkd->bqd"}> : () -> ()
    %cst_95 = arith.constant dense<0.000000e+00> : vector<2x8x8xf32>
    %237 = tpu.matmul %236, %221, %cst_95 {dimension_numbers = #tpu.dot_dimension_numbers<[2], [1], [1], [2], [0, 0, 0, 1, 1, 2], [0], [0]>} : vector<2x8x8xf32>, vector<2x8x8xf32>, vector<2x8x8xf32> -> vector<2x8x8xf32>
    "tpu.trace_stop"() : () -> ()
    %238 = vector.extract_strided_slice %216 {offsets = [0, 0, 8], sizes = [2, 8, 8], strides = [1, 1, 1]} : vector<2x8x32xf32> to vector<2x8x8xf32>
    %239 = vector.extract_strided_slice %217 {offsets = [0, 0, 8], sizes = [2, 8, 8], strides = [1, 1, 1]} : vector<2x8x32xf32> to vector<2x8x8xf32>
    %240 = vector.extract_strided_slice %218 {offsets = [0, 0, 8], sizes = [2, 8, 8], strides = [1, 1, 1]} : vector<2x8x32xf32> to vector<2x8x8xf32>
    "tpu.trace_start"() <{level = 10 : i32, message = "bqd,bkd->bqk"}> : () -> ()
    %cst_96 = arith.constant dense<0.000000e+00> : vector<2x8x8xf32>
    %241 = tpu.matmul %238, %239, %cst_96 {dimension_numbers = #tpu.dot_dimension_numbers<[2], [2], [1], [1], [0, 0, 0, 1, 1, 1], [0], [0]>} : vector<2x8x8xf32>, vector<2x8x8xf32>, vector<2x8x8xf32> -> vector<2x8x8xf32>
    "tpu.trace_stop"() : () -> ()
    %cst_97 = arith.constant 0.353553385 : f32
    %242 = vector.broadcast %cst_97 : f32 to vector<2x8x8xf32>
    %243 = arith.mulf %241, %242 : vector<2x8x8xf32>
    %244 = vector.broadcast %0 : vector<2x1x8xf32> to vector<2x8x8xf32>
    %245 = arith.addf %243, %244 : vector<2x8x8xf32>
    %cst_98 = arith.constant dense<0xFF800000> : vector<2x8xf32>
    %246 = vector.multi_reduction <maximumf>, %245, %cst_98 [2] : vector<2x8x8xf32> to vector<2x8xf32>
    %247 = vector.shape_cast %246 : vector<2x8xf32> to vector<2x8x1xf32>
    %248 = vector.broadcast %247 : vector<2x8x1xf32> to vector<2x8x8xf32>
    %249 = arith.subf %245, %248 : vector<2x8x8xf32>
    %250 = math.exp %249 : vector<2x8x8xf32>
    %cst_99 = arith.constant dense<0.000000e+00> : vector<2x8xf32>
    %251 = vector.multi_reduction <add>, %250, %cst_99 [2] : vector<2x8x8xf32> to vector<2x8xf32>
    %252 = vector.shape_cast %251 : vector<2x8xf32> to vector<2x8x1xf32>
    %253 = tpu.reciprocal %252 {approx = true} : vector<2x8x1xf32> -> vector<2x8x1xf32>
    %254 = vector.broadcast %253 : vector<2x8x1xf32> to vector<2x8x8xf32>
    %255 = arith.mulf %250, %254 : vector<2x8x8xf32>
    "tpu.trace_start"() <{level = 10 : i32, message = "bqk,bkd->bqd"}> : () -> ()
    %cst_100 = arith.constant dense<0.000000e+00> : vector<2x8x8xf32>
    %256 = tpu.matmul %255, %240, %cst_100 {dimension_numbers = #tpu.dot_dimension_numbers<[2], [1], [1], [2], [0, 0, 0, 1, 1, 2], [0], [0]>} : vector<2x8x8xf32>, vector<2x8x8xf32>, vector<2x8x8xf32> -> vector<2x8x8xf32>
    "tpu.trace_stop"() : () -> ()
    %257 = vector.extract_strided_slice %216 {offsets = [0, 0, 16], sizes = [2, 8, 8], strides = [1, 1, 1]} : vector<2x8x32xf32> to vector<2x8x8xf32>
    %258 = vector.extract_strided_slice %217 {offsets = [0, 0, 16], sizes = [2, 8, 8], strides = [1, 1, 1]} : vector<2x8x32xf32> to vector<2x8x8xf32>
    %259 = vector.extract_strided_slice %218 {offsets = [0, 0, 16], sizes = [2, 8, 8], strides = [1, 1, 1]} : vector<2x8x32xf32> to vector<2x8x8xf32>
    "tpu.trace_start"() <{level = 10 : i32, message = "bqd,bkd->bqk"}> : () -> ()
    %cst_101 = arith.constant dense<0.000000e+00> : vector<2x8x8xf32>
    %260 = tpu.matmul %257, %258, %cst_101 {dimension_numbers = #tpu.dot_dimension_numbers<[2], [2], [1], [1], [0, 0, 0, 1, 1, 1], [0], [0]>} : vector<2x8x8xf32>, vector<2x8x8xf32>, vector<2x8x8xf32> -> vector<2x8x8xf32>
    "tpu.trace_stop"() : () -> ()
    %cst_102 = arith.constant 0.353553385 : f32
    %261 = vector.broadcast %cst_102 : f32 to vector<2x8x8xf32>
    %262 = arith.mulf %260, %261 : vector<2x8x8xf32>
    %263 = vector.broadcast %0 : vector<2x1x8xf32> to vector<2x8x8xf32>
    %264 = arith.addf %262, %263 : vector<2x8x8xf32>
    %cst_103 = arith.constant dense<0xFF800000> : vector<2x8xf32>
    %265 = vector.multi_reduction <maximumf>, %264, %cst_103 [2] : vector<2x8x8xf32> to vector<2x8xf32>
    %266 = vector.shape_cast %265 : vector<2x8xf32> to vector<2x8x1xf32>
    %267 = vector.broadcast %266 : vector<2x8x1xf32> to vector<2x8x8xf32>
    %268 = arith.subf %264, %267 : vector<2x8x8xf32>
    %269 = math.exp %268 : vector<2x8x8xf32>
    %cst_104 = arith.constant dense<0.000000e+00> : vector<2x8xf32>
    %270 = vector.multi_reduction <add>, %269, %cst_104 [2] : vector<2x8x8xf32> to vector<2x8xf32>
    %271 = vector.shape_cast %270 : vector<2x8xf32> to vector<2x8x1xf32>
    %272 = tpu.reciprocal %271 {approx = true} : vector<2x8x1xf32> -> vector<2x8x1xf32>
    %273 = vector.broadcast %272 : vector<2x8x1xf32> to vector<2x8x8xf32>
    %274 = arith.mulf %269, %273 : vector<2x8x8xf32>
    "tpu.trace_start"() <{level = 10 : i32, message = "bqk,bkd->bqd"}> : () -> ()
    %cst_105 = arith.constant dense<0.000000e+00> : vector<2x8x8xf32>
    %275 = tpu.matmul %274, %259, %cst_105 {dimension_numbers = #tpu.dot_dimension_numbers<[2], [1], [1], [2], [0, 0, 0, 1, 1, 2], [0], [0]>} : vector<2x8x8xf32>, vector<2x8x8xf32>, vector<2x8x8xf32> -> vector<2x8x8xf32>
    "tpu.trace_stop"() : () -> ()
    %276 = vector.extract_strided_slice %216 {offsets = [0, 0, 24], sizes = [2, 8, 8], strides = [1, 1, 1]} : vector<2x8x32xf32> to vector<2x8x8xf32>
    %277 = vector.extract_strided_slice %217 {offsets = [0, 0, 24], sizes = [2, 8, 8], strides = [1, 1, 1]} : vector<2x8x32xf32> to vector<2x8x8xf32>
    %278 = vector.extract_strided_slice %218 {offsets = [0, 0, 24], sizes = [2, 8, 8], strides = [1, 1, 1]} : vector<2x8x32xf32> to vector<2x8x8xf32>
    "tpu.trace_start"() <{level = 10 : i32, message = "bqd,bkd->bqk"}> : () -> ()
    %cst_106 = arith.constant dense<0.000000e+00> : vector<2x8x8xf32>
    %279 = tpu.matmul %276, %277, %cst_106 {dimension_numbers = #tpu.dot_dimension_numbers<[2], [2], [1], [1], [0, 0, 0, 1, 1, 1], [0], [0]>} : vector<2x8x8xf32>, vector<2x8x8xf32>, vector<2x8x8xf32> -> vector<2x8x8xf32>
    "tpu.trace_stop"() : () -> ()
    %cst_107 = arith.constant 0.353553385 : f32
    %280 = vector.broadcast %cst_107 : f32 to vector<2x8x8xf32>
    %281 = arith.mulf %279, %280 : vector<2x8x8xf32>
    %282 = vector.broadcast %0 : vector<2x1x8xf32> to vector<2x8x8xf32>
    %283 = arith.addf %281, %282 : vector<2x8x8xf32>
    %cst_108 = arith.constant dense<0xFF800000> : vector<2x8xf32>
    %284 = vector.multi_reduction <maximumf>, %283, %cst_108 [2] : vector<2x8x8xf32> to vector<2x8xf32>
    %285 = vector.shape_cast %284 : vector<2x8xf32> to vector<2x8x1xf32>
    %286 = vector.broadcast %285 : vector<2x8x1xf32> to vector<2x8x8xf32>
    %287 = arith.subf %283, %286 : vector<2x8x8xf32>
    %288 = math.exp %287 : vector<2x8x8xf32>
    %cst_109 = arith.constant dense<0.000000e+00> : vector<2x8xf32>
    %289 = vector.multi_reduction <add>, %288, %cst_109 [2] : vector<2x8x8xf32> to vector<2x8xf32>
    %290 = vector.shape_cast %289 : vector<2x8xf32> to vector<2x8x1xf32>
    %291 = tpu.reciprocal %290 {approx = true} : vector<2x8x1xf32> -> vector<2x8x1xf32>
    %292 = vector.broadcast %291 : vector<2x8x1xf32> to vector<2x8x8xf32>
    %293 = arith.mulf %288, %292 : vector<2x8x8xf32>
    "tpu.trace_start"() <{level = 10 : i32, message = "bqk,bkd->bqd"}> : () -> ()
    %cst_110 = arith.constant dense<0.000000e+00> : vector<2x8x8xf32>
    %294 = tpu.matmul %293, %278, %cst_110 {dimension_numbers = #tpu.dot_dimension_numbers<[2], [1], [1], [2], [0, 0, 0, 1, 1, 2], [0], [0]>} : vector<2x8x8xf32>, vector<2x8x8xf32>, vector<2x8x8xf32> -> vector<2x8x8xf32>
    "tpu.trace_stop"() : () -> ()
    %295 = tpu.concatenate %237, %256, %275, %294 in 2 : vector<2x8x8xf32>, vector<2x8x8xf32>, vector<2x8x8xf32>, vector<2x8x8xf32> -> vector<2x8x32xf32>
    %296 = vector.shape_cast %295 : vector<2x8x32xf32> to vector<16x32xf32>
    %c1_111 = arith.constant 1 : index
    %c0_112 = arith.constant 0 : index
    %c0_113 = arith.constant 0 : index
    %297 = vector.load %arg7[%c1_111, %c0_112, %c0_113] : memref<2x32x32xf32, #tpu.memory_space<vmem>>, vector<1x32x32xf32>
    %298 = vector.shape_cast %297 : vector<1x32x32xf32> to vector<32x32xf32>
    %cst_114 = arith.constant dense<0.000000e+00> : vector<16x32xf32>
    %299 = tpu.matmul %296, %298, %cst_114 {dimension_numbers = #tpu.dot_dimension_numbers<[1], [0], [0], [1], [0, 0, 1, 1], [], []>} : vector<16x32xf32>, vector<32x32xf32>, vector<16x32xf32> -> vector<16x32xf32>
    %c1_115 = arith.constant 1 : index
    %c0_116 = arith.constant 0 : index
    %c0_117 = arith.constant 0 : index
    %300 = vector.load %arg8[%c1_115, %c0_116, %c0_117] : memref<2x1x32xf32, #tpu.memory_space<vmem>>, vector<1x1x32xf32>
    %301 = vector.shape_cast %300 : vector<1x1x32xf32> to vector<1x32xf32>
    %302 = vector.broadcast %301 : vector<1x32xf32> to vector<16x32xf32>
    %303 = arith.addf %299, %302 : vector<16x32xf32>
    %304 = arith.addf %303, %205 : vector<16x32xf32>
    %c1_118 = arith.constant 1 : index
    %c0_119 = arith.constant 0 : index
    %c0_120 = arith.constant 0 : index
    %305 = vector.load %arg9[%c1_118, %c0_119, %c0_120] : memref<2x1x32xf32, #tpu.memory_space<vmem>>, vector<1x1x32xf32>
    %306 = vector.shape_cast %305 : vector<1x1x32xf32> to vector<1x32xf32>
    %c1_121 = arith.constant 1 : index
    %c0_122 = arith.constant 0 : index
    %c0_123 = arith.constant 0 : index
    %307 = vector.load %arg10[%c1_121, %c0_122, %c0_123] : memref<2x1x32xf32, #tpu.memory_space<vmem>>, vector<1x1x32xf32>
    %308 = vector.shape_cast %307 : vector<1x1x32xf32> to vector<1x32xf32>
    %cst_124 = arith.constant dense<0.000000e+00> : vector<16xf32>
    %309 = vector.multi_reduction <add>, %304, %cst_124 [1] : vector<16x32xf32> to vector<16xf32>
    %310 = vector.shape_cast %309 : vector<16xf32> to vector<16x1xf32>
    %cst_125 = arith.constant 3.200000e+01 : f32
    %311 = vector.broadcast %cst_125 : f32 to vector<16x1xf32>
    %312 = arith.divf %310, %311 : vector<16x1xf32>
    %313 = vector.broadcast %312 : vector<16x1xf32> to vector<16x32xf32>
    %314 = arith.subf %304, %313 : vector<16x32xf32>
    %315 = vector.broadcast %312 : vector<16x1xf32> to vector<16x32xf32>
    %316 = arith.subf %304, %315 : vector<16x32xf32>
    %317 = arith.mulf %314, %316 : vector<16x32xf32>
    %cst_126 = arith.constant dense<0.000000e+00> : vector<16xf32>
    %318 = vector.multi_reduction <add>, %317, %cst_126 [1] : vector<16x32xf32> to vector<16xf32>
    %319 = vector.shape_cast %318 : vector<16xf32> to vector<16x1xf32>
    %cst_127 = arith.constant 3.200000e+01 : f32
    %320 = vector.broadcast %cst_127 : f32 to vector<16x1xf32>
    %321 = arith.divf %319, %320 : vector<16x1xf32>
    %322 = vector.broadcast %312 : vector<16x1xf32> to vector<16x32xf32>
    %323 = arith.subf %304, %322 : vector<16x32xf32>
    %cst_128 = arith.constant 9.99999996E-13 : f32
    %324 = vector.broadcast %cst_128 : f32 to vector<16x1xf32>
    %325 = arith.addf %321, %324 : vector<16x1xf32>
    %326 = math.rsqrt %325 : vector<16x1xf32>
    %327 = vector.broadcast %326 : vector<16x1xf32> to vector<16x32xf32>
    %328 = arith.mulf %323, %327 : vector<16x32xf32>
    %329 = vector.broadcast %306 : vector<1x32xf32> to vector<16x32xf32>
    %330 = arith.mulf %328, %329 : vector<16x32xf32>
    %331 = vector.broadcast %308 : vector<1x32xf32> to vector<16x32xf32>
    %332 = arith.addf %330, %331 : vector<16x32xf32>
    %c1_129 = arith.constant 1 : index
    %c0_130 = arith.constant 0 : index
    %c0_131 = arith.constant 0 : index
    %333 = vector.load %arg11[%c1_129, %c0_130, %c0_131] : memref<2x32x64xf32, #tpu.memory_space<vmem>>, vector<1x32x64xf32>
    %334 = vector.shape_cast %333 : vector<1x32x64xf32> to vector<32x64xf32>
    %cst_132 = arith.constant dense<0.000000e+00> : vector<16x64xf32>
    %335 = tpu.matmul %332, %334, %cst_132 {dimension_numbers = #tpu.dot_dimension_numbers<[1], [0], [0], [1], [0, 0, 1, 1], [], []>} : vector<16x32xf32>, vector<32x64xf32>, vector<16x64xf32> -> vector<16x64xf32>
    %c1_133 = arith.constant 1 : index
    %c0_134 = arith.constant 0 : index
    %c0_135 = arith.constant 0 : index
    %336 = vector.load %arg12[%c1_133, %c0_134, %c0_135] : memref<2x1x64xf32, #tpu.memory_space<vmem>>, vector<1x1x64xf32>
    %337 = vector.shape_cast %336 : vector<1x1x64xf32> to vector<1x64xf32>
    %338 = vector.broadcast %337 : vector<1x64xf32> to vector<16x64xf32>
    %339 = arith.addf %335, %338 : vector<16x64xf32>
    %cst_136 = arith.constant 5.000000e-01 : f32
    %340 = vector.broadcast %cst_136 : f32 to vector<16x64xf32>
    %341 = arith.mulf %340, %339 : vector<16x64xf32>
    %cst_137 = arith.constant 0.707106769 : f32
    %342 = vector.broadcast %cst_137 : f32 to vector<16x64xf32>
    %343 = arith.mulf %339, %342 : vector<16x64xf32>
    %344 = math.erf %343 : vector<16x64xf32>
    %cst_138 = arith.constant 1.000000e+00 : f32
    %345 = vector.broadcast %cst_138 : f32 to vector<16x64xf32>
    %346 = arith.addf %345, %344 : vector<16x64xf32>
    %347 = arith.mulf %341, %346 : vector<16x64xf32>
    %c1_139 = arith.constant 1 : index
    %c0_140 = arith.constant 0 : index
    %c0_141 = arith.constant 0 : index
    %348 = vector.load %arg13[%c1_139, %c0_140, %c0_141] : memref<2x64x32xf32, #tpu.memory_space<vmem>>, vector<1x64x32xf32>
    %349 = vector.shape_cast %348 : vector<1x64x32xf32> to vector<64x32xf32>
    %cst_142 = arith.constant dense<0.000000e+00> : vector<16x32xf32>
    %350 = tpu.matmul %347, %349, %cst_142 {dimension_numbers = #tpu.dot_dimension_numbers<[1], [0], [0], [1], [0, 0, 1, 1], [], []>} : vector<16x64xf32>, vector<64x32xf32>, vector<16x32xf32> -> vector<16x32xf32>
    %c1_143 = arith.constant 1 : index
    %c0_144 = arith.constant 0 : index
    %c0_145 = arith.constant 0 : index
    %351 = vector.load %arg14[%c1_143, %c0_144, %c0_145] : memref<2x1x32xf32, #tpu.memory_space<vmem>>, vector<1x1x32xf32>
    %352 = vector.shape_cast %351 : vector<1x1x32xf32> to vector<1x32xf32>
    %353 = vector.broadcast %352 : vector<1x32xf32> to vector<16x32xf32>
    %354 = arith.addf %350, %353 : vector<16x32xf32>
    %355 = arith.addf %354, %332 : vector<16x32xf32>
    %c1_146 = arith.constant 1 : index
    %c0_147 = arith.constant 0 : index
    %c0_148 = arith.constant 0 : index
    %356 = vector.load %arg15[%c1_146, %c0_147, %c0_148] : memref<2x1x32xf32, #tpu.memory_space<vmem>>, vector<1x1x32xf32>
    %357 = vector.shape_cast %356 : vector<1x1x32xf32> to vector<1x32xf32>
    %c1_149 = arith.constant 1 : index
    %c0_150 = arith.constant 0 : index
    %c0_151 = arith.constant 0 : index
    %358 = vector.load %arg16[%c1_149, %c0_150, %c0_151] : memref<2x1x32xf32, #tpu.memory_space<vmem>>, vector<1x1x32xf32>
    %359 = vector.shape_cast %358 : vector<1x1x32xf32> to vector<1x32xf32>
    %cst_152 = arith.constant dense<0.000000e+00> : vector<16xf32>
    %360 = vector.multi_reduction <add>, %355, %cst_152 [1] : vector<16x32xf32> to vector<16xf32>
    %361 = vector.shape_cast %360 : vector<16xf32> to vector<16x1xf32>
    %cst_153 = arith.constant 3.200000e+01 : f32
    %362 = vector.broadcast %cst_153 : f32 to vector<16x1xf32>
    %363 = arith.divf %361, %362 : vector<16x1xf32>
    %364 = vector.broadcast %363 : vector<16x1xf32> to vector<16x32xf32>
    %365 = arith.subf %355, %364 : vector<16x32xf32>
    %366 = vector.broadcast %363 : vector<16x1xf32> to vector<16x32xf32>
    %367 = arith.subf %355, %366 : vector<16x32xf32>
    %368 = arith.mulf %365, %367 : vector<16x32xf32>
    %cst_154 = arith.constant dense<0.000000e+00> : vector<16xf32>
    %369 = vector.multi_reduction <add>, %368, %cst_154 [1] : vector<16x32xf32> to vector<16xf32>
    %370 = vector.shape_cast %369 : vector<16xf32> to vector<16x1xf32>
    %cst_155 = arith.constant 3.200000e+01 : f32
    %371 = vector.broadcast %cst_155 : f32 to vector<16x1xf32>
    %372 = arith.divf %370, %371 : vector<16x1xf32>
    %373 = vector.broadcast %363 : vector<16x1xf32> to vector<16x32xf32>
    %374 = arith.subf %355, %373 : vector<16x32xf32>
    %cst_156 = arith.constant 9.99999996E-13 : f32
    %375 = vector.broadcast %cst_156 : f32 to vector<16x1xf32>
    %376 = arith.addf %372, %375 : vector<16x1xf32>
    %377 = math.rsqrt %376 : vector<16x1xf32>
    %378 = vector.broadcast %377 : vector<16x1xf32> to vector<16x32xf32>
    %379 = arith.mulf %374, %378 : vector<16x32xf32>
    %380 = vector.broadcast %357 : vector<1x32xf32> to vector<16x32xf32>
    %381 = arith.mulf %379, %380 : vector<16x32xf32>
    %382 = vector.broadcast %359 : vector<1x32xf32> to vector<16x32xf32>
    %383 = arith.addf %381, %382 : vector<16x32xf32>
    %384 = vector.extract_strided_slice %383 {offsets = [0, 0], sizes = [1, 32], strides = [1, 1]} : vector<16x32xf32> to vector<1x32xf32>
    %385 = vector.extract_strided_slice %383 {offsets = [8, 0], sizes = [1, 32], strides = [1, 1]} : vector<16x32xf32> to vector<1x32xf32>
    %386 = tpu.concatenate %384, %385 in 0 : vector<1x32xf32>, vector<1x32xf32> -> vector<2x32xf32>
    %c0_157 = arith.constant 0 : index
    %c0_158 = arith.constant 0 : index
    %387 = vector.load %arg17[%c0_157, %c0_158] : memref<32x32xf32, #tpu.memory_space<vmem>>, vector<32x32xf32>
    %cst_159 = arith.constant dense<0.000000e+00> : vector<2x32xf32>
    %388 = tpu.matmul %386, %387, %cst_159 {dimension_numbers = #tpu.dot_dimension_numbers<[1], [0], [0], [1], [0, 0, 1, 1], [], []>} : vector<2x32xf32>, vector<32x32xf32>, vector<2x32xf32> -> vector<2x32xf32>
    %c0_160 = arith.constant 0 : index
    %c0_161 = arith.constant 0 : index
    %389 = vector.load %arg18[%c0_160, %c0_161] : memref<1x32xf32, #tpu.memory_space<vmem>>, vector<1x32xf32>
    %390 = vector.broadcast %389 : vector<1x32xf32> to vector<2x32xf32>
    %391 = arith.addf %388, %390 : vector<2x32xf32>
    %392 = math.tanh %391 : vector<2x32xf32>
    %c0_162 = arith.constant 0 : index
    %c0_163 = arith.constant 0 : index
    %393 = vector.load %arg19[%c0_162, %c0_163] : memref<32x3xf32, #tpu.memory_space<vmem>>, vector<32x3xf32>
    %cst_164 = arith.constant dense<0.000000e+00> : vector<2x3xf32>
    %394 = tpu.matmul %392, %393, %cst_164 {dimension_numbers = #tpu.dot_dimension_numbers<[1], [0], [0], [1], [0, 0, 1, 1], [], []>} : vector<2x32xf32>, vector<32x3xf32>, vector<2x3xf32> -> vector<2x3xf32>
    %c0_165 = arith.constant 0 : index
    %c0_166 = arith.constant 0 : index
    %395 = vector.load %arg20[%c0_165, %c0_166] : memref<1x3xf32, #tpu.memory_space<vmem>>, vector<1x3xf32>
    %396 = vector.broadcast %395 : vector<1x3xf32> to vector<2x3xf32>
    %397 = arith.addf %394, %396 : vector<2x3xf32>
    %c0_167 = arith.constant 0 : index
    %c0_168 = arith.constant 0 : index
    %398 = vector.load %arg21[%c0_167, %c0_168] : memref<2x3xf32, #tpu.memory_space<vmem>>, vector<2x3xf32>
    tpu.vector_store %arg21[%c0_167, %c0_168], %397 {strides = array<i32>} : memref<2x3xf32, #tpu.memory_space<vmem>>, vector<2x3xf32>,
    %cst_169 = arith.constant dense<0xFF800000> : vector<2xf32>
    %399 = vector.multi_reduction <maximumf>, %397, %cst_169 [1] : vector<2x3xf32> to vector<2xf32>
    %400 = vector.shape_cast %399 : vector<2xf32> to vector<2x1xf32>
    %401 = vector.broadcast %400 : vector<2x1xf32> to vector<2x3xf32>
    %402 = arith.subf %397, %401 : vector<2x3xf32>
    %403 = math.exp %402 : vector<2x3xf32>
    %cst_170 = arith.constant dense<0.000000e+00> : vector<2xf32>
    %404 = vector.multi_reduction <add>, %403, %cst_170 [1] : vector<2x3xf32> to vector<2xf32>
    %405 = vector.shape_cast %404 : vector<2xf32> to vector<2x1xf32>
    %406 = math.log %405 : vector<2x1xf32>
    %407 = vector.broadcast %406 : vector<2x1xf32> to vector<2x3xf32>
    %408 = arith.subf %402, %407 : vector<2x3xf32>
    %c0_171 = arith.constant 0 : index
    %c0_172 = arith.constant 0 : index
    %409 = vector.load %arg2[%c0_171, %c0_172] : memref<2x3xf32, #tpu.memory_space<vmem>>, vector<2x3xf32>
    %410 = arith.mulf %408, %409 : vector<2x3xf32>
    %cst_173 = arith.constant dense<0.000000e+00> : vector<2xf32>
    %411 = vector.multi_reduction <add>, %410, %cst_173 [1] : vector<2x3xf32> to vector<2xf32>
    %412 = vector.shape_cast %411 : vector<2xf32> to vector<2x1xf32>
    %cst_174 = arith.constant 0.000000e+00 : f32
    %413 = vector.broadcast %cst_174 : f32 to vector<2x1xf32>
    %414 = arith.subf %413, %412 : vector<2x1xf32>
    %415 = vector.shape_cast %414 : vector<2x1xf32> to vector<1x2x1xf32>
    %cst_175 = arith.constant dense<0.000000e+00> : vector<1xf32>
    %416 = vector.multi_reduction <add>, %415, %cst_175 [1, 2] : vector<1x2x1xf32> to vector<1xf32>
    %417 = vector.shape_cast %416 : vector<1xf32> to vector<1x1x1xf32>
    %418 = vector.extract %417[0, 0, 0] : f32 from vector<1x1x1xf32>
    %419 = vector.broadcast %418 : f32 to vector<1x1xf32>
    %cst_176 = arith.constant 2.000000e+00 : f32
    %420 = vector.broadcast %cst_176 : f32 to vector<1x1xf32>
    %421 = arith.divf %419, %420 : vector<1x1xf32>
    %c0_177 = arith.constant 0 : index
    %c0_178 = arith.constant 0 : index
    %422 = vector.load %arg22[%c0_177, %c0_178] : memref<1x1xf32, #tpu.memory_space<vmem>>, vector<1x1xf32>
    tpu.vector_store %arg22[%c0_177, %c0_178], %421 {strides = array<i32>} : memref<1x1xf32, #tpu.memory_space<vmem>>, vector<1x1xf32>,
    return
  }
}

</mosaic_0001>

<llo_original>
// kernel: sentiment_classifier_forward.1
$region0: #{sentiment_classifier_forward.1}
  #allocation0 [shape = 'u32[]', space=smem, size = 0x4, offset = 0x4, fixed_abs, tag = 'smem constant byte address 0x4 - core index']
  #allocation1 [shape = 'u32[144,128]{1,0:T(1,128)}', space=vmem, size = 0x12000, scoped, tag = 'internal scratch']
  %s0 = inlined_call_operand.vmem [shape: f32[16,32], index: 0, kind: input, shape index: {}]
  %s1 = inlined_call_operand.vmem [shape: f32[2,1,8], index: 1, kind: input, shape index: {}]
  %s2 = inlined_call_operand.vmem [shape: f32[2,3], index: 2, kind: input, shape index: {}]
  %s3 = inlined_call_operand.vmem [shape: f32[1,32], index: 3, kind: input, shape index: {}]
  %s4 = inlined_call_operand.vmem [shape: f32[1,32], index: 4, kind: input, shape index: {}]
  %s5 = inlined_call_operand.vmem [shape: f32[2,32,96], index: 5, kind: input, shape index: {}]
  %s6 = inlined_call_operand.vmem [shape: f32[2,1,96], index: 6, kind: input, shape index: {}]
  %s7 = inlined_call_operand.vmem [shape: f32[2,32,32], index: 7, kind: input, shape index: {}]
  %s8 = inlined_call_operand.vmem [shape: f32[2,1,32], index: 8, kind: input, shape index: {}]
  %s9 = inlined_call_operand.vmem [shape: f32[2,1,32], index: 9, kind: input, shape index: {}]
  %s10 = inlined_call_operand.vmem [shape: f32[2,1,32], index: 10, kind: input, shape index: {}]
  %s11 = inlined_call_operand.vmem [shape: f32[2,32,64], index: 11, kind: input, shape index: {}]
  %s12 = inlined_call_operand.vmem [shape: f32[2,1,64], index: 12, kind: input, shape index: {}]
  %s13 = inlined_call_operand.vmem [shape: f32[2,64,32], index: 13, kind: input, shape index: {}]
  %s14 = inlined_call_operand.vmem [shape: f32[2,1,32], index: 14, kind: input, shape index: {}]
  %s15 = inlined_call_operand.vmem [shape: f32[2,1,32], index: 15, kind: input, shape index: {}]
  %s16 = inlined_call_operand.vmem [shape: f32[2,1,32], index: 16, kind: input, shape index: {}]
  %s17 = inlined_call_operand.vmem [shape: f32[32,32], index: 17, kind: input, shape index: {}]
  %s18 = inlined_call_operand.vmem [shape: f32[1,32], index: 18, kind: input, shape index: {}]
  %s19 = inlined_call_operand.vmem [shape: f32[32,3], index: 19, kind: input, shape index: {}]
  %s20 = inlined_call_operand.vmem [shape: f32[1,3], index: 20, kind: input, shape index: {}]
  %s21 = inlined_call_operand.hbm [shape: f32[2,3], index: 21, kind: output, shape index: {0}]
  %s22 = inlined_call_operand.hbm [shape: f32[1,1], index: 22, kind: output, shape index: {1}]
  %23 = xla_tuple %s21, %s22
  %s24 = sld [smem:[#allocation0]]
  $region102: #{sentiment_classifier_forward.1} parent=0
    _
  %s26 = ssub.s32 1, %s24
  %s27 = scalar_select 0, %s26, %s24
  $region1: #{sentiment_classifier_forward.1} parent=0
    #allocation2 [shape = 'u8[1024]{0}', space=vmem, size = 0x400, scoped, tag = 'output window, operand 0, single buffered']
    #allocation3 [shape = 's32[1]{0}', space=sflag, size = 0x4, scoped, tag = 'scoped memory for sentiment_classifier_forward.1']
    #allocation4 [shape = 'u8[512]{0}', space=vmem, size = 0x400, scoped, tag = 'output window, operand 1, single buffered']
    #allocation5 [shape = 's32[1]{0}', space=sflag, size = 0x4, scoped, tag = 'scoped memory for sentiment_classifier_forward.1']
    %28 = vsyncpa [#allocation3], 0
    %29 = vsyncpa [#allocation5], 0
    // Predicated region
    $region2: #{sentiment_classifier_forward.1} parent=1 // pred_check
      _
    $region3: #{sentiment_classifier_forward.1} parent=1 // pred_check_branch
      %31 = sbr.rel (0) target = $region5
    $region4: #{sentiment_classifier_forward.1} parent=1 // pred_region
      _
    $region5: #{sentiment_classifier_forward.1} parent=1 // pred_fallthru
      _
    // Predicated region
    $region6: #{sentiment_classifier_forward.1} parent=1 // pred_check
      _
    $region7: #{sentiment_classifier_forward.1} parent=1 // pred_check_branch
      %33 = sbr.rel (0) target = $region9
    $region8: #{sentiment_classifier_forward.1} parent=1 // pred_region
      _
    $region9: #{sentiment_classifier_forward.1} parent=1 // pred_fallthru
      _
    // Predicated region
    $region10: #{sentiment_classifier_forward.1} parent=1 // pred_check
      _
    $region11: #{sentiment_classifier_forward.1} parent=1 // pred_check_branch
      %35 = sbr.rel (0) target = $region13
    $region12: #{sentiment_classifier_forward.1} parent=1 // pred_region
      _
    $region13: #{sentiment_classifier_forward.1} parent=1 // pred_fallthru
      _
    // Predicated region
    $region14: #{sentiment_classifier_forward.1} parent=1 // pred_check
      _
    $region15: #{sentiment_classifier_forward.1} parent=1 // pred_check_branch
      %37 = sbr.rel (0) target = $region17
    $region16: #{sentiment_classifier_forward.1} parent=1 // pred_region
      _
    $region17: #{sentiment_classifier_forward.1} parent=1 // pred_fallthru
      _
    // Predicated region
    $region18: #{sentiment_classifier_forward.1} parent=1 // pred_check
      _
    $region19: #{sentiment_classifier_forward.1} parent=1 // pred_check_branch
      %39 = sbr.rel (0) target = $region21
    $region20: #{sentiment_classifier_forward.1} parent=1 // pred_region
      _
    $region21: #{sentiment_classifier_forward.1} parent=1 // pred_fallthru
      _
    // Predicated region
    $region22: #{sentiment_classifier_forward.1} parent=1 // pred_check
      _
    $region23: #{sentiment_classifier_forward.1} parent=1 // pred_check_branch
      %41 = sbr.rel (0) target = $region25
    $region24: #{sentiment_classifier_forward.1} parent=1 // pred_region
      _
    $region25: #{sentiment_classifier_forward.1} parent=1 // pred_fallthru
      _
    // Predicated region
    $region26: #{sentiment_classifier_forward.1} parent=1 // pred_check
      _
    $region27: #{sentiment_classifier_forward.1} parent=1 // pred_check_branch
      %43 = sbr.rel (0) target = $region29
    $region28: #{sentiment_classifier_forward.1} parent=1 // pred_region
      _
    $region29: #{sentiment_classifier_forward.1} parent=1 // pred_fallthru
      _
    // Predicated region
    $region30: #{sentiment_classifier_forward.1} parent=1 // pred_check
      _
    $region31: #{sentiment_classifier_forward.1} parent=1 // pred_check_branch
      %45 = sbr.rel (0) target = $region33
    $region32: #{sentiment_classifier_forward.1} parent=1 // pred_region
      _
    $region33: #{sentiment_classifier_forward.1} parent=1 // pred_fallthru
      _
    // Predicated region
    $region34: #{sentiment_classifier_forward.1} parent=1 // pred_check
      _
    $region35: #{sentiment_classifier_forward.1} parent=1 // pred_check_branch
      %47 = sbr.rel (0) target = $region37
    $region36: #{sentiment_classifier_forward.1} parent=1 // pred_region
      _
    $region37: #{sentiment_classifier_forward.1} parent=1 // pred_fallthru
      _
    // Predicated region
    $region38: #{sentiment_classifier_forward.1} parent=1 // pred_check
      _
    $region39: #{sentiment_classifier_forward.1} parent=1 // pred_check_branch
      %49 = sbr.rel (0) target = $region41
    $region40: #{sentiment_classifier_forward.1} parent=1 // pred_region
      _
    $region41: #{sentiment_classifier_forward.1} parent=1 // pred_fallthru
      _
    // Predicated region
    $region42: #{sentiment_classifier_forward.1} parent=1 // pred_check
      _
    $region43: #{sentiment_classifier_forward.1} parent=1 // pred_check_branch
      %51 = sbr.rel (0) target = $region45
    $region44: #{sentiment_classifier_forward.1} parent=1 // pred_region
      _
    $region45: #{sentiment_classifier_forward.1} parent=1 // pred_fallthru
      _
    // Predicated region
    $region46: #{sentiment_classifier_forward.1} parent=1 // pred_check
      _
    $region47: #{sentiment_classifier_forward.1} parent=1 // pred_check_branch
      %53 = sbr.rel (0) target = $region49
    $region48: #{sentiment_classifier_forward.1} parent=1 // pred_region
      _
    $region49: #{sentiment_classifier_forward.1} parent=1 // pred_fallthru
      _
    // Predicated region
    $region50: #{sentiment_classifier_forward.1} parent=1 // pred_check
      _
    $region51: #{sentiment_classifier_forward.1} parent=1 // pred_check_branch
      %55 = sbr.rel (0) target = $region53
    $region52: #{sentiment_classifier_forward.1} parent=1 // pred_region
      _
    $region53: #{sentiment_classifier_forward.1} parent=1 // pred_fallthru
      _
    // Predicated region
    $region54: #{sentiment_classifier_forward.1} parent=1 // pred_check
      _
    $region55: #{sentiment_classifier_forward.1} parent=1 // pred_check_branch
      %57 = sbr.rel (0) target = $region57
    $region56: #{sentiment_classifier_forward.1} parent=1 // pred_region
      _
    $region57: #{sentiment_classifier_forward.1} parent=1 // pred_fallthru
      _
    // Predicated region
    $region58: #{sentiment_classifier_forward.1} parent=1 // pred_check
      _
    $region59: #{sentiment_classifier_forward.1} parent=1 // pred_check_branch
      %59 = sbr.rel (0) target = $region61
    $region60: #{sentiment_classifier_forward.1} parent=1 // pred_region
      _
    $region61: #{sentiment_classifier_forward.1} parent=1 // pred_fallthru
      _
    // Predicated region
    $region62: #{sentiment_classifier_forward.1} parent=1 // pred_check
      _
    $region63: #{sentiment_classifier_forward.1} parent=1 // pred_check_branch
      %61 = sbr.rel (0) target = $region65
    $region64: #{sentiment_classifier_forward.1} parent=1 // pred_region
      _
    $region65: #{sentiment_classifier_forward.1} parent=1 // pred_fallthru
      _
    // Predicated region
    $region66: #{sentiment_classifier_forward.1} parent=1 // pred_check
      _
    $region67: #{sentiment_classifier_forward.1} parent=1 // pred_check_branch
      %63 = sbr.rel (0) target = $region69
    $region68: #{sentiment_classifier_forward.1} parent=1 // pred_region
      _
    $region69: #{sentiment_classifier_forward.1} parent=1 // pred_fallthru
      _
    // Predicated region
    $region70: #{sentiment_classifier_forward.1} parent=1 // pred_check
      _
    $region71: #{sentiment_classifier_forward.1} parent=1 // pred_check_branch
      %65 = sbr.rel (0) target = $region73
    $region72: #{sentiment_classifier_forward.1} parent=1 // pred_region
      _
    $region73: #{sentiment_classifier_forward.1} parent=1 // pred_fallthru
      _
    // Predicated region
    $region74: #{sentiment_classifier_forward.1} parent=1 // pred_check
      _
    $region75: #{sentiment_classifier_forward.1} parent=1 // pred_check_branch
      %67 = sbr.rel (0) target = $region77
    $region76: #{sentiment_classifier_forward.1} parent=1 // pred_region
      _
    $region77: #{sentiment_classifier_forward.1} parent=1 // pred_fallthru
      _
    // Predicated region
    $region78: #{sentiment_classifier_forward.1} parent=1 // pred_check
      _
    $region79: #{sentiment_classifier_forward.1} parent=1 // pred_check_branch
      %69 = sbr.rel (0) target = $region81
    $region80: #{sentiment_classifier_forward.1} parent=1 // pred_region
      _
    $region81: #{sentiment_classifier_forward.1} parent=1 // pred_fallthru
      _
    // Predicated region
    $region82: #{sentiment_classifier_forward.1} parent=1 // pred_check
      _
    $region83: #{sentiment_classifier_forward.1} parent=1 // pred_check_branch
      %71 = sbr.rel (0) target = $region85
    $region84: #{sentiment_classifier_forward.1} parent=1 // pred_region
      _
    $region85: #{sentiment_classifier_forward.1} parent=1 // pred_fallthru
      _
    %v72 = vld [vmem:[%s1] sm:$0x1]
    %v73 = vld [vmem:[%s1 + $0x1] sm:$0x1]
    %v74 = vld [vmem:[%s0] sm:$0xff]
    %v75 = vld [vmem:[%s0 + $0x8] sm:$0xff]
    %v76 = vld [vmem:[%s3] sm:$0x1]
    %v77 = vld [vmem:[%s4] sm:$0x1]
    %vm78 = vcmask 261120
    %v79 = vsel %vm78, %v74, 0.0
    %80 = vadd.xlane.f32.xlu0 %v79
    %v81 = vpop.xlane.xlu0 %80
    %v82 = vsel %vm78, %v75, 0.0
    %83 = vadd.xlane.f32.xlu0 %v82
    %v84 = vpop.xlane.xlu0 %83
    %v85 = vrcp.pop 32.0
    %v86 = vmul.f32 %v81, %v85
    %v87 = vmul.f32 %v84, %v85
    %v88 = vsub.f32 %v74, %v86
    %v89 = vsub.f32 %v75, %v87
    %v90 = vmul.f32 %v88, %v88
    %v91 = vmul.f32 %v89, %v89
    %v92 = vsel %vm78, %v90, 0.0
    %93 = vadd.xlane.f32.xlu0 %v92
    %v94 = vpop.xlane.xlu0 %93
    %v95 = vsel %vm78, %v91, 0.0
    %96 = vadd.xlane.f32.xlu0 %v95
    %v97 = vpop.xlane.xlu0 %96
    %v98 = vmul.f32 %v94, %v85
    %v99 = vmul.f32 %v97, %v85
    %v100 = vadd.f32 %v98, 1e-12
    %v101 = vadd.f32 %v99, 1e-12
    %v102 = vrsqrt.pop %v100
    %v103 = vrsqrt.pop %v101
    %v104 = vmul.f32 %v88, %v102
    %v105 = vmul.f32 %v89, %v103
    %v107 = vlaneseq
    %v108 = vshrl.u32 %v107, 7
    %v109 = vsub.s32 0, %v108
    %v110 = vrot.slane %v76, %v109
    %v112 = vmul.f32 %v104, %v110
    %v113 = vmul.f32 %v105, %v110
    %v115 = vlaneseq
    %v116 = vshrl.u32 %v115, 7
    %v117 = vsub.s32 0, %v116
    %v118 = vrot.slane %v77, %v117
    %v120 = vadd.f32 %v112, %v118
    %v121 = vadd.f32 %v113, %v118
    %v122 = vld [vmem:[%s5] sm:$0xff]
    %v123 = vld [vmem:[%s5 + $0x8] sm:$0xff]
    %v124 = vld [vmem:[%s5 + $0x10] sm:$0xff]
    %v125 = vld [vmem:[%s5 + $0x18] sm:$0xff]
    %v126 = vld [vmem:[%s6] sm:$0x1]
    %v128 = vlaneseq
    %v129 = vshrl.u32 %v128, 7
    %v130 = vsub.s32 0, %v129
    %v131 = vrot.slane %v126, %v130
    %v134 = vsel %vm78, %v120, 0
    %v137 = vsel %vm78, %v121, 0
    %139 = vmatprep.subr.mxu0 0.0
    %140 = vmatpush1.msra.mxu0 0.0
    %141 = vmatprep.subr.mxu0 0.0
    %142 = vmatpush1.msra.mxu0 0.0
    %143 = vmatprep.subr.mxu0 0.0
    %144 = vmatpush1.msra.mxu0 0.0
    %145 = vmatprep.subr.mxu0 0.0
    %146 = vmatpush1.msra.mxu0 0.0
    %147 = vmatprep.subr.mxu0 0.0
    %148 = vmatpush1.msra.mxu0 0.0
    %149 = vmatprep.subr.mxu0 0.0
    %150 = vmatpush1.msra.mxu0 0.0
    %151 = vmatprep.subr.mxu0 0.0
    %152 = vmatpush1.msra.mxu0 0.0
    %153 = vmatprep.subr.mxu0 0.0
    %154 = vmatpush1.msra.mxu0 0.0
    %155 = vmatprep.subr.mxu0 0.0
    %156 = vmatpush1.msra.mxu0 0.0
    %157 = vmatprep.subr.mxu0 0.0
    %158 = vmatpush1.msra.mxu0 0.0
    %159 = vmatprep.subr.mxu0 0.0
    %160 = vmatpush1.msra.mxu0 0.0
    %161 = vmatprep.subr.mxu0 0.0
    %162 = vmatpush1.msra.mxu0 0.0
    %163 = vmatprep.subr.mxu0 0.0
    %164 = vmatpush1.msra.mxu0 %v125
    %165 = vmatprep.subr.mxu0 0.0
    %166 = vmatpush1.msra.mxu0 %v124
    %167 = vmatprep.subr.mxu0 0.0
    %168 = vmatpush1.msra.mxu0 %v123
    %169 = vmatprep.subr.mxu0 0.0
    %170 = vmatpush1.msra.mxu0 %v122
    %171 = vmatprep.subr.mxu0 0.0
    %172 = vmatpush2.msra.mxu0 0.0
    %173 = vmatprep.subr.mxu0 0.0
    %174 = vmatpush2.msra.mxu0 0.0
    %175 = vmatprep.subr.mxu0 0.0
    %176 = vmatpush2.msra.mxu0 0.0
    %177 = vmatprep.subr.mxu0 0.0
    %178 = vmatpush2.msra.mxu0 0.0
    %179 = vmatprep.subr.mxu0 0.0
    %180 = vmatpush2.msra.mxu0 0.0
    %181 = vmatprep.subr.mxu0 0.0
    %182 = vmatpush2.msra.mxu0 0.0
    %183 = vmatprep.subr.mxu0 0.0
    %184 = vmatpush2.msra.mxu0 0.0
    %185 = vmatprep.subr.mxu0 0.0
    %186 = vmatpush2.msra.mxu0 0.0
    %187 = vmatprep.subr.mxu0 0.0
    %188 = vmatpush2.msra.mxu0 0.0
    %189 = vmatprep.subr.mxu0 0.0
    %190 = vmatpush2.msra.mxu0 0.0
    %191 = vmatprep.subr.mxu0 0.0
    %192 = vmatpush2.msra.mxu0 0.0
    %193 = vmatprep.subr.mxu0 0.0
    %194 = vmatpush2.msra.mxu0 0.0
    %195 = vmatprep.subr.mxu0 0.0
    %196 = vmatpush2.msra.mxu0 0.0
    %197 = vmatprep.subr.mxu0 0.0
    %198 = vmatpush2.msra.mxu0 0.0
    %199 = vmatprep.subr.mxu0 0.0
    %200 = vmatpush2.msra.mxu0 0.0
    %201 = vmatprep.subr.mxu0 0.0
    %202 = vmatpush2.msra.mxu0 0.0
    %203 = vmatprep.mubr.f32.mxu0 0.0
    %204 = vmatmul.mubr.f32.gmra.mxu0 %v134
    %v205 = vpop.f32.mrf.mxu0
    %v206 = vadd.f32 %v131, %v205
    %v207 = vpop.f32.mrf.mxu0
    %208 = vmatprep.mubr.f32.mxu0 0.0
    %209 = vmatmul.mubr.f32.gmra.mxu0 %v137
    %v210 = vpop.f32.mrf.mxu0
    %v211 = vadd.f32 %v131, %v210
    %v212 = vpop.f32.mrf.mxu0
    %213 = vdwg.mxu0
    %215 = vrot.lane.b32.xlu0 %v206, 96
    %v216 = vpop.permute.xlu0 %215
    %vm217 = vcmask 64512
    %v218 = vsel %vm217, %v206, 0
    %v220 = vsel %vm217, %v216, 0
    %222 = vmatprep.subr.mxu0 0.0
    %223 = vmatpush1.xpose.msra.mxu0 0.0
    %224 = vmatprep.subr.mxu0 0.0
    %225 = vmatpush1.xpose.msra.mxu0 0.0
    %226 = vmatprep.subr.mxu0 0.0
    %227 = vmatpush1.xpose.msra.mxu0 0.0
    %228 = vmatprep.subr.mxu0 0.0
    %229 = vmatpush1.xpose.msra.mxu0 0.0
    %230 = vmatprep.subr.mxu0 0.0
    %231 = vmatpush1.xpose.msra.mxu0 0.0
    %232 = vmatprep.subr.mxu0 0.0
    %233 = vmatpush1.xpose.msra.mxu0 0.0
    %234 = vmatprep.subr.mxu0 0.0
    %235 = vmatpush1.xpose.msra.mxu0 0.0
    %236 = vmatprep.subr.mxu0 0.0
    %237 = vmatpush1.xpose.msra.mxu0 0.0
    %238 = vmatprep.subr.mxu0 0.0
    %239 = vmatpush1.xpose.msra.mxu0 0.0
    %240 = vmatprep.subr.mxu0 0.0
    %241 = vmatpush1.xpose.msra.mxu0 0.0
    %242 = vmatprep.subr.mxu0 0.0
    %243 = vmatpush1.xpose.msra.mxu0 0.0
    %244 = vmatprep.subr.mxu0 0.0
    %245 = vmatpush1.xpose.msra.mxu0 0.0
    %246 = vmatprep.subr.mxu0 0.0
    %247 = vmatpush1.xpose.msra.mxu0 0.0
    %248 = vmatprep.subr.mxu0 0.0
    %249 = vmatpush1.xpose.msra.mxu0 0.0
    %250 = vmatprep.subr.mxu0 0.0
    %251 = vmatpush1.xpose.msra.mxu0 0.0
    %252 = vmatprep.subr.mxu0 0.0
    %253 = vmatpush1.xpose.msra.mxu0 %v220
    %254 = vmatprep.subr.mxu0 0.0
    %255 = vmatpush2.xpose.msra.mxu0 0.0
    %256 = vmatprep.subr.mxu0 0.0
    %257 = vmatpush2.xpose.msra.mxu0 0.0
    %258 = vmatprep.subr.mxu0 0.0
    %259 = vmatpush2.xpose.msra.mxu0 0.0
    %260 = vmatprep.subr.mxu0 0.0
    %261 = vmatpush2.xpose.msra.mxu0 0.0
    %262 = vmatprep.subr.mxu0 0.0
    %263 = vmatpush2.xpose.msra.mxu0 0.0
    %264 = vmatprep.subr.mxu0 0.0
    %265 = vmatpush2.xpose.msra.mxu0 0.0
    %266 = vmatprep.subr.mxu0 0.0
    %267 = vmatpush2.xpose.msra.mxu0 0.0
    %268 = vmatprep.subr.mxu0 0.0
    %269 = vmatpush2.xpose.msra.mxu0 0.0
    %270 = vmatprep.subr.mxu0 0.0
    %271 = vmatpush2.xpose.msra.mxu0 0.0
    %272 = vmatprep.subr.mxu0 0.0
    %273 = vmatpush2.xpose.msra.mxu0 0.0
    %274 = vmatprep.subr.mxu0 0.0
    %275 = vmatpush2.xpose.msra.mxu0 0.0
    %276 = vmatprep.subr.mxu0 0.0
    %277 = vmatpush2.xpose.msra.mxu0 0.0
    %278 = vmatprep.subr.mxu0 0.0
    %279 = vmatpush2.xpose.msra.mxu0 0.0
    %280 = vmatprep.subr.mxu0 0.0
    %281 = vmatpush2.xpose.msra.mxu0 0.0
    %282 = vmatprep.subr.mxu0 0.0
    %283 = vmatpush2.xpose.msra.mxu0 0.0
    %284 = vmatprep.subr.mxu0 0.0
    %285 = vmatpush2.xpose.msra.mxu0 0.0
    %286 = vmatprep.mubr.f32.mxu0 0.0
    %287 = vmatmul.mubr.f32.gmra.mxu0 %v218
    %v288 = vpop.f32.mrf.mxu0
    %v289 = vadd.f32 0.0, %v288
    %v290 = vpop.f32.mrf.mxu0
    %291 = vdwg.mxu0
    %293 = vrot.lane.b32.xlu0 %v211, 96
    %v294 = vpop.permute.xlu0 %293
    %v295 = vsel %vm217, %v211, 0
    %v297 = vsel %vm217, %v294, 0
    %299 = vmatprep.subr.mxu0 0.0
    %300 = vmatpush1.xpose.msra.mxu0 0.0
    %301 = vmatprep.subr.mxu0 0.0
    %302 = vmatpush1.xpose.msra.mxu0 0.0
    %303 = vmatprep.subr.mxu0 0.0
    %304 = vmatpush1.xpose.msra.mxu0 0.0
    %305 = vmatprep.subr.mxu0 0.0
    %306 = vmatpush1.xpose.msra.mxu0 0.0
    %307 = vmatprep.subr.mxu0 0.0
    %308 = vmatpush1.xpose.msra.mxu0 0.0
    %309 = vmatprep.subr.mxu0 0.0
    %310 = vmatpush1.xpose.msra.mxu0 0.0
    %311 = vmatprep.subr.mxu0 0.0
    %312 = vmatpush1.xpose.msra.mxu0 0.0
    %313 = vmatprep.subr.mxu0 0.0
    %314 = vmatpush1.xpose.msra.mxu0 0.0
    %315 = vmatprep.subr.mxu0 0.0
    %316 = vmatpush1.xpose.msra.mxu0 0.0
    %317 = vmatprep.subr.mxu0 0.0
    %318 = vmatpush1.xpose.msra.mxu0 0.0
    %319 = vmatprep.subr.mxu0 0.0
    %320 = vmatpush1.xpose.msra.mxu0 0.0
    %321 = vmatprep.subr.mxu0 0.0
    %322 = vmatpush1.xpose.msra.mxu0 0.0
    %323 = vmatprep.subr.mxu0 0.0
    %324 = vmatpush1.xpose.msra.mxu0 0.0
    %325 = vmatprep.subr.mxu0 0.0
    %326 = vmatpush1.xpose.msra.mxu0 0.0
    %327 = vmatprep.subr.mxu0 0.0
    %328 = vmatpush1.xpose.msra.mxu0 0.0
    %329 = vmatprep.subr.mxu0 0.0
    %330 = vmatpush1.xpose.msra.mxu0 %v297
    %331 = vmatprep.subr.mxu0 0.0
    %332 = vmatpush2.xpose.msra.mxu0 0.0
    %333 = vmatprep.subr.mxu0 0.0
    %334 = vmatpush2.xpose.msra.mxu0 0.0
    %335 = vmatprep.subr.mxu0 0.0
    %336 = vmatpush2.xpose.msra.mxu0 0.0
    %337 = vmatprep.subr.mxu0 0.0
    %338 = vmatpush2.xpose.msra.mxu0 0.0
    %339 = vmatprep.subr.mxu0 0.0
    %340 = vmatpush2.xpose.msra.mxu0 0.0
    %341 = vmatprep.subr.mxu0 0.0
    %342 = vmatpush2.xpose.msra.mxu0 0.0
    %343 = vmatprep.subr.mxu0 0.0
    %344 = vmatpush2.xpose.msra.mxu0 0.0
    %345 = vmatprep.subr.mxu0 0.0
    %346 = vmatpush2.xpose.msra.mxu0 0.0
    %347 = vmatprep.subr.mxu0 0.0
    %348 = vmatpush2.xpose.msra.mxu0 0.0
    %349 = vmatprep.subr.mxu0 0.0
    %350 = vmatpush2.xpose.msra.mxu0 0.0
    %351 = vmatprep.subr.mxu0 0.0
    %352 = vmatpush2.xpose.msra.mxu0 0.0
    %353 = vmatprep.subr.mxu0 0.0
    %354 = vmatpush2.xpose.msra.mxu0 0.0
    %355 = vmatprep.subr.mxu0 0.0
    %356 = vmatpush2.xpose.msra.mxu0 0.0
    %357 = vmatprep.subr.mxu0 0.0
    %358 = vmatpush2.xpose.msra.mxu0 0.0
    %359 = vmatprep.subr.mxu0 0.0
    %360 = vmatpush2.xpose.msra.mxu0 0.0
    %361 = vmatprep.subr.mxu0 0.0
    %362 = vmatpush2.xpose.msra.mxu0 0.0
    %363 = vmatprep.mubr.f32.mxu0 0.0
    %364 = vmatmul.mubr.f32.gmra.mxu0 %v295
    %v365 = vpop.f32.mrf.mxu0
    %v366 = vadd.f32 0.0, %v365
    %v367 = vpop.f32.mrf.mxu0
    %368 = vdwg.mxu0
    %v369 = vmul.f32 %v289, 0.35355338
    %v370 = vmul.f32 %v366, 0.35355338
    %v373 = vlaneseq
    %v374 = vshrl.u32 %v373, 7
    %v375 = vsub.s32 0, %v374
    %v376 = vrot.slane %v72, %v375
    %v377 = vlaneseq
    %v378 = vshrl.u32 %v377, 7
    %v379 = vsub.s32 0, %v378
    %v380 = vrot.slane %v73, %v379
    %v383 = vadd.f32 %v369, %v376
    %v384 = vadd.f32 %v370, %v380
    %v385 = vsel %vm217, %v383, -inf
    %386 = vmax.xlane.f32.xlu0 %v385
    %v387 = vpop.xlane.xlu0 %386
    %v388 = vsel %vm217, %v384, -inf
    %389 = vmax.xlane.f32.xlu0 %v388
    %v390 = vpop.xlane.xlu0 %389
    %v391 = vsub.f32 %v383, %v387
    %v392 = vsub.f32 %v384, %v390
    %v393 = vmul.f32 %v391, 1.442695
    %v394 = vpow.pop %v393
    %v395 = vmul.f32 %v392, 1.442695
    %v396 = vpow.pop %v395
    %v397 = vsel %vm217, %v394, 0.0
    %398 = vadd.xlane.f32.xlu0 %v397
    %v399 = vpop.xlane.xlu0 %398
    %v400 = vsel %vm217, %v396, 0.0
    %401 = vadd.xlane.f32.xlu0 %v400
    %v402 = vpop.xlane.xlu0 %401
    %v403 = vrcp.pop %v399
    %v404 = vrcp.pop %v402
    %v405 = vmul.f32 %v394, %v403
    %v406 = vmul.f32 %v396, %v404
    %407 = vrot.lane.b32.xlu0 %v206, 64
    %v408 = vpop.permute.xlu0 %407
    %v411 = vsel %vm217, %v405, 0
    %413 = vmatprep.subr.mxu0 0.0
    %414 = vmatpush1.msra.mxu0 0.0
    %415 = vmatprep.subr.mxu0 0.0
    %416 = vmatpush1.msra.mxu0 0.0
    %417 = vmatprep.subr.mxu0 0.0
    %418 = vmatpush1.msra.mxu0 0.0
    %419 = vmatprep.subr.mxu0 0.0
    %420 = vmatpush1.msra.mxu0 0.0
    %421 = vmatprep.subr.mxu0 0.0
    %422 = vmatpush1.msra.mxu0 0.0
    %423 = vmatprep.subr.mxu0 0.0
    %424 = vmatpush1.msra.mxu0 0.0
    %425 = vmatprep.subr.mxu0 0.0
    %426 = vmatpush1.msra.mxu0 0.0
    %427 = vmatprep.subr.mxu0 0.0
    %428 = vmatpush1.msra.mxu0 0.0
    %429 = vmatprep.subr.mxu0 0.0
    %430 = vmatpush1.msra.mxu0 0.0
    %431 = vmatprep.subr.mxu0 0.0
    %432 = vmatpush1.msra.mxu0 0.0
    %433 = vmatprep.subr.mxu0 0.0
    %434 = vmatpush1.msra.mxu0 0.0
    %435 = vmatprep.subr.mxu0 0.0
    %436 = vmatpush1.msra.mxu0 0.0
    %437 = vmatprep.subr.mxu0 0.0
    %438 = vmatpush1.msra.mxu0 0.0
    %439 = vmatprep.subr.mxu0 0.0
    %440 = vmatpush1.msra.mxu0 0.0
    %441 = vmatprep.subr.mxu0 0.0
    %442 = vmatpush1.msra.mxu0 0.0
    %443 = vmatprep.subr.mxu0 0.0
    %444 = vmatpush1.msra.mxu0 %v408
    %445 = vmatprep.subr.mxu0 0.0
    %446 = vmatpush2.msra.mxu0 0.0
    %447 = vmatprep.subr.mxu0 0.0
    %448 = vmatpush2.msra.mxu0 0.0
    %449 = vmatprep.subr.mxu0 0.0
    %450 = vmatpush2.msra.mxu0 0.0
    %451 = vmatprep.subr.mxu0 0.0
    %452 = vmatpush2.msra.mxu0 0.0
    %453 = vmatprep.subr.mxu0 0.0
    %454 = vmatpush2.msra.mxu0 0.0
    %455 = vmatprep.subr.mxu0 0.0
    %456 = vmatpush2.msra.mxu0 0.0
    %457 = vmatprep.subr.mxu0 0.0
    %458 = vmatpush2.msra.mxu0 0.0
    %459 = vmatprep.subr.mxu0 0.0
    %460 = vmatpush2.msra.mxu0 0.0
    %461 = vmatprep.subr.mxu0 0.0
    %462 = vmatpush2.msra.mxu0 0.0
    %463 = vmatprep.subr.mxu0 0.0
    %464 = vmatpush2.msra.mxu0 0.0
    %465 = vmatprep.subr.mxu0 0.0
    %466 = vmatpush2.msra.mxu0 0.0
    %467 = vmatprep.subr.mxu0 0.0
    %468 = vmatpush2.msra.mxu0 0.0
    %469 = vmatprep.subr.mxu0 0.0
    %470 = vmatpush2.msra.mxu0 0.0
    %471 = vmatprep.subr.mxu0 0.0
    %472 = vmatpush2.msra.mxu0 0.0
    %473 = vmatprep.subr.mxu0 0.0
    %474 = vmatpush2.msra.mxu0 0.0
    %475 = vmatprep.subr.mxu0 0.0
    %476 = vmatpush2.msra.mxu0 0.0
    %477 = vmatprep.mubr.f32.mxu0 0.0
    %478 = vmatmul.mubr.f32.gmra.mxu0 %v411
    %v479 = vpop.f32.mrf.mxu0
    %v480 = vadd.f32 0.0, %v479
    %v481 = vpop.f32.mrf.mxu0
    %482 = vdwg.mxu0
    %483 = vrot.lane.b32.xlu0 %v211, 64
    %v484 = vpop.permute.xlu0 %483
    %v487 = vsel %vm217, %v406, 0
    %489 = vmatprep.subr.mxu0 0.0
    %490 = vmatpush1.msra.mxu0 0.0
    %491 = vmatprep.subr.mxu0 0.0
    %492 = vmatpush1.msra.mxu0 0.0
    %493 = vmatprep.subr.mxu0 0.0
    %494 = vmatpush1.msra.mxu0 0.0
    %495 = vmatprep.subr.mxu0 0.0
    %496 = vmatpush1.msra.mxu0 0.0
    %497 = vmatprep.subr.mxu0 0.0
    %498 = vmatpush1.msra.mxu0 0.0
    %499 = vmatprep.subr.mxu0 0.0
    %500 = vmatpush1.msra.mxu0 0.0
    %501 = vmatprep.subr.mxu0 0.0
    %502 = vmatpush1.msra.mxu0 0.0
    %503 = vmatprep.subr.mxu0 0.0
    %504 = vmatpush1.msra.mxu0 0.0
    %505 = vmatprep.subr.mxu0 0.0
    %506 = vmatpush1.msra.mxu0 0.0
    %507 = vmatprep.subr.mxu0 0.0
    %508 = vmatpush1.msra.mxu0 0.0
    %509 = vmatprep.subr.mxu0 0.0
    %510 = vmatpush1.msra.mxu0 0.0
    %511 = vmatprep.subr.mxu0 0.0
    %512 = vmatpush1.msra.mxu0 0.0
    %513 = vmatprep.subr.mxu0 0.0
    %514 = vmatpush1.msra.mxu0 0.0
    %515 = vmatprep.subr.mxu0 0.0
    %516 = vmatpush1.msra.mxu0 0.0
    %517 = vmatprep.subr.mxu0 0.0
    %518 = vmatpush1.msra.mxu0 0.0
    %519 = vmatprep.subr.mxu0 0.0
    %520 = vmatpush1.msra.mxu0 %v484
    %521 = vmatprep.subr.mxu0 0.0
    %522 = vmatpush2.msra.mxu0 0.0
    %523 = vmatprep.subr.mxu0 0.0
    %524 = vmatpush2.msra.mxu0 0.0
    %525 = vmatprep.subr.mxu0 0.0
    %526 = vmatpush2.msra.mxu0 0.0
    %527 = vmatprep.subr.mxu0 0.0
    %528 = vmatpush2.msra.mxu0 0.0
    %529 = vmatprep.subr.mxu0 0.0
    %530 = vmatpush2.msra.mxu0 0.0
    %531 = vmatprep.subr.mxu0 0.0
    %532 = vmatpush2.msra.mxu0 0.0
    %533 = vmatprep.subr.mxu0 0.0
    %534 = vmatpush2.msra.mxu0 0.0
    %535 = vmatprep.subr.mxu0 0.0
    %536 = vmatpush2.msra.mxu0 0.0
    %537 = vmatprep.subr.mxu0 0.0
    %538 = vmatpush2.msra.mxu0 0.0
    %539 = vmatprep.subr.mxu0 0.0
    %540 = vmatpush2.msra.mxu0 0.0
    %541 = vmatprep.subr.mxu0 0.0
    %542 = vmatpush2.msra.mxu0 0.0
    %543 = vmatprep.subr.mxu0 0.0
    %544 = vmatpush2.msra.mxu0 0.0
    %545 = vmatprep.subr.mxu0 0.0
    %546 = vmatpush2.msra.mxu0 0.0
    %547 = vmatprep.subr.mxu0 0.0
    %548 = vmatpush2.msra.mxu0 0.0
    %549 = vmatprep.subr.mxu0 0.0
    %550 = vmatpush2.msra.mxu0 0.0
    %551 = vmatprep.subr.mxu0 0.0
    %552 = vmatpush2.msra.mxu0 0.0
    %553 = vmatprep.mubr.f32.mxu0 0.0
    %554 = vmatmul.mubr.f32.gmra.mxu0 %v487
    %v555 = vpop.f32.mrf.mxu0
    %v556 = vadd.f32 0.0, %v555
    %v557 = vpop.f32.mrf.mxu0
    %558 = vdwg.mxu0
    %559 = vrot.lane.b32.xlu0 %v206, 120
    %v560 = vpop.permute.xlu0 %559
    %561 = vrot.lane.b32.xlu0 %v206, 88
    %v562 = vpop.permute.xlu0 %561
    %v563 = vsel %vm217, %v560, 0
    %v565 = vsel %vm217, %v562, 0
    %567 = vmatprep.subr.mxu0 0.0
    %568 = vmatpush1.xpose.msra.mxu0 0.0
    %569 = vmatprep.subr.mxu0 0.0
    %570 = vmatpush1.xpose.msra.mxu0 0.0
    %571 = vmatprep.subr.mxu0 0.0
    %572 = vmatpush1.xpose.msra.mxu0 0.0
    %573 = vmatprep.subr.mxu0 0.0
    %574 = vmatpush1.xpose.msra.mxu0 0.0
    %575 = vmatprep.subr.mxu0 0.0
    %576 = vmatpush1.xpose.msra.mxu0 0.0
    %577 = vmatprep.subr.mxu0 0.0
    %578 = vmatpush1.xpose.msra.mxu0 0.0
    %579 = vmatprep.subr.mxu0 0.0
    %580 = vmatpush1.xpose.msra.mxu0 0.0
    %581 = vmatprep.subr.mxu0 0.0
    %582 = vmatpush1.xpose.msra.mxu0 0.0
    %583 = vmatprep.subr.mxu0 0.0
    %584 = vmatpush1.xpose.msra.mxu0 0.0
    %585 = vmatprep.subr.mxu0 0.0
    %586 = vmatpush1.xpose.msra.mxu0 0.0
    %587 = vmatprep.subr.mxu0 0.0
    %588 = vmatpush1.xpose.msra.mxu0 0.0
    %589 = vmatprep.subr.mxu0 0.0
    %590 = vmatpush1.xpose.msra.mxu0 0.0
    %591 = vmatprep.subr.mxu0 0.0
    %592 = vmatpush1.xpose.msra.mxu0 0.0
    %593 = vmatprep.subr.mxu0 0.0
    %594 = vmatpush1.xpose.msra.mxu0 0.0
    %595 = vmatprep.subr.mxu0 0.0
    %596 = vmatpush1.xpose.msra.mxu0 0.0
    %597 = vmatprep.subr.mxu0 0.0
    %598 = vmatpush1.xpose.msra.mxu0 %v565
    %599 = vmatprep.subr.mxu0 0.0
    %600 = vmatpush2.xpose.msra.mxu0 0.0
    %601 = vmatprep.subr.mxu0 0.0
    %602 = vmatpush2.xpose.msra.mxu0 0.0
    %603 = vmatprep.subr.mxu0 0.0
    %604 = vmatpush2.xpose.msra.mxu0 0.0
    %605 = vmatprep.subr.mxu0 0.0
    %606 = vmatpush2.xpose.msra.mxu0 0.0
    %607 = vmatprep.subr.mxu0 0.0
    %608 = vmatpush2.xpose.msra.mxu0 0.0
    %609 = vmatprep.subr.mxu0 0.0
    %610 = vmatpush2.xpose.msra.mxu0 0.0
    %611 = vmatprep.subr.mxu0 0.0
    %612 = vmatpush2.xpose.msra.mxu0 0.0
    %613 = vmatprep.subr.mxu0 0.0
    %614 = vmatpush2.xpose.msra.mxu0 0.0
    %615 = vmatprep.subr.mxu0 0.0
    %616 = vmatpush2.xpose.msra.mxu0 0.0
    %617 = vmatprep.subr.mxu0 0.0
    %618 = vmatpush2.xpose.msra.mxu0 0.0
    %619 = vmatprep.subr.mxu0 0.0
    %620 = vmatpush2.xpose.msra.mxu0 0.0
    %621 = vmatprep.subr.mxu0 0.0
    %622 = vmatpush2.xpose.msra.mxu0 0.0
    %623 = vmatprep.subr.mxu0 0.0
    %624 = vmatpush2.xpose.msra.mxu0 0.0
    %625 = vmatprep.subr.mxu0 0.0
    %626 = vmatpush2.xpose.msra.mxu0 0.0
    %627 = vmatprep.subr.mxu0 0.0
    %628 = vmatpush2.xpose.msra.mxu0 0.0
    %629 = vmatprep.subr.mxu0 0.0
    %630 = vmatpush2.xpose.msra.mxu0 0.0
    %631 = vmatprep.mubr.f32.mxu0 0.0
    %632 = vmatmul.mubr.f32.gmra.mxu0 %v563
    %v633 = vpop.f32.mrf.mxu0
    %v634 = vadd.f32 0.0, %v633
    %v635 = vpop.f32.mrf.mxu0
    %636 = vdwg.mxu0
    %637 = vrot.lane.b32.xlu0 %v211, 120
    %v638 = vpop.permute.xlu0 %637
    %639 = vrot.lane.b32.xlu0 %v211, 88
    %v640 = vpop.permute.xlu0 %639
    %v641 = vsel %vm217, %v638, 0
    %v643 = vsel %vm217, %v640, 0
    %645 = vmatprep.subr.mxu0 0.0
    %646 = vmatpush1.xpose.msra.mxu0 0.0
    %647 = vmatprep.subr.mxu0 0.0
    %648 = vmatpush1.xpose.msra.mxu0 0.0
    %649 = vmatprep.subr.mxu0 0.0
    %650 = vmatpush1.xpose.msra.mxu0 0.0
    %651 = vmatprep.subr.mxu0 0.0
    %652 = vmatpush1.xpose.msra.mxu0 0.0
    %653 = vmatprep.subr.mxu0 0.0
    %654 = vmatpush1.xpose.msra.mxu0 0.0
    %655 = vmatprep.subr.mxu0 0.0
    %656 = vmatpush1.xpose.msra.mxu0 0.0
    %657 = vmatprep.subr.mxu0 0.0
    %658 = vmatpush1.xpose.msra.mxu0 0.0
    %659 = vmatprep.subr.mxu0 0.0
    %660 = vmatpush1.xpose.msra.mxu0 0.0
    %661 = vmatprep.subr.mxu0 0.0
    %662 = vmatpush1.xpose.msra.mxu0 0.0
    %663 = vmatprep.subr.mxu0 0.0
    %664 = vmatpush1.xpose.msra.mxu0 0.0
    %665 = vmatprep.subr.mxu0 0.0
    %666 = vmatpush1.xpose.msra.mxu0 0.0
    %667 = vmatprep.subr.mxu0 0.0
    %668 = vmatpush1.xpose.msra.mxu0 0.0
    %669 = vmatprep.subr.mxu0 0.0
    %670 = vmatpush1.xpose.msra.mxu0 0.0
    %671 = vmatprep.subr.mxu0 0.0
    %672 = vmatpush1.xpose.msra.mxu0 0.0
    %673 = vmatprep.subr.mxu0 0.0
    %674 = vmatpush1.xpose.msra.mxu0 0.0
    %675 = vmatprep.subr.mxu0 0.0
    %676 = vmatpush1.xpose.msra.mxu0 %v643
    %677 = vmatprep.subr.mxu0 0.0
    %678 = vmatpush2.xpose.msra.mxu0 0.0
    %679 = vmatprep.subr.mxu0 0.0
    %680 = vmatpush2.xpose.msra.mxu0 0.0
    %681 = vmatprep.subr.mxu0 0.0
    %682 = vmatpush2.xpose.msra.mxu0 0.0
    %683 = vmatprep.subr.mxu0 0.0
    %684 = vmatpush2.xpose.msra.mxu0 0.0
    %685 = vmatprep.subr.mxu0 0.0
    %686 = vmatpush2.xpose.msra.mxu0 0.0
    %687 = vmatprep.subr.mxu0 0.0
    %688 = vmatpush2.xpose.msra.mxu0 0.0
    %689 = vmatprep.subr.mxu0 0.0
    %690 = vmatpush2.xpose.msra.mxu0 0.0
    %691 = vmatprep.subr.mxu0 0.0
    %692 = vmatpush2.xpose.msra.mxu0 0.0
    %693 = vmatprep.subr.mxu0 0.0
    %694 = vmatpush2.xpose.msra.mxu0 0.0
    %695 = vmatprep.subr.mxu0 0.0
    %696 = vmatpush2.xpose.msra.mxu0 0.0
    %697 = vmatprep.subr.mxu0 0.0
    %698 = vmatpush2.xpose.msra.mxu0 0.0
    %699 = vmatprep.subr.mxu0 0.0
    %700 = vmatpush2.xpose.msra.mxu0 0.0
    %701 = vmatprep.subr.mxu0 0.0
    %702 = vmatpush2.xpose.msra.mxu0 0.0
    %703 = vmatprep.subr.mxu0 0.0
    %704 = vmatpush2.xpose.msra.mxu0 0.0
    %705 = vmatprep.subr.mxu0 0.0
    %706 = vmatpush2.xpose.msra.mxu0 0.0
    %707 = vmatprep.subr.mxu0 0.0
    %708 = vmatpush2.xpose.msra.mxu0 0.0
    %709 = vmatprep.mubr.f32.mxu0 0.0
    %710 = vmatmul.mubr.f32.gmra.mxu0 %v641
    %v711 = vpop.f32.mrf.mxu0
    %v712 = vadd.f32 0.0, %v711
    %v713 = vpop.f32.mrf.mxu0
    %714 = vdwg.mxu0
    %v715 = vmul.f32 %v634, 0.35355338
    %v716 = vmul.f32 %v712, 0.35355338
    %v717 = vadd.f32 %v715, %v376
    %v718 = vadd.f32 %v716, %v380
    %v719 = vsel %vm217, %v717, -inf
    %720 = vmax.xlane.f32.xlu0 %v719
    %v721 = vpop.xlane.xlu0 %720
    %v722 = vsel %vm217, %v718, -inf
    %723 = vmax.xlane.f32.xlu0 %v722
    %v724 = vpop.xlane.xlu0 %723
    %v725 = vsub.f32 %v717, %v721
    %v726 = vsub.f32 %v718, %v724
    %v727 = vmul.f32 %v725, 1.442695
    %v728 = vpow.pop %v727
    %v729 = vmul.f32 %v726, 1.442695
    %v730 = vpow.pop %v729
    %v731 = vsel %vm217, %v728, 0.0
    %732 = vadd.xlane.f32.xlu0 %v731
    %v733 = vpop.xlane.xlu0 %732
    %v734 = vsel %vm217, %v730, 0.0
    %735 = vadd.xlane.f32.xlu0 %v734
    %v736 = vpop.xlane.xlu0 %735
    %v737 = vrcp.pop %v733
    %v738 = vrcp.pop %v736
    %v739 = vmul.f32 %v728, %v737
    %v740 = vmul.f32 %v730, %v738
    %741 = vrot.lane.b32.xlu0 %v206, 56
    %v742 = vpop.permute.xlu0 %741
    %v745 = vsel %vm217, %v739, 0
    %747 = vmatprep.subr.mxu0 0.0
    %748 = vmatpush1.msra.mxu0 0.0
    %749 = vmatprep.subr.mxu0 0.0
    %750 = vmatpush1.msra.mxu0 0.0
    %751 = vmatprep.subr.mxu0 0.0
    %752 = vmatpush1.msra.mxu0 0.0
    %753 = vmatprep.subr.mxu0 0.0
    %754 = vmatpush1.msra.mxu0 0.0
    %755 = vmatprep.subr.mxu0 0.0
    %756 = vmatpush1.msra.mxu0 0.0
    %757 = vmatprep.subr.mxu0 0.0
    %758 = vmatpush1.msra.mxu0 0.0
    %759 = vmatprep.subr.mxu0 0.0
    %760 = vmatpush1.msra.mxu0 0.0
    %761 = vmatprep.subr.mxu0 0.0
    %762 = vmatpush1.msra.mxu0 0.0
    %763 = vmatprep.subr.mxu0 0.0
    %764 = vmatpush1.msra.mxu0 0.0
    %765 = vmatprep.subr.mxu0 0.0
    %766 = vmatpush1.msra.mxu0 0.0
    %767 = vmatprep.subr.mxu0 0.0
    %768 = vmatpush1.msra.mxu0 0.0
    %769 = vmatprep.subr.mxu0 0.0
    %770 = vmatpush1.msra.mxu0 0.0
    %771 = vmatprep.subr.mxu0 0.0
    %772 = vmatpush1.msra.mxu0 0.0
    %773 = vmatprep.subr.mxu0 0.0
    %774 = vmatpush1.msra.mxu0 0.0
    %775 = vmatprep.subr.mxu0 0.0
    %776 = vmatpush1.msra.mxu0 0.0
    %777 = vmatprep.subr.mxu0 0.0
    %778 = vmatpush1.msra.mxu0 %v742
    %779 = vmatprep.subr.mxu0 0.0
    %780 = vmatpush2.msra.mxu0 0.0
    %781 = vmatprep.subr.mxu0 0.0
    %782 = vmatpush2.msra.mxu0 0.0
    %783 = vmatprep.subr.mxu0 0.0
    %784 = vmatpush2.msra.mxu0 0.0
    %785 = vmatprep.subr.mxu0 0.0
    %786 = vmatpush2.msra.mxu0 0.0
    %787 = vmatprep.subr.mxu0 0.0
    %788 = vmatpush2.msra.mxu0 0.0
    %789 = vmatprep.subr.mxu0 0.0
    %790 = vmatpush2.msra.mxu0 0.0
    %791 = vmatprep.subr.mxu0 0.0
    %792 = vmatpush2.msra.mxu0 0.0
    %793 = vmatprep.subr.mxu0 0.0
    %794 = vmatpush2.msra.mxu0 0.0
    %795 = vmatprep.subr.mxu0 0.0
    %796 = vmatpush2.msra.mxu0 0.0
    %797 = vmatprep.subr.mxu0 0.0
    %798 = vmatpush2.msra.mxu0 0.0
    %799 = vmatprep.subr.mxu0 0.0
    %800 = vmatpush2.msra.mxu0 0.0
    %801 = vmatprep.subr.mxu0 0.0
    %802 = vmatpush2.msra.mxu0 0.0
    %803 = vmatprep.subr.mxu0 0.0
    %804 = vmatpush2.msra.mxu0 0.0
    %805 = vmatprep.subr.mxu0 0.0
    %806 = vmatpush2.msra.mxu0 0.0
    %807 = vmatprep.subr.mxu0 0.0
    %808 = vmatpush2.msra.mxu0 0.0
    %809 = vmatprep.subr.mxu0 0.0
    %810 = vmatpush2.msra.mxu0 0.0
    %811 = vmatprep.mubr.f32.mxu0 0.0
    %812 = vmatmul.mubr.f32.gmra.mxu0 %v745
    %v813 = vpop.f32.mrf.mxu0
    %v814 = vadd.f32 0.0, %v813
    %v815 = vpop.f32.mrf.mxu0
    %816 = vdwg.mxu0
    %817 = vrot.lane.b32.xlu0 %v211, 56
    %v818 = vpop.permute.xlu0 %817
    %v821 = vsel %vm217, %v740, 0
    %823 = vmatprep.subr.mxu0 0.0
    %824 = vmatpush1.msra.mxu0 0.0
    %825 = vmatprep.subr.mxu0 0.0
    %826 = vmatpush1.msra.mxu0 0.0
    %827 = vmatprep.subr.mxu0 0.0
    %828 = vmatpush1.msra.mxu0 0.0
    %829 = vmatprep.subr.mxu0 0.0
    %830 = vmatpush1.msra.mxu0 0.0
    %831 = vmatprep.subr.mxu0 0.0
    %832 = vmatpush1.msra.mxu0 0.0
    %833 = vmatprep.subr.mxu0 0.0
    %834 = vmatpush1.msra.mxu0 0.0
    %835 = vmatprep.subr.mxu0 0.0
    %836 = vmatpush1.msra.mxu0 0.0
    %837 = vmatprep.subr.mxu0 0.0
    %838 = vmatpush1.msra.mxu0 0.0
    %839 = vmatprep.subr.mxu0 0.0
    %840 = vmatpush1.msra.mxu0 0.0
    %841 = vmatprep.subr.mxu0 0.0
    %842 = vmatpush1.msra.mxu0 0.0
    %843 = vmatprep.subr.mxu0 0.0
    %844 = vmatpush1.msra.mxu0 0.0
    %845 = vmatprep.subr.mxu0 0.0
    %846 = vmatpush1.msra.mxu0 0.0
    %847 = vmatprep.subr.mxu0 0.0
    %848 = vmatpush1.msra.mxu0 0.0
    %849 = vmatprep.subr.mxu0 0.0
    %850 = vmatpush1.msra.mxu0 0.0
    %851 = vmatprep.subr.mxu0 0.0
    %852 = vmatpush1.msra.mxu0 0.0
    %853 = vmatprep.subr.mxu0 0.0
    %854 = vmatpush1.msra.mxu0 %v818
    %855 = vmatprep.subr.mxu0 0.0
    %856 = vmatpush2.msra.mxu0 0.0
    %857 = vmatprep.subr.mxu0 0.0
    %858 = vmatpush2.msra.mxu0 0.0
    %859 = vmatprep.subr.mxu0 0.0
    %860 = vmatpush2.msra.mxu0 0.0
    %861 = vmatprep.subr.mxu0 0.0
    %862 = vmatpush2.msra.mxu0 0.0
    %863 = vmatprep.subr.mxu0 0.0
    %864 = vmatpush2.msra.mxu0 0.0
    %865 = vmatprep.subr.mxu0 0.0
    %866 = vmatpush2.msra.mxu0 0.0
    %867 = vmatprep.subr.mxu0 0.0
    %868 = vmatpush2.msra.mxu0 0.0
    %869 = vmatprep.subr.mxu0 0.0
    %870 = vmatpush2.msra.mxu0 0.0
    %871 = vmatprep.subr.mxu0 0.0
    %872 = vmatpush2.msra.mxu0 0.0
    %873 = vmatprep.subr.mxu0 0.0
    %874 = vmatpush2.msra.mxu0 0.0
    %875 = vmatprep.subr.mxu0 0.0
    %876 = vmatpush2.msra.mxu0 0.0
    %877 = vmatprep.subr.mxu0 0.0
    %878 = vmatpush2.msra.mxu0 0.0
    %879 = vmatprep.subr.mxu0 0.0
    %880 = vmatpush2.msra.mxu0 0.0
    %881 = vmatprep.subr.mxu0 0.0
    %882 = vmatpush2.msra.mxu0 0.0
    %883 = vmatprep.subr.mxu0 0.0
    %884 = vmatpush2.msra.mxu0 0.0
    %885 = vmatprep.subr.mxu0 0.0
    %886 = vmatpush2.msra.mxu0 0.0
    %887 = vmatprep.mubr.f32.mxu0 0.0
    %888 = vmatmul.mubr.f32.gmra.mxu0 %v821
    %v889 = vpop.f32.mrf.mxu0
    %v890 = vadd.f32 0.0, %v889
    %v891 = vpop.f32.mrf.mxu0
    %892 = vdwg.mxu0
    %893 = vrot.lane.b32.xlu0 %v206, 112
    %v894 = vpop.permute.xlu0 %893
    %895 = vrot.lane.b32.xlu0 %v206, 80
    %v896 = vpop.permute.xlu0 %895
    %v897 = vsel %vm217, %v894, 0
    %v899 = vsel %vm217, %v896, 0
    %901 = vmatprep.subr.mxu0 0.0
    %902 = vmatpush1.xpose.msra.mxu0 0.0
    %903 = vmatprep.subr.mxu0 0.0
    %904 = vmatpush1.xpose.msra.mxu0 0.0
    %905 = vmatprep.subr.mxu0 0.0
    %906 = vmatpush1.xpose.msra.mxu0 0.0
    %907 = vmatprep.subr.mxu0 0.0
    %908 = vmatpush1.xpose.msra.mxu0 0.0
    %909 = vmatprep.subr.mxu0 0.0
    %910 = vmatpush1.xpose.msra.mxu0 0.0
    %911 = vmatprep.subr.mxu0 0.0
    %912 = vmatpush1.xpose.msra.mxu0 0.0
    %913 = vmatprep.subr.mxu0 0.0
    %914 = vmatpush1.xpose.msra.mxu0 0.0
    %915 = vmatprep.subr.mxu0 0.0
    %916 = vmatpush1.xpose.msra.mxu0 0.0
    %917 = vmatprep.subr.mxu0 0.0
    %918 = vmatpush1.xpose.msra.mxu0 0.0
    %919 = vmatprep.subr.mxu0 0.0
    %920 = vmatpush1.xpose.msra.mxu0 0.0
    %921 = vmatprep.subr.mxu0 0.0
    %922 = vmatpush1.xpose.msra.mxu0 0.0
    %923 = vmatprep.subr.mxu0 0.0
    %924 = vmatpush1.xpose.msra.mxu0 0.0
    %925 = vmatprep.subr.mxu0 0.0
    %926 = vmatpush1.xpose.msra.mxu0 0.0
    %927 = vmatprep.subr.mxu0 0.0
    %928 = vmatpush1.xpose.msra.mxu0 0.0
    %929 = vmatprep.subr.mxu0 0.0
    %930 = vmatpush1.xpose.msra.mxu0 0.0
    %931 = vmatprep.subr.mxu0 0.0
    %932 = vmatpush1.xpose.msra.mxu0 %v899
    %933 = vmatprep.subr.mxu0 0.0
    %934 = vmatpush2.xpose.msra.mxu0 0.0
    %935 = vmatprep.subr.mxu0 0.0
    %936 = vmatpush2.xpose.msra.mxu0 0.0
    %937 = vmatprep.subr.mxu0 0.0
    %938 = vmatpush2.xpose.msra.mxu0 0.0
    %939 = vmatprep.subr.mxu0 0.0
    %940 = vmatpush2.xpose.msra.mxu0 0.0
    %941 = vmatprep.subr.mxu0 0.0
    %942 = vmatpush2.xpose.msra.mxu0 0.0
    %943 = vmatprep.subr.mxu0 0.0
    %944 = vmatpush2.xpose.msra.mxu0 0.0
    %945 = vmatprep.subr.mxu0 0.0
    %946 = vmatpush2.xpose.msra.mxu0 0.0
    %947 = vmatprep.subr.mxu0 0.0
    %948 = vmatpush2.xpose.msra.mxu0 0.0
    %949 = vmatprep.subr.mxu0 0.0
    %950 = vmatpush2.xpose.msra.mxu0 0.0
    %951 = vmatprep.subr.mxu0 0.0
    %952 = vmatpush2.xpose.msra.mxu0 0.0
    %953 = vmatprep.subr.mxu0 0.0
    %954 = vmatpush2.xpose.msra.mxu0 0.0
    %955 = vmatprep.subr.mxu0 0.0
    %956 = vmatpush2.xpose.msra.mxu0 0.0
    %957 = vmatprep.subr.mxu0 0.0
    %958 = vmatpush2.xpose.msra.mxu0 0.0
    %959 = vmatprep.subr.mxu0 0.0
    %960 = vmatpush2.xpose.msra.mxu0 0.0
    %961 = vmatprep.subr.mxu0 0.0
    %962 = vmatpush2.xpose.msra.mxu0 0.0
    %963 = vmatprep.subr.mxu0 0.0
    %964 = vmatpush2.xpose.msra.mxu0 0.0
    %965 = vmatprep.mubr.f32.mxu0 0.0
    %966 = vmatmul.mubr.f32.gmra.mxu0 %v897
    %v967 = vpop.f32.mrf.mxu0
    %v968 = vadd.f32 0.0, %v967
    %v969 = vpop.f32.mrf.mxu0
    %970 = vdwg.mxu0
    %971 = vrot.lane.b32.xlu0 %v211, 112
    %v972 = vpop.permute.xlu0 %971
    %973 = vrot.lane.b32.xlu0 %v211, 80
    %v974 = vpop.permute.xlu0 %973
    %v975 = vsel %vm217, %v972, 0
    %v977 = vsel %vm217, %v974, 0
    %979 = vmatprep.subr.mxu0 0.0
    %980 = vmatpush1.xpose.msra.mxu0 0.0
    %981 = vmatprep.subr.mxu0 0.0
    %982 = vmatpush1.xpose.msra.mxu0 0.0
    %983 = vmatprep.subr.mxu0 0.0
    %984 = vmatpush1.xpose.msra.mxu0 0.0
    %985 = vmatprep.subr.mxu0 0.0
    %986 = vmatpush1.xpose.msra.mxu0 0.0
    %987 = vmatprep.subr.mxu0 0.0
    %988 = vmatpush1.xpose.msra.mxu0 0.0
    %989 = vmatprep.subr.mxu0 0.0
    %990 = vmatpush1.xpose.msra.mxu0 0.0
    %991 = vmatprep.subr.mxu0 0.0
    %992 = vmatpush1.xpose.msra.mxu0 0.0
    %993 = vmatprep.subr.mxu0 0.0
    %994 = vmatpush1.xpose.msra.mxu0 0.0
    %995 = vmatprep.subr.mxu0 0.0
    %996 = vmatpush1.xpose.msra.mxu0 0.0
    %997 = vmatprep.subr.mxu0 0.0
    %998 = vmatpush1.xpose.msra.mxu0 0.0
    %999 = vmatprep.subr.mxu0 0.0
    %1000 = vmatpush1.xpose.msra.mxu0 0.0
    %1001 = vmatprep.subr.mxu0 0.0
    %1002 = vmatpush1.xpose.msra.mxu0 0.0
    %1003 = vmatprep.subr.mxu0 0.0
    %1004 = vmatpush1.xpose.msra.mxu0 0.0
    %1005 = vmatprep.subr.mxu0 0.0
    %1006 = vmatpush1.xpose.msra.mxu0 0.0
    %1007 = vmatprep.subr.mxu0 0.0
    %1008 = vmatpush1.xpose.msra.mxu0 0.0
    %1009 = vmatprep.subr.mxu0 0.0
    %1010 = vmatpush1.xpose.msra.mxu0 %v977
    %1011 = vmatprep.subr.mxu0 0.0
    %1012 = vmatpush2.xpose.msra.mxu0 0.0
    %1013 = vmatprep.subr.mxu0 0.0
    %1014 = vmatpush2.xpose.msra.mxu0 0.0
    %1015 = vmatprep.subr.mxu0 0.0
    %1016 = vmatpush2.xpose.msra.mxu0 0.0
    %1017 = vmatprep.subr.mxu0 0.0
    %1018 = vmatpush2.xpose.msra.mxu0 0.0
    %1019 = vmatprep.subr.mxu0 0.0
    %1020 = vmatpush2.xpose.msra.mxu0 0.0
    %1021 = vmatprep.subr.mxu0 0.0
    %1022 = vmatpush2.xpose.msra.mxu0 0.0
    %1023 = vmatprep.subr.mxu0 0.0
    %1024 = vmatpush2.xpose.msra.mxu0 0.0
    %1025 = vmatprep.subr.mxu0 0.0
    %1026 = vmatpush2.xpose.msra.mxu0 0.0
    %1027 = vmatprep.subr.mxu0 0.0
    %1028 = vmatpush2.xpose.msra.mxu0 0.0
    %1029 = vmatprep.subr.mxu0 0.0
    %1030 = vmatpush2.xpose.msra.mxu0 0.0
    %1031 = vmatprep.subr.mxu0 0.0
    %1032 = vmatpush2.xpose.msra.mxu0 0.0
    %1033 = vmatprep.subr.mxu0 0.0
    %1034 = vmatpush2.xpose.msra.mxu0 0.0
    %1035 = vmatprep.subr.mxu0 0.0
    %1036 = vmatpush2.xpose.msra.mxu0 0.0
    %1037 = vmatprep.subr.mxu0 0.0
    %1038 = vmatpush2.xpose.msra.mxu0 0.0
    %1039 = vmatprep.subr.mxu0 0.0
    %1040 = vmatpush2.xpose.msra.mxu0 0.0
    %1041 = vmatprep.subr.mxu0 0.0
    %1042 = vmatpush2.xpose.msra.mxu0 0.0
    %1043 = vmatprep.mubr.f32.mxu0 0.0
    %1044 = vmatmul.mubr.f32.gmra.mxu0 %v975
    %v1045 = vpop.f32.mrf.mxu0
    %v1046 = vadd.f32 0.0, %v1045
    %v1047 = vpop.f32.mrf.mxu0
    %1048 = vdwg.mxu0
    %v1049 = vmul.f32 %v968, 0.35355338
    %v1050 = vmul.f32 %v1046, 0.35355338
    %v1051 = vadd.f32 %v1049, %v376
    %v1052 = vadd.f32 %v1050, %v380
    %v1053 = vsel %vm217, %v1051, -inf
    %1054 = vmax.xlane.f32.xlu0 %v1053
    %v1055 = vpop.xlane.xlu0 %1054
    %v1056 = vsel %vm217, %v1052, -inf
    %1057 = vmax.xlane.f32.xlu0 %v1056
    %v1058 = vpop.xlane.xlu0 %1057
    %v1059 = vsub.f32 %v1051, %v1055
    %v1060 = vsub.f32 %v1052, %v1058
    %v1061 = vmul.f32 %v1059, 1.442695
    %v1062 = vpow.pop %v1061
    %v1063 = vmul.f32 %v1060, 1.442695
    %v1064 = vpow.pop %v1063
    %v1065 = vsel %vm217, %v1062, 0.0
    %1066 = vadd.xlane.f32.xlu0 %v1065
    %v1067 = vpop.xlane.xlu0 %1066
    %v1068 = vsel %vm217, %v1064, 0.0
    %1069 = vadd.xlane.f32.xlu0 %v1068
    %v1070 = vpop.xlane.xlu0 %1069
    %v1071 = vrcp.pop %v1067
    %v1072 = vrcp.pop %v1070
    %v1073 = vmul.f32 %v1062, %v1071
    %v1074 = vmul.f32 %v1064, %v1072
    %1075 = vrot.lane.b32.xlu0 %v206, 48
    %v1076 = vpop.permute.xlu0 %1075
    %v1079 = vsel %vm217, %v1073, 0
    %1081 = vmatprep.subr.mxu0 0.0
    %1082 = vmatpush1.msra.mxu0 0.0
    %1083 = vmatprep.subr.mxu0 0.0
    %1084 = vmatpush1.msra.mxu0 0.0
    %1085 = vmatprep.subr.mxu0 0.0
    %1086 = vmatpush1.msra.mxu0 0.0
    %1087 = vmatprep.subr.mxu0 0.0
    %1088 = vmatpush1.msra.mxu0 0.0
    %1089 = vmatprep.subr.mxu0 0.0
    %1090 = vmatpush1.msra.mxu0 0.0
    %1091 = vmatprep.subr.mxu0 0.0
    %1092 = vmatpush1.msra.mxu0 0.0
    %1093 = vmatprep.subr.mxu0 0.0
    %1094 = vmatpush1.msra.mxu0 0.0
    %1095 = vmatprep.subr.mxu0 0.0
    %1096 = vmatpush1.msra.mxu0 0.0
    %1097 = vmatprep.subr.mxu0 0.0
    %1098 = vmatpush1.msra.mxu0 0.0
    %1099 = vmatprep.subr.mxu0 0.0
    %1100 = vmatpush1.msra.mxu0 0.0
    %1101 = vmatprep.subr.mxu0 0.0
    %1102 = vmatpush1.msra.mxu0 0.0
    %1103 = vmatprep.subr.mxu0 0.0
    %1104 = vmatpush1.msra.mxu0 0.0
    %1105 = vmatprep.subr.mxu0 0.0
    %1106 = vmatpush1.msra.mxu0 0.0
    %1107 = vmatprep.subr.mxu0 0.0
    %1108 = vmatpush1.msra.mxu0 0.0
    %1109 = vmatprep.subr.mxu0 0.0
    %1110 = vmatpush1.msra.mxu0 0.0
    %1111 = vmatprep.subr.mxu0 0.0
    %1112 = vmatpush1.msra.mxu0 %v1076
    %1113 = vmatprep.subr.mxu0 0.0
    %1114 = vmatpush2.msra.mxu0 0.0
    %1115 = vmatprep.subr.mxu0 0.0
    %1116 = vmatpush2.msra.mxu0 0.0
    %1117 = vmatprep.subr.mxu0 0.0
    %1118 = vmatpush2.msra.mxu0 0.0
    %1119 = vmatprep.subr.mxu0 0.0
    %1120 = vmatpush2.msra.mxu0 0.0
    %1121 = vmatprep.subr.mxu0 0.0
    %1122 = vmatpush2.msra.mxu0 0.0
    %1123 = vmatprep.subr.mxu0 0.0
    %1124 = vmatpush2.msra.mxu0 0.0
    %1125 = vmatprep.subr.mxu0 0.0
    %1126 = vmatpush2.msra.mxu0 0.0
    %1127 = vmatprep.subr.mxu0 0.0
    %1128 = vmatpush2.msra.mxu0 0.0
    %1129 = vmatprep.subr.mxu0 0.0
    %1130 = vmatpush2.msra.mxu0 0.0
    %1131 = vmatprep.subr.mxu0 0.0
    %1132 = vmatpush2.msra.mxu0 0.0
    %1133 = vmatprep.subr.mxu0 0.0
    %1134 = vmatpush2.msra.mxu0 0.0
    %1135 = vmatprep.subr.mxu0 0.0
    %1136 = vmatpush2.msra.mxu0 0.0
    %1137 = vmatprep.subr.mxu0 0.0
    %1138 = vmatpush2.msra.mxu0 0.0
    %1139 = vmatprep.subr.mxu0 0.0
    %1140 = vmatpush2.msra.mxu0 0.0
    %1141 = vmatprep.subr.mxu0 0.0
    %1142 = vmatpush2.msra.mxu0 0.0
    %1143 = vmatprep.subr.mxu0 0.0
    %1144 = vmatpush2.msra.mxu0 0.0
    %1145 = vmatprep.mubr.f32.mxu0 0.0
    %1146 = vmatmul.mubr.f32.gmra.mxu0 %v1079
    %v1147 = vpop.f32.mrf.mxu0
    %v1148 = vadd.f32 0.0, %v1147
    %v1149 = vpop.f32.mrf.mxu0
    %1150 = vdwg.mxu0
    %1151 = vrot.lane.b32.xlu0 %v211, 48
    %v1152 = vpop.permute.xlu0 %1151
    %v1155 = vsel %vm217, %v1074, 0
    %1157 = vmatprep.subr.mxu0 0.0
    %1158 = vmatpush1.msra.mxu0 0.0
    %1159 = vmatprep.subr.mxu0 0.0
    %1160 = vmatpush1.msra.mxu0 0.0
    %1161 = vmatprep.subr.mxu0 0.0
    %1162 = vmatpush1.msra.mxu0 0.0
    %1163 = vmatprep.subr.mxu0 0.0
    %1164 = vmatpush1.msra.mxu0 0.0
    %1165 = vmatprep.subr.mxu0 0.0
    %1166 = vmatpush1.msra.mxu0 0.0
    %1167 = vmatprep.subr.mxu0 0.0
    %1168 = vmatpush1.msra.mxu0 0.0
    %1169 = vmatprep.subr.mxu0 0.0
    %1170 = vmatpush1.msra.mxu0 0.0
    %1171 = vmatprep.subr.mxu0 0.0
    %1172 = vmatpush1.msra.mxu0 0.0
    %1173 = vmatprep.subr.mxu0 0.0
    %1174 = vmatpush1.msra.mxu0 0.0
    %1175 = vmatprep.subr.mxu0 0.0
    %1176 = vmatpush1.msra.mxu0 0.0
    %1177 = vmatprep.subr.mxu0 0.0
    %1178 = vmatpush1.msra.mxu0 0.0
    %1179 = vmatprep.subr.mxu0 0.0
    %1180 = vmatpush1.msra.mxu0 0.0
    %1181 = vmatprep.subr.mxu0 0.0
    %1182 = vmatpush1.msra.mxu0 0.0
    %1183 = vmatprep.subr.mxu0 0.0
    %1184 = vmatpush1.msra.mxu0 0.0
    %1185 = vmatprep.subr.mxu0 0.0
    %1186 = vmatpush1.msra.mxu0 0.0
    %1187 = vmatprep.subr.mxu0 0.0
    %1188 = vmatpush1.msra.mxu0 %v1152
    %1189 = vmatprep.subr.mxu0 0.0
    %1190 = vmatpush2.msra.mxu0 0.0
    %1191 = vmatprep.subr.mxu0 0.0
    %1192 = vmatpush2.msra.mxu0 0.0
    %1193 = vmatprep.subr.mxu0 0.0
    %1194 = vmatpush2.msra.mxu0 0.0
    %1195 = vmatprep.subr.mxu0 0.0
    %1196 = vmatpush2.msra.mxu0 0.0
    %1197 = vmatprep.subr.mxu0 0.0
    %1198 = vmatpush2.msra.mxu0 0.0
    %1199 = vmatprep.subr.mxu0 0.0
    %1200 = vmatpush2.msra.mxu0 0.0
    %1201 = vmatprep.subr.mxu0 0.0
    %1202 = vmatpush2.msra.mxu0 0.0
    %1203 = vmatprep.subr.mxu0 0.0
    %1204 = vmatpush2.msra.mxu0 0.0
    %1205 = vmatprep.subr.mxu0 0.0
    %1206 = vmatpush2.msra.mxu0 0.0
    %1207 = vmatprep.subr.mxu0 0.0
    %1208 = vmatpush2.msra.mxu0 0.0
    %1209 = vmatprep.subr.mxu0 0.0
    %1210 = vmatpush2.msra.mxu0 0.0
    %1211 = vmatprep.subr.mxu0 0.0
    %1212 = vmatpush2.msra.mxu0 0.0
    %1213 = vmatprep.subr.mxu0 0.0
    %1214 = vmatpush2.msra.mxu0 0.0
    %1215 = vmatprep.subr.mxu0 0.0
    %1216 = vmatpush2.msra.mxu0 0.0
    %1217 = vmatprep.subr.mxu0 0.0
    %1218 = vmatpush2.msra.mxu0 0.0
    %1219 = vmatprep.subr.mxu0 0.0
    %1220 = vmatpush2.msra.mxu0 0.0
    %1221 = vmatprep.mubr.f32.mxu0 0.0
    %1222 = vmatmul.mubr.f32.gmra.mxu0 %v1155
    %v1223 = vpop.f32.mrf.mxu0
    %v1224 = vadd.f32 0.0, %v1223
    %v1225 = vpop.f32.mrf.mxu0
    %1226 = vdwg.mxu0
    %1227 = vrot.lane.b32.xlu0 %v206, 104
    %v1228 = vpop.permute.xlu0 %1227
    %1229 = vrot.lane.b32.xlu0 %v206, 72
    %v1230 = vpop.permute.xlu0 %1229
    %v1231 = vsel %vm217, %v1228, 0
    %v1233 = vsel %vm217, %v1230, 0
    %1235 = vmatprep.subr.mxu0 0.0
    %1236 = vmatpush1.xpose.msra.mxu0 0.0
    %1237 = vmatprep.subr.mxu0 0.0
    %1238 = vmatpush1.xpose.msra.mxu0 0.0
    %1239 = vmatprep.subr.mxu0 0.0
    %1240 = vmatpush1.xpose.msra.mxu0 0.0
    %1241 = vmatprep.subr.mxu0 0.0
    %1242 = vmatpush1.xpose.msra.mxu0 0.0
    %1243 = vmatprep.subr.mxu0 0.0
    %1244 = vmatpush1.xpose.msra.mxu0 0.0
    %1245 = vmatprep.subr.mxu0 0.0
    %1246 = vmatpush1.xpose.msra.mxu0 0.0
    %1247 = vmatprep.subr.mxu0 0.0
    %1248 = vmatpush1.xpose.msra.mxu0 0.0
    %1249 = vmatprep.subr.mxu0 0.0
    %1250 = vmatpush1.xpose.msra.mxu0 0.0
    %1251 = vmatprep.subr.mxu0 0.0
    %1252 = vmatpush1.xpose.msra.mxu0 0.0
    %1253 = vmatprep.subr.mxu0 0.0
    %1254 = vmatpush1.xpose.msra.mxu0 0.0
    %1255 = vmatprep.subr.mxu0 0.0
    %1256 = vmatpush1.xpose.msra.mxu0 0.0
    %1257 = vmatprep.subr.mxu0 0.0
    %1258 = vmatpush1.xpose.msra.mxu0 0.0
    %1259 = vmatprep.subr.mxu0 0.0
    %1260 = vmatpush1.xpose.msra.mxu0 0.0
    %1261 = vmatprep.subr.mxu0 0.0
    %1262 = vmatpush1.xpose.msra.mxu0 0.0
    %1263 = vmatprep.subr.mxu0 0.0
    %1264 = vmatpush1.xpose.msra.mxu0 0.0
    %1265 = vmatprep.subr.mxu0 0.0
    %1266 = vmatpush1.xpose.msra.mxu0 %v1233
    %1267 = vmatprep.subr.mxu0 0.0
    %1268 = vmatpush2.xpose.msra.mxu0 0.0
    %1269 = vmatprep.subr.mxu0 0.0
    %1270 = vmatpush2.xpose.msra.mxu0 0.0
    %1271 = vmatprep.subr.mxu0 0.0
    %1272 = vmatpush2.xpose.msra.mxu0 0.0
    %1273 = vmatprep.subr.mxu0 0.0
    %1274 = vmatpush2.xpose.msra.mxu0 0.0
    %1275 = vmatprep.subr.mxu0 0.0
    %1276 = vmatpush2.xpose.msra.mxu0 0.0
    %1277 = vmatprep.subr.mxu0 0.0
    %1278 = vmatpush2.xpose.msra.mxu0 0.0
    %1279 = vmatprep.subr.mxu0 0.0
    %1280 = vmatpush2.xpose.msra.mxu0 0.0
    %1281 = vmatprep.subr.mxu0 0.0
    %1282 = vmatpush2.xpose.msra.mxu0 0.0
    %1283 = vmatprep.subr.mxu0 0.0
    %1284 = vmatpush2.xpose.msra.mxu0 0.0
    %1285 = vmatprep.subr.mxu0 0.0
    %1286 = vmatpush2.xpose.msra.mxu0 0.0
    %1287 = vmatprep.subr.mxu0 0.0
    %1288 = vmatpush2.xpose.msra.mxu0 0.0
    %1289 = vmatprep.subr.mxu0 0.0
    %1290 = vmatpush2.xpose.msra.mxu0 0.0
    %1291 = vmatprep.subr.mxu0 0.0
    %1292 = vmatpush2.xpose.msra.mxu0 0.0
    %1293 = vmatprep.subr.mxu0 0.0
    %1294 = vmatpush2.xpose.msra.mxu0 0.0
    %1295 = vmatprep.subr.mxu0 0.0
    %1296 = vmatpush2.xpose.msra.mxu0 0.0
    %1297 = vmatprep.subr.mxu0 0.0
    %1298 = vmatpush2.xpose.msra.mxu0 0.0
    %1299 = vmatprep.mubr.f32.mxu0 0.0
    %1300 = vmatmul.mubr.f32.gmra.mxu0 %v1231
    %v1301 = vpop.f32.mrf.mxu0
    %v1302 = vadd.f32 0.0, %v1301
    %v1303 = vpop.f32.mrf.mxu0
    %1304 = vdwg.mxu0
    %1305 = vrot.lane.b32.xlu0 %v211, 104
    %v1306 = vpop.permute.xlu0 %1305
    %1307 = vrot.lane.b32.xlu0 %v211, 72
    %v1308 = vpop.permute.xlu0 %1307
    %v1309 = vsel %vm217, %v1306, 0
    %v1311 = vsel %vm217, %v1308, 0
    %1313 = vmatprep.subr.mxu0 0.0
    %1314 = vmatpush1.xpose.msra.mxu0 0.0
    %1315 = vmatprep.subr.mxu0 0.0
    %1316 = vmatpush1.xpose.msra.mxu0 0.0
    %1317 = vmatprep.subr.mxu0 0.0
    %1318 = vmatpush1.xpose.msra.mxu0 0.0
    %1319 = vmatprep.subr.mxu0 0.0
    %1320 = vmatpush1.xpose.msra.mxu0 0.0
    %1321 = vmatprep.subr.mxu0 0.0
    %1322 = vmatpush1.xpose.msra.mxu0 0.0
    %1323 = vmatprep.subr.mxu0 0.0
    %1324 = vmatpush1.xpose.msra.mxu0 0.0
    %1325 = vmatprep.subr.mxu0 0.0
    %1326 = vmatpush1.xpose.msra.mxu0 0.0
    %1327 = vmatprep.subr.mxu0 0.0
    %1328 = vmatpush1.xpose.msra.mxu0 0.0
    %1329 = vmatprep.subr.mxu0 0.0
    %1330 = vmatpush1.xpose.msra.mxu0 0.0
    %1331 = vmatprep.subr.mxu0 0.0
    %1332 = vmatpush1.xpose.msra.mxu0 0.0
    %1333 = vmatprep.subr.mxu0 0.0
    %1334 = vmatpush1.xpose.msra.mxu0 0.0
    %1335 = vmatprep.subr.mxu0 0.0
    %1336 = vmatpush1.xpose.msra.mxu0 0.0
    %1337 = vmatprep.subr.mxu0 0.0
    %1338 = vmatpush1.xpose.msra.mxu0 0.0
    %1339 = vmatprep.subr.mxu0 0.0
    %1340 = vmatpush1.xpose.msra.mxu0 0.0
    %1341 = vmatprep.subr.mxu0 0.0
    %1342 = vmatpush1.xpose.msra.mxu0 0.0
    %1343 = vmatprep.subr.mxu0 0.0
    %1344 = vmatpush1.xpose.msra.mxu0 %v1311
    %1345 = vmatprep.subr.mxu0 0.0
    %1346 = vmatpush2.xpose.msra.mxu0 0.0
    %1347 = vmatprep.subr.mxu0 0.0
    %1348 = vmatpush2.xpose.msra.mxu0 0.0
    %1349 = vmatprep.subr.mxu0 0.0
    %1350 = vmatpush2.xpose.msra.mxu0 0.0
    %1351 = vmatprep.subr.mxu0 0.0
    %1352 = vmatpush2.xpose.msra.mxu0 0.0
    %1353 = vmatprep.subr.mxu0 0.0
    %1354 = vmatpush2.xpose.msra.mxu0 0.0
    %1355 = vmatprep.subr.mxu0 0.0
    %1356 = vmatpush2.xpose.msra.mxu0 0.0
    %1357 = vmatprep.subr.mxu0 0.0
    %1358 = vmatpush2.xpose.msra.mxu0 0.0
    %1359 = vmatprep.subr.mxu0 0.0
    %1360 = vmatpush2.xpose.msra.mxu0 0.0
    %1361 = vmatprep.subr.mxu0 0.0
    %1362 = vmatpush2.xpose.msra.mxu0 0.0
    %1363 = vmatprep.subr.mxu0 0.0
    %1364 = vmatpush2.xpose.msra.mxu0 0.0
    %1365 = vmatprep.subr.mxu0 0.0
    %1366 = vmatpush2.xpose.msra.mxu0 0.0
    %1367 = vmatprep.subr.mxu0 0.0
    %1368 = vmatpush2.xpose.msra.mxu0 0.0
    %1369 = vmatprep.subr.mxu0 0.0
    %1370 = vmatpush2.xpose.msra.mxu0 0.0
    %1371 = vmatprep.subr.mxu0 0.0
    %1372 = vmatpush2.xpose.msra.mxu0 0.0
    %1373 = vmatprep.subr.mxu0 0.0
    %1374 = vmatpush2.xpose.msra.mxu0 0.0
    %1375 = vmatprep.subr.mxu0 0.0
    %1376 = vmatpush2.xpose.msra.mxu0 0.0
    %1377 = vmatprep.mubr.f32.mxu0 0.0
    %1378 = vmatmul.mubr.f32.gmra.mxu0 %v1309
    %v1379 = vpop.f32.mrf.mxu0
    %v1380 = vadd.f32 0.0, %v1379
    %v1381 = vpop.f32.mrf.mxu0
    %1382 = vdwg.mxu0
    %v1383 = vmul.f32 %v1302, 0.35355338
    %v1384 = vmul.f32 %v1380, 0.35355338
    %v1385 = vadd.f32 %v1383, %v376
    %v1386 = vadd.f32 %v1384, %v380
    %v1387 = vsel %vm217, %v1385, -inf
    %1388 = vmax.xlane.f32.xlu0 %v1387
    %v1389 = vpop.xlane.xlu0 %1388
    %v1390 = vsel %vm217, %v1386, -inf
    %1391 = vmax.xlane.f32.xlu0 %v1390
    %v1392 = vpop.xlane.xlu0 %1391
    %v1393 = vsub.f32 %v1385, %v1389
    %v1394 = vsub.f32 %v1386, %v1392
    %v1395 = vmul.f32 %v1393, 1.442695
    %v1396 = vpow.pop %v1395
    %v1397 = vmul.f32 %v1394, 1.442695
    %v1398 = vpow.pop %v1397
    %v1399 = vsel %vm217, %v1396, 0.0
    %1400 = vadd.xlane.f32.xlu0 %v1399
    %v1401 = vpop.xlane.xlu0 %1400
    %v1402 = vsel %vm217, %v1398, 0.0
    %1403 = vadd.xlane.f32.xlu0 %v1402
    %v1404 = vpop.xlane.xlu0 %1403
    %v1405 = vrcp.pop %v1401
    %v1406 = vrcp.pop %v1404
    %v1407 = vmul.f32 %v1396, %v1405
    %v1408 = vmul.f32 %v1398, %v1406
    %1409 = vrot.lane.b32.xlu0 %v206, 40
    %v1410 = vpop.permute.xlu0 %1409
    %v1413 = vsel %vm217, %v1407, 0
    %1415 = vmatprep.subr.mxu0 0.0
    %1416 = vmatpush1.msra.mxu0 0.0
    %1417 = vmatprep.subr.mxu0 0.0
    %1418 = vmatpush1.msra.mxu0 0.0
    %1419 = vmatprep.subr.mxu0 0.0
    %1420 = vmatpush1.msra.mxu0 0.0
    %1421 = vmatprep.subr.mxu0 0.0
    %1422 = vmatpush1.msra.mxu0 0.0
    %1423 = vmatprep.subr.mxu0 0.0
    %1424 = vmatpush1.msra.mxu0 0.0
    %1425 = vmatprep.subr.mxu0 0.0
    %1426 = vmatpush1.msra.mxu0 0.0
    %1427 = vmatprep.subr.mxu0 0.0
    %1428 = vmatpush1.msra.mxu0 0.0
    %1429 = vmatprep.subr.mxu0 0.0
    %1430 = vmatpush1.msra.mxu0 0.0
    %1431 = vmatprep.subr.mxu0 0.0
    %1432 = vmatpush1.msra.mxu0 0.0
    %1433 = vmatprep.subr.mxu0 0.0
    %1434 = vmatpush1.msra.mxu0 0.0
    %1435 = vmatprep.subr.mxu0 0.0
    %1436 = vmatpush1.msra.mxu0 0.0
    %1437 = vmatprep.subr.mxu0 0.0
    %1438 = vmatpush1.msra.mxu0 0.0
    %1439 = vmatprep.subr.mxu0 0.0
    %1440 = vmatpush1.msra.mxu0 0.0
    %1441 = vmatprep.subr.mxu0 0.0
    %1442 = vmatpush1.msra.mxu0 0.0
    %1443 = vmatprep.subr.mxu0 0.0
    %1444 = vmatpush1.msra.mxu0 0.0
    %1445 = vmatprep.subr.mxu0 0.0
    %1446 = vmatpush1.msra.mxu0 %v1410
    %1447 = vmatprep.subr.mxu0 0.0
    %1448 = vmatpush2.msra.mxu0 0.0
    %1449 = vmatprep.subr.mxu0 0.0
    %1450 = vmatpush2.msra.mxu0 0.0
    %1451 = vmatprep.subr.mxu0 0.0
    %1452 = vmatpush2.msra.mxu0 0.0
    %1453 = vmatprep.subr.mxu0 0.0
    %1454 = vmatpush2.msra.mxu0 0.0
    %1455 = vmatprep.subr.mxu0 0.0
    %1456 = vmatpush2.msra.mxu0 0.0
    %1457 = vmatprep.subr.mxu0 0.0
    %1458 = vmatpush2.msra.mxu0 0.0
    %1459 = vmatprep.subr.mxu0 0.0
    %1460 = vmatpush2.msra.mxu0 0.0
    %1461 = vmatprep.subr.mxu0 0.0
    %1462 = vmatpush2.msra.mxu0 0.0
    %1463 = vmatprep.subr.mxu0 0.0
    %1464 = vmatpush2.msra.mxu0 0.0
    %1465 = vmatprep.subr.mxu0 0.0
    %1466 = vmatpush2.msra.mxu0 0.0
    %1467 = vmatprep.subr.mxu0 0.0
    %1468 = vmatpush2.msra.mxu0 0.0
    %1469 = vmatprep.subr.mxu0 0.0
    %1470 = vmatpush2.msra.mxu0 0.0
    %1471 = vmatprep.subr.mxu0 0.0
    %1472 = vmatpush2.msra.mxu0 0.0
    %1473 = vmatprep.subr.mxu0 0.0
    %1474 = vmatpush2.msra.mxu0 0.0
    %1475 = vmatprep.subr.mxu0 0.0
    %1476 = vmatpush2.msra.mxu0 0.0
    %1477 = vmatprep.subr.mxu0 0.0
    %1478 = vmatpush2.msra.mxu0 0.0
    %1479 = vmatprep.mubr.f32.mxu0 0.0
    %1480 = vmatmul.mubr.f32.gmra.mxu0 %v1413
    %v1481 = vpop.f32.mrf.mxu0
    %v1482 = vadd.f32 0.0, %v1481
    %v1483 = vpop.f32.mrf.mxu0
    %1484 = vdwg.mxu0
    %1485 = vrot.lane.b32.xlu0 %v211, 40
    %v1486 = vpop.permute.xlu0 %1485
    %v1489 = vsel %vm217, %v1408, 0
    %1491 = vmatprep.subr.mxu0 0.0
    %1492 = vmatpush1.msra.mxu0 0.0
    %1493 = vmatprep.subr.mxu0 0.0
    %1494 = vmatpush1.msra.mxu0 0.0
    %1495 = vmatprep.subr.mxu0 0.0
    %1496 = vmatpush1.msra.mxu0 0.0
    %1497 = vmatprep.subr.mxu0 0.0
    %1498 = vmatpush1.msra.mxu0 0.0
    %1499 = vmatprep.subr.mxu0 0.0
    %1500 = vmatpush1.msra.mxu0 0.0
    %1501 = vmatprep.subr.mxu0 0.0
    %1502 = vmatpush1.msra.mxu0 0.0
    %1503 = vmatprep.subr.mxu0 0.0
    %1504 = vmatpush1.msra.mxu0 0.0
    %1505 = vmatprep.subr.mxu0 0.0
    %1506 = vmatpush1.msra.mxu0 0.0
    %1507 = vmatprep.subr.mxu0 0.0
    %1508 = vmatpush1.msra.mxu0 0.0
    %1509 = vmatprep.subr.mxu0 0.0
    %1510 = vmatpush1.msra.mxu0 0.0
    %1511 = vmatprep.subr.mxu0 0.0
    %1512 = vmatpush1.msra.mxu0 0.0
    %1513 = vmatprep.subr.mxu0 0.0
    %1514 = vmatpush1.msra.mxu0 0.0
    %1515 = vmatprep.subr.mxu0 0.0
    %1516 = vmatpush1.msra.mxu0 0.0
    %1517 = vmatprep.subr.mxu0 0.0
    %1518 = vmatpush1.msra.mxu0 0.0
    %1519 = vmatprep.subr.mxu0 0.0
    %1520 = vmatpush1.msra.mxu0 0.0
    %1521 = vmatprep.subr.mxu0 0.0
    %1522 = vmatpush1.msra.mxu0 %v1486
    %1523 = vmatprep.subr.mxu0 0.0
    %1524 = vmatpush2.msra.mxu0 0.0
    %1525 = vmatprep.subr.mxu0 0.0
    %1526 = vmatpush2.msra.mxu0 0.0
    %1527 = vmatprep.subr.mxu0 0.0
    %1528 = vmatpush2.msra.mxu0 0.0
    %1529 = vmatprep.subr.mxu0 0.0
    %1530 = vmatpush2.msra.mxu0 0.0
    %1531 = vmatprep.subr.mxu0 0.0
    %1532 = vmatpush2.msra.mxu0 0.0
    %1533 = vmatprep.subr.mxu0 0.0
    %1534 = vmatpush2.msra.mxu0 0.0
    %1535 = vmatprep.subr.mxu0 0.0
    %1536 = vmatpush2.msra.mxu0 0.0
    %1537 = vmatprep.subr.mxu0 0.0
    %1538 = vmatpush2.msra.mxu0 0.0
    %1539 = vmatprep.subr.mxu0 0.0
    %1540 = vmatpush2.msra.mxu0 0.0
    %1541 = vmatprep.subr.mxu0 0.0
    %1542 = vmatpush2.msra.mxu0 0.0
    %1543 = vmatprep.subr.mxu0 0.0
    %1544 = vmatpush2.msra.mxu0 0.0
    %1545 = vmatprep.subr.mxu0 0.0
    %1546 = vmatpush2.msra.mxu0 0.0
    %1547 = vmatprep.subr.mxu0 0.0
    %1548 = vmatpush2.msra.mxu0 0.0
    %1549 = vmatprep.subr.mxu0 0.0
    %1550 = vmatpush2.msra.mxu0 0.0
    %1551 = vmatprep.subr.mxu0 0.0
    %1552 = vmatpush2.msra.mxu0 0.0
    %1553 = vmatprep.subr.mxu0 0.0
    %1554 = vmatpush2.msra.mxu0 0.0
    %1555 = vmatprep.mubr.f32.mxu0 0.0
    %1556 = vmatmul.mubr.f32.gmra.mxu0 %v1489
    %v1557 = vpop.f32.mrf.mxu0
    %v1558 = vadd.f32 0.0, %v1557
    %v1559 = vpop.f32.mrf.mxu0
    %1560 = vdwg.mxu0
    %1563 = vrot.lane.b32.xlu0 %v814, 8
    %v1564 = vpop.permute.xlu0 %1563
    %1565 = vrot.lane.b32.xlu0 %v890, 8
    %v1566 = vpop.permute.xlu0 %1565
    %1571 = vrot.lane.b32.xlu0 %v1148, 16
    %v1572 = vpop.permute.xlu0 %1571
    %1573 = vrot.lane.b32.xlu0 %v1224, 16
    %v1574 = vpop.permute.xlu0 %1573
    %1579 = vrot.lane.b32.xlu0 %v1482, 24
    %v1580 = vpop.permute.xlu0 %1579
    %1581 = vrot.lane.b32.xlu0 %v1558, 24
    %v1582 = vpop.permute.xlu0 %1581
    %v1585 = vsel %vm217, %v480, %v1564
    %v1586 = vsel %vm217, %v556, %v1566
    %vm1587 = vcmask 130048
    %v1588 = vsel %vm1587, %v1585, %v1572
    %v1589 = vsel %vm1587, %v1586, %v1574
    %vm1590 = vcmask 195584
    %v1591 = vsel %vm1590, %v1588, %v1580
    %v1592 = vsel %vm1590, %v1589, %v1582
    %v1593 = vld [vmem:[%s7] sm:$0xff]
    %v1594 = vld [vmem:[%s7 + $0x8] sm:$0xff]
    %v1595 = vld [vmem:[%s7 + $0x10] sm:$0xff]
    %v1596 = vld [vmem:[%s7 + $0x18] sm:$0xff]
    %v1597 = vld [vmem:[%s8] sm:$0x1]
    %v1599 = vlaneseq
    %v1600 = vshrl.u32 %v1599, 7
    %v1601 = vsub.s32 0, %v1600
    %v1602 = vrot.slane %v1597, %v1601
    %v1605 = vsel %vm78, %v1591, 0
    %v1608 = vsel %vm78, %v1592, 0
    %1610 = vmatprep.subr.mxu0 0.0
    %1611 = vmatpush1.msra.mxu0 0.0
    %1612 = vmatprep.subr.mxu0 0.0
    %1613 = vmatpush1.msra.mxu0 0.0
    %1614 = vmatprep.subr.mxu0 0.0
    %1615 = vmatpush1.msra.mxu0 0.0
    %1616 = vmatprep.subr.mxu0 0.0
    %1617 = vmatpush1.msra.mxu0 0.0
    %1618 = vmatprep.subr.mxu0 0.0
    %1619 = vmatpush1.msra.mxu0 0.0
    %1620 = vmatprep.subr.mxu0 0.0
    %1621 = vmatpush1.msra.mxu0 0.0
    %1622 = vmatprep.subr.mxu0 0.0
    %1623 = vmatpush1.msra.mxu0 0.0
    %1624 = vmatprep.subr.mxu0 0.0
    %1625 = vmatpush1.msra.mxu0 0.0
    %1626 = vmatprep.subr.mxu0 0.0
    %1627 = vmatpush1.msra.mxu0 0.0
    %1628 = vmatprep.subr.mxu0 0.0
    %1629 = vmatpush1.msra.mxu0 0.0
    %1630 = vmatprep.subr.mxu0 0.0
    %1631 = vmatpush1.msra.mxu0 0.0
    %1632 = vmatprep.subr.mxu0 0.0
    %1633 = vmatpush1.msra.mxu0 0.0
    %1634 = vmatprep.subr.mxu0 0.0
    %1635 = vmatpush1.msra.mxu0 %v1596
    %1636 = vmatprep.subr.mxu0 0.0
    %1637 = vmatpush1.msra.mxu0 %v1595
    %1638 = vmatprep.subr.mxu0 0.0
    %1639 = vmatpush1.msra.mxu0 %v1594
    %1640 = vmatprep.subr.mxu0 0.0
    %1641 = vmatpush1.msra.mxu0 %v1593
    %1642 = vmatprep.subr.mxu0 0.0
    %1643 = vmatpush2.msra.mxu0 0.0
    %1644 = vmatprep.subr.mxu0 0.0
    %1645 = vmatpush2.msra.mxu0 0.0
    %1646 = vmatprep.subr.mxu0 0.0
    %1647 = vmatpush2.msra.mxu0 0.0
    %1648 = vmatprep.subr.mxu0 0.0
    %1649 = vmatpush2.msra.mxu0 0.0
    %1650 = vmatprep.subr.mxu0 0.0
    %1651 = vmatpush2.msra.mxu0 0.0
    %1652 = vmatprep.subr.mxu0 0.0
    %1653 = vmatpush2.msra.mxu0 0.0
    %1654 = vmatprep.subr.mxu0 0.0
    %1655 = vmatpush2.msra.mxu0 0.0
    %1656 = vmatprep.subr.mxu0 0.0
    %1657 = vmatpush2.msra.mxu0 0.0
    %1658 = vmatprep.subr.mxu0 0.0
    %1659 = vmatpush2.msra.mxu0 0.0
    %1660 = vmatprep.subr.mxu0 0.0
    %1661 = vmatpush2.msra.mxu0 0.0
    %1662 = vmatprep.subr.mxu0 0.0
    %1663 = vmatpush2.msra.mxu0 0.0
    %1664 = vmatprep.subr.mxu0 0.0
    %1665 = vmatpush2.msra.mxu0 0.0
    %1666 = vmatprep.subr.mxu0 0.0
    %1667 = vmatpush2.msra.mxu0 0.0
    %1668 = vmatprep.subr.mxu0 0.0
    %1669 = vmatpush2.msra.mxu0 0.0
    %1670 = vmatprep.subr.mxu0 0.0
    %1671 = vmatpush2.msra.mxu0 0.0
    %1672 = vmatprep.subr.mxu0 0.0
    %1673 = vmatpush2.msra.mxu0 0.0
    %1674 = vmatprep.mubr.f32.mxu0 0.0
    %1675 = vmatmul.mubr.f32.gmra.mxu0 %v1605
    %v1676 = vpop.f32.mrf.mxu0
    %v1677 = vadd.f32 %v1602, %v1676
    %v1678 = vpop.f32.mrf.mxu0
    %1679 = vmatprep.mubr.f32.mxu0 0.0
    %1680 = vmatmul.mubr.f32.gmra.mxu0 %v1608
    %v1681 = vpop.f32.mrf.mxu0
    %v1682 = vadd.f32 %v1602, %v1681
    %v1683 = vpop.f32.mrf.mxu0
    %1684 = vdwg.mxu0
    %v1685 = vadd.f32 %v1677, %v120
    %v1686 = vadd.f32 %v1682, %v121
    %v1687 = vld [vmem:[%s9] sm:$0x1]
    %v1688 = vld [vmem:[%s10] sm:$0x1]
    %v1689 = vsel %vm78, %v1685, 0.0
    %1690 = vadd.xlane.f32.xlu0 %v1689
    %v1691 = vpop.xlane.xlu0 %1690
    %v1692 = vsel %vm78, %v1686, 0.0
    %1693 = vadd.xlane.f32.xlu0 %v1692
    %v1694 = vpop.xlane.xlu0 %1693
    %v1695 = vmul.f32 %v1691, %v85
    %v1696 = vmul.f32 %v1694, %v85
    %v1697 = vsub.f32 %v1685, %v1695
    %v1698 = vsub.f32 %v1686, %v1696
    %v1699 = vmul.f32 %v1697, %v1697
    %v1700 = vmul.f32 %v1698, %v1698
    %v1701 = vsel %vm78, %v1699, 0.0
    %1702 = vadd.xlane.f32.xlu0 %v1701
    %v1703 = vpop.xlane.xlu0 %1702
    %v1704 = vsel %vm78, %v1700, 0.0
    %1705 = vadd.xlane.f32.xlu0 %v1704
    %v1706 = vpop.xlane.xlu0 %1705
    %v1707 = vmul.f32 %v1703, %v85
    %v1708 = vmul.f32 %v1706, %v85
    %v1709 = vadd.f32 %v1707, 1e-12
    %v1710 = vadd.f32 %v1708, 1e-12
    %v1711 = vrsqrt.pop %v1709
    %v1712 = vrsqrt.pop %v1710
    %v1713 = vmul.f32 %v1697, %v1711
    %v1714 = vmul.f32 %v1698, %v1712
    %v1716 = vlaneseq
    %v1717 = vshrl.u32 %v1716, 7
    %v1718 = vsub.s32 0, %v1717
    %v1719 = vrot.slane %v1687, %v1718
    %v1721 = vmul.f32 %v1713, %v1719
    %v1722 = vmul.f32 %v1714, %v1719
    %v1724 = vlaneseq
    %v1725 = vshrl.u32 %v1724, 7
    %v1726 = vsub.s32 0, %v1725
    %v1727 = vrot.slane %v1688, %v1726
    %v1729 = vadd.f32 %v1721, %v1727
    %v1730 = vadd.f32 %v1722, %v1727
    %v1731 = vld [vmem:[%s11] sm:$0xff]
    %v1732 = vld [vmem:[%s11 + $0x8] sm:$0xff]
    %v1733 = vld [vmem:[%s11 + $0x10] sm:$0xff]
    %v1734 = vld [vmem:[%s11 + $0x18] sm:$0xff]
    %v1735 = vld [vmem:[%s12] sm:$0x1]
    %v1737 = vlaneseq
    %v1738 = vshrl.u32 %v1737, 7
    %v1739 = vsub.s32 0, %v1738
    %v1740 = vrot.slane %v1735, %v1739
    %v1743 = vsel %vm78, %v1729, 0
    %v1746 = vsel %vm78, %v1730, 0
    %1748 = vmatprep.subr.mxu0 0.0
    %1749 = vmatpush1.msra.mxu0 0.0
    %1750 = vmatprep.subr.mxu0 0.0
    %1751 = vmatpush1.msra.mxu0 0.0
    %1752 = vmatprep.subr.mxu0 0.0
    %1753 = vmatpush1.msra.mxu0 0.0
    %1754 = vmatprep.subr.mxu0 0.0
    %1755 = vmatpush1.msra.mxu0 0.0
    %1756 = vmatprep.subr.mxu0 0.0
    %1757 = vmatpush1.msra.mxu0 0.0
    %1758 = vmatprep.subr.mxu0 0.0
    %1759 = vmatpush1.msra.mxu0 0.0
    %1760 = vmatprep.subr.mxu0 0.0
    %1761 = vmatpush1.msra.mxu0 0.0
    %1762 = vmatprep.subr.mxu0 0.0
    %1763 = vmatpush1.msra.mxu0 0.0
    %1764 = vmatprep.subr.mxu0 0.0
    %1765 = vmatpush1.msra.mxu0 0.0
    %1766 = vmatprep.subr.mxu0 0.0
    %1767 = vmatpush1.msra.mxu0 0.0
    %1768 = vmatprep.subr.mxu0 0.0
    %1769 = vmatpush1.msra.mxu0 0.0
    %1770 = vmatprep.subr.mxu0 0.0
    %1771 = vmatpush1.msra.mxu0 0.0
    %1772 = vmatprep.subr.mxu0 0.0
    %1773 = vmatpush1.msra.mxu0 %v1734
    %1774 = vmatprep.subr.mxu0 0.0
    %1775 = vmatpush1.msra.mxu0 %v1733
    %1776 = vmatprep.subr.mxu0 0.0
    %1777 = vmatpush1.msra.mxu0 %v1732
    %1778 = vmatprep.subr.mxu0 0.0
    %1779 = vmatpush1.msra.mxu0 %v1731
    %1780 = vmatprep.subr.mxu0 0.0
    %1781 = vmatpush2.msra.mxu0 0.0
    %1782 = vmatprep.subr.mxu0 0.0
    %1783 = vmatpush2.msra.mxu0 0.0
    %1784 = vmatprep.subr.mxu0 0.0
    %1785 = vmatpush2.msra.mxu0 0.0
    %1786 = vmatprep.subr.mxu0 0.0
    %1787 = vmatpush2.msra.mxu0 0.0
    %1788 = vmatprep.subr.mxu0 0.0
    %1789 = vmatpush2.msra.mxu0 0.0
    %1790 = vmatprep.subr.mxu0 0.0
    %1791 = vmatpush2.msra.mxu0 0.0
    %1792 = vmatprep.subr.mxu0 0.0
    %1793 = vmatpush2.msra.mxu0 0.0
    %1794 = vmatprep.subr.mxu0 0.0
    %1795 = vmatpush2.msra.mxu0 0.0
    %1796 = vmatprep.subr.mxu0 0.0
    %1797 = vmatpush2.msra.mxu0 0.0
    %1798 = vmatprep.subr.mxu0 0.0
    %1799 = vmatpush2.msra.mxu0 0.0
    %1800 = vmatprep.subr.mxu0 0.0
    %1801 = vmatpush2.msra.mxu0 0.0
    %1802 = vmatprep.subr.mxu0 0.0
    %1803 = vmatpush2.msra.mxu0 0.0
    %1804 = vmatprep.subr.mxu0 0.0
    %1805 = vmatpush2.msra.mxu0 0.0
    %1806 = vmatprep.subr.mxu0 0.0
    %1807 = vmatpush2.msra.mxu0 0.0
    %1808 = vmatprep.subr.mxu0 0.0
    %1809 = vmatpush2.msra.mxu0 0.0
    %1810 = vmatprep.subr.mxu0 0.0
    %1811 = vmatpush2.msra.mxu0 0.0
    %1812 = vmatprep.mubr.f32.mxu0 0.0
    %1813 = vmatmul.mubr.f32.gmra.mxu0 %v1743
    %v1814 = vpop.f32.mrf.mxu0
    %v1815 = vadd.f32 %v1740, %v1814
    %v1816 = vpop.f32.mrf.mxu0
    %1817 = vmatprep.mubr.f32.mxu0 0.0
    %1818 = vmatmul.mubr.f32.gmra.mxu0 %v1746
    %v1819 = vpop.f32.mrf.mxu0
    %v1820 = vadd.f32 %v1740, %v1819
    %v1821 = vpop.f32.mrf.mxu0
    %1822 = vdwg.mxu0
    %v1823 = vmul.f32 %v1815, 0.5
    %v1824 = vmul.f32 %v1820, 0.5
    %v1825 = vmul.f32 %v1815, 0.70710677
    %v1826 = vmul.f32 %v1820, 0.70710677
    %v1827 = verf.f32.pop %v1825
    %v1828 = verf.f32.pop %v1826
    %v1829 = vadd.f32 %v1827, 1.0
    %v1830 = vadd.f32 %v1828, 1.0
    %v1831 = vmul.f32 %v1823, %v1829
    %v1832 = vmul.f32 %v1824, %v1830
    %v1833 = vld [vmem:[%s13] sm:$0xff]
    %v1834 = vld [vmem:[%s13 + $0x8] sm:$0xff]
    %v1835 = vld [vmem:[%s13 + $0x10] sm:$0xff]
    %v1836 = vld [vmem:[%s13 + $0x18] sm:$0xff]
    %v1837 = vld [vmem:[%s13 + $0x20] sm:$0xff]
    %v1838 = vld [vmem:[%s13 + $0x28] sm:$0xff]
    %v1839 = vld [vmem:[%s13 + $0x30] sm:$0xff]
    %v1840 = vld [vmem:[%s13 + $0x38] sm:$0xff]
    %v1841 = vld [vmem:[%s14] sm:$0x1]
    %v1843 = vlaneseq
    %v1844 = vshrl.u32 %v1843, 7
    %v1845 = vsub.s32 0, %v1844
    %v1846 = vrot.slane %v1841, %v1845
    %vm1848 = vcmask 523264
    %v1850 = vsel %vm1848, %v1831, 0
    %v1853 = vsel %vm1848, %v1832, 0
    %1855 = vmatprep.subr.mxu0 0.0
    %1856 = vmatpush1.msra.mxu0 0.0
    %1857 = vmatprep.subr.mxu0 0.0
    %1858 = vmatpush1.msra.mxu0 0.0
    %1859 = vmatprep.subr.mxu0 0.0
    %1860 = vmatpush1.msra.mxu0 0.0
    %1861 = vmatprep.subr.mxu0 0.0
    %1862 = vmatpush1.msra.mxu0 0.0
    %1863 = vmatprep.subr.mxu0 0.0
    %1864 = vmatpush1.msra.mxu0 0.0
    %1865 = vmatprep.subr.mxu0 0.0
    %1866 = vmatpush1.msra.mxu0 0.0
    %1867 = vmatprep.subr.mxu0 0.0
    %1868 = vmatpush1.msra.mxu0 0.0
    %1869 = vmatprep.subr.mxu0 0.0
    %1870 = vmatpush1.msra.mxu0 0.0
    %1871 = vmatprep.subr.mxu0 0.0
    %1872 = vmatpush1.msra.mxu0 %v1840
    %1873 = vmatprep.subr.mxu0 0.0
    %1874 = vmatpush1.msra.mxu0 %v1839
    %1875 = vmatprep.subr.mxu0 0.0
    %1876 = vmatpush1.msra.mxu0 %v1838
    %1877 = vmatprep.subr.mxu0 0.0
    %1878 = vmatpush1.msra.mxu0 %v1837
    %1879 = vmatprep.subr.mxu0 0.0
    %1880 = vmatpush1.msra.mxu0 %v1836
    %1881 = vmatprep.subr.mxu0 0.0
    %1882 = vmatpush1.msra.mxu0 %v1835
    %1883 = vmatprep.subr.mxu0 0.0
    %1884 = vmatpush1.msra.mxu0 %v1834
    %1885 = vmatprep.subr.mxu0 0.0
    %1886 = vmatpush1.msra.mxu0 %v1833
    %1887 = vmatprep.subr.mxu0 0.0
    %1888 = vmatpush2.msra.mxu0 0.0
    %1889 = vmatprep.subr.mxu0 0.0
    %1890 = vmatpush2.msra.mxu0 0.0
    %1891 = vmatprep.subr.mxu0 0.0
    %1892 = vmatpush2.msra.mxu0 0.0
    %1893 = vmatprep.subr.mxu0 0.0
    %1894 = vmatpush2.msra.mxu0 0.0
    %1895 = vmatprep.subr.mxu0 0.0
    %1896 = vmatpush2.msra.mxu0 0.0
    %1897 = vmatprep.subr.mxu0 0.0
    %1898 = vmatpush2.msra.mxu0 0.0
    %1899 = vmatprep.subr.mxu0 0.0
    %1900 = vmatpush2.msra.mxu0 0.0
    %1901 = vmatprep.subr.mxu0 0.0
    %1902 = vmatpush2.msra.mxu0 0.0
    %1903 = vmatprep.subr.mxu0 0.0
    %1904 = vmatpush2.msra.mxu0 0.0
    %1905 = vmatprep.subr.mxu0 0.0
    %1906 = vmatpush2.msra.mxu0 0.0
    %1907 = vmatprep.subr.mxu0 0.0
    %1908 = vmatpush2.msra.mxu0 0.0
    %1909 = vmatprep.subr.mxu0 0.0
    %1910 = vmatpush2.msra.mxu0 0.0
    %1911 = vmatprep.subr.mxu0 0.0
    %1912 = vmatpush2.msra.mxu0 0.0
    %1913 = vmatprep.subr.mxu0 0.0
    %1914 = vmatpush2.msra.mxu0 0.0
    %1915 = vmatprep.subr.mxu0 0.0
    %1916 = vmatpush2.msra.mxu0 0.0
    %1917 = vmatprep.subr.mxu0 0.0
    %1918 = vmatpush2.msra.mxu0 0.0
    %1919 = vmatprep.mubr.f32.mxu0 0.0
    %1920 = vmatmul.mubr.f32.gmra.mxu0 %v1850
    %v1921 = vpop.f32.mrf.mxu0
    %v1922 = vadd.f32 %v1846, %v1921
    %v1923 = vpop.f32.mrf.mxu0
    %1924 = vmatprep.mubr.f32.mxu0 0.0
    %1925 = vmatmul.mubr.f32.gmra.mxu0 %v1853
    %v1926 = vpop.f32.mrf.mxu0
    %v1927 = vadd.f32 %v1846, %v1926
    %v1928 = vpop.f32.mrf.mxu0
    %1929 = vdwg.mxu0
    %v1930 = vadd.f32 %v1922, %v1729
    %v1931 = vadd.f32 %v1927, %v1730
    %v1932 = vld [vmem:[%s15] sm:$0x1]
    %v1933 = vld [vmem:[%s16] sm:$0x1]
    %v1934 = vsel %vm78, %v1930, 0.0
    %1935 = vadd.xlane.f32.xlu0 %v1934
    %v1936 = vpop.xlane.xlu0 %1935
    %v1937 = vsel %vm78, %v1931, 0.0
    %1938 = vadd.xlane.f32.xlu0 %v1937
    %v1939 = vpop.xlane.xlu0 %1938
    %v1940 = vmul.f32 %v1936, %v85
    %v1941 = vmul.f32 %v1939, %v85
    %v1942 = vsub.f32 %v1930, %v1940
    %v1943 = vsub.f32 %v1931, %v1941
    %v1944 = vmul.f32 %v1942, %v1942
    %v1945 = vmul.f32 %v1943, %v1943
    %v1946 = vsel %vm78, %v1944, 0.0
    %1947 = vadd.xlane.f32.xlu0 %v1946
    %v1948 = vpop.xlane.xlu0 %1947
    %v1949 = vsel %vm78, %v1945, 0.0
    %1950 = vadd.xlane.f32.xlu0 %v1949
    %v1951 = vpop.xlane.xlu0 %1950
    %v1952 = vmul.f32 %v1948, %v85
    %v1953 = vmul.f32 %v1951, %v85
    %v1954 = vadd.f32 %v1952, 1e-12
    %v1955 = vadd.f32 %v1953, 1e-12
    %v1956 = vrsqrt.pop %v1954
    %v1957 = vrsqrt.pop %v1955
    %v1958 = vmul.f32 %v1942, %v1956
    %v1959 = vmul.f32 %v1943, %v1957
    %v1961 = vlaneseq
    %v1962 = vshrl.u32 %v1961, 7
    %v1963 = vsub.s32 0, %v1962
    %v1964 = vrot.slane %v1932, %v1963
    %v1966 = vmul.f32 %v1958, %v1964
    %v1967 = vmul.f32 %v1959, %v1964
    %v1969 = vlaneseq
    %v1970 = vshrl.u32 %v1969, 7
    %v1971 = vsub.s32 0, %v1970
    %v1972 = vrot.slane %v1933, %v1971
    %v1974 = vadd.f32 %v1966, %v1972
    %v1975 = vadd.f32 %v1967, %v1972
    %s1976 = scalar_lea.vmem %s5, 32
    %v1977 = vld [vmem:[%s1976] sm:$0xff]
    %v1978 = vld [vmem:[%s1976 + $0x8] sm:$0xff]
    %v1979 = vld [vmem:[%s1976 + $0x10] sm:$0xff]
    %v1980 = vld [vmem:[%s1976 + $0x18] sm:$0xff]
    %s1981 = scalar_lea.vmem %s6, 1
    %v1982 = vld [vmem:[%s1981] sm:$0x1]
    %v1984 = vlaneseq
    %v1985 = vshrl.u32 %v1984, 7
    %v1986 = vsub.s32 0, %v1985
    %v1987 = vrot.slane %v1982, %v1986
    %v1990 = vsel %vm78, %v1974, 0
    %v1993 = vsel %vm78, %v1975, 0
    %1995 = vmatprep.subr.mxu0 0.0
    %1996 = vmatpush1.msra.mxu0 0.0
    %1997 = vmatprep.subr.mxu0 0.0
    %1998 = vmatpush1.msra.mxu0 0.0
    %1999 = vmatprep.subr.mxu0 0.0
    %2000 = vmatpush1.msra.mxu0 0.0
    %2001 = vmatprep.subr.mxu0 0.0
    %2002 = vmatpush1.msra.mxu0 0.0
    %2003 = vmatprep.subr.mxu0 0.0
    %2004 = vmatpush1.msra.mxu0 0.0
    %2005 = vmatprep.subr.mxu0 0.0
    %2006 = vmatpush1.msra.mxu0 0.0
    %2007 = vmatprep.subr.mxu0 0.0
    %2008 = vmatpush1.msra.mxu0 0.0
    %2009 = vmatprep.subr.mxu0 0.0
    %2010 = vmatpush1.msra.mxu0 0.0
    %2011 = vmatprep.subr.mxu0 0.0
    %2012 = vmatpush1.msra.mxu0 0.0
    %2013 = vmatprep.subr.mxu0 0.0
    %2014 = vmatpush1.msra.mxu0 0.0
    %2015 = vmatprep.subr.mxu0 0.0
    %2016 = vmatpush1.msra.mxu0 0.0
    %2017 = vmatprep.subr.mxu0 0.0
    %2018 = vmatpush1.msra.mxu0 0.0
    %2019 = vmatprep.subr.mxu0 0.0
    %2020 = vmatpush1.msra.mxu0 %v1980
    %2021 = vmatprep.subr.mxu0 0.0
    %2022 = vmatpush1.msra.mxu0 %v1979
    %2023 = vmatprep.subr.mxu0 0.0
    %2024 = vmatpush1.msra.mxu0 %v1978
    %2025 = vmatprep.subr.mxu0 0.0
    %2026 = vmatpush1.msra.mxu0 %v1977
    %2027 = vmatprep.subr.mxu0 0.0
    %2028 = vmatpush2.msra.mxu0 0.0
    %2029 = vmatprep.subr.mxu0 0.0
    %2030 = vmatpush2.msra.mxu0 0.0
    %2031 = vmatprep.subr.mxu0 0.0
    %2032 = vmatpush2.msra.mxu0 0.0
    %2033 = vmatprep.subr.mxu0 0.0
    %2034 = vmatpush2.msra.mxu0 0.0
    %2035 = vmatprep.subr.mxu0 0.0
    %2036 = vmatpush2.msra.mxu0 0.0
    %2037 = vmatprep.subr.mxu0 0.0
    %2038 = vmatpush2.msra.mxu0 0.0
    %2039 = vmatprep.subr.mxu0 0.0
    %2040 = vmatpush2.msra.mxu0 0.0
    %2041 = vmatprep.subr.mxu0 0.0
    %2042 = vmatpush2.msra.mxu0 0.0
    %2043 = vmatprep.subr.mxu0 0.0
    %2044 = vmatpush2.msra.mxu0 0.0
    %2045 = vmatprep.subr.mxu0 0.0
    %2046 = vmatpush2.msra.mxu0 0.0
    %2047 = vmatprep.subr.mxu0 0.0
    %2048 = vmatpush2.msra.mxu0 0.0
    %2049 = vmatprep.subr.mxu0 0.0
    %2050 = vmatpush2.msra.mxu0 0.0
    %2051 = vmatprep.subr.mxu0 0.0
    %2052 = vmatpush2.msra.mxu0 0.0
    %2053 = vmatprep.subr.mxu0 0.0
    %2054 = vmatpush2.msra.mxu0 0.0
    %2055 = vmatprep.subr.mxu0 0.0
    %2056 = vmatpush2.msra.mxu0 0.0
    %2057 = vmatprep.subr.mxu0 0.0
    %2058 = vmatpush2.msra.mxu0 0.0
    %2059 = vmatprep.mubr.f32.mxu0 0.0
    %2060 = vmatmul.mubr.f32.gmra.mxu0 %v1990
    %v2061 = vpop.f32.mrf.mxu0
    %v2062 = vadd.f32 %v1987, %v2061
    %v2063 = vpop.f32.mrf.mxu0
    %2064 = vmatprep.mubr.f32.mxu0 0.0
    %2065 = vmatmul.mubr.f32.gmra.mxu0 %v1993
    %v2066 = vpop.f32.mrf.mxu0
    %v2067 = vadd.f32 %v1987, %v2066
    %v2068 = vpop.f32.mrf.mxu0
    %2069 = vdwg.mxu0
    %2071 = vrot.lane.b32.xlu0 %v2062, 96
    %v2072 = vpop.permute.xlu0 %2071
    %v2073 = vsel %vm217, %v2062, 0
    %v2075 = vsel %vm217, %v2072, 0
    %2077 = vmatprep.subr.mxu0 0.0
    %2078 = vmatpush1.xpose.msra.mxu0 0.0
    %2079 = vmatprep.subr.mxu0 0.0
    %2080 = vmatpush1.xpose.msra.mxu0 0.0
    %2081 = vmatprep.subr.mxu0 0.0
    %2082 = vmatpush1.xpose.msra.mxu0 0.0
    %2083 = vmatprep.subr.mxu0 0.0
    %2084 = vmatpush1.xpose.msra.mxu0 0.0
    %2085 = vmatprep.subr.mxu0 0.0
    %2086 = vmatpush1.xpose.msra.mxu0 0.0
    %2087 = vmatprep.subr.mxu0 0.0
    %2088 = vmatpush1.xpose.msra.mxu0 0.0
    %2089 = vmatprep.subr.mxu0 0.0
    %2090 = vmatpush1.xpose.msra.mxu0 0.0
    %2091 = vmatprep.subr.mxu0 0.0
    %2092 = vmatpush1.xpose.msra.mxu0 0.0
    %2093 = vmatprep.subr.mxu0 0.0
    %2094 = vmatpush1.xpose.msra.mxu0 0.0
    %2095 = vmatprep.subr.mxu0 0.0
    %2096 = vmatpush1.xpose.msra.mxu0 0.0
    %2097 = vmatprep.subr.mxu0 0.0
    %2098 = vmatpush1.xpose.msra.mxu0 0.0
    %2099 = vmatprep.subr.mxu0 0.0
    %2100 = vmatpush1.xpose.msra.mxu0 0.0
    %2101 = vmatprep.subr.mxu0 0.0
    %2102 = vmatpush1.xpose.msra.mxu0 0.0
    %2103 = vmatprep.subr.mxu0 0.0
    %2104 = vmatpush1.xpose.msra.mxu0 0.0
    %2105 = vmatprep.subr.mxu0 0.0
    %2106 = vmatpush1.xpose.msra.mxu0 0.0
    %2107 = vmatprep.subr.mxu0 0.0
    %2108 = vmatpush1.xpose.msra.mxu0 %v2075
    %2109 = vmatprep.subr.mxu0 0.0
    %2110 = vmatpush2.xpose.msra.mxu0 0.0
    %2111 = vmatprep.subr.mxu0 0.0
    %2112 = vmatpush2.xpose.msra.mxu0 0.0
    %2113 = vmatprep.subr.mxu0 0.0
    %2114 = vmatpush2.xpose.msra.mxu0 0.0
    %2115 = vmatprep.subr.mxu0 0.0
    %2116 = vmatpush2.xpose.msra.mxu0 0.0
    %2117 = vmatprep.subr.mxu0 0.0
    %2118 = vmatpush2.xpose.msra.mxu0 0.0
    %2119 = vmatprep.subr.mxu0 0.0
    %2120 = vmatpush2.xpose.msra.mxu0 0.0
    %2121 = vmatprep.subr.mxu0 0.0
    %2122 = vmatpush2.xpose.msra.mxu0 0.0
    %2123 = vmatprep.subr.mxu0 0.0
    %2124 = vmatpush2.xpose.msra.mxu0 0.0
    %2125 = vmatprep.subr.mxu0 0.0
    %2126 = vmatpush2.xpose.msra.mxu0 0.0
    %2127 = vmatprep.subr.mxu0 0.0
    %2128 = vmatpush2.xpose.msra.mxu0 0.0
    %2129 = vmatprep.subr.mxu0 0.0
    %2130 = vmatpush2.xpose.msra.mxu0 0.0
    %2131 = vmatprep.subr.mxu0 0.0
    %2132 = vmatpush2.xpose.msra.mxu0 0.0
    %2133 = vmatprep.subr.mxu0 0.0
    %2134 = vmatpush2.xpose.msra.mxu0 0.0
    %2135 = vmatprep.subr.mxu0 0.0
    %2136 = vmatpush2.xpose.msra.mxu0 0.0
    %2137 = vmatprep.subr.mxu0 0.0
    %2138 = vmatpush2.xpose.msra.mxu0 0.0
    %2139 = vmatprep.subr.mxu0 0.0
    %2140 = vmatpush2.xpose.msra.mxu0 0.0
    %2141 = vmatprep.mubr.f32.mxu0 0.0
    %2142 = vmatmul.mubr.f32.gmra.mxu0 %v2073
    %v2143 = vpop.f32.mrf.mxu0
    %v2144 = vadd.f32 0.0, %v2143
    %v2145 = vpop.f32.mrf.mxu0
    %2146 = vdwg.mxu0
    %2148 = vrot.lane.b32.xlu0 %v2067, 96
    %v2149 = vpop.permute.xlu0 %2148
    %v2150 = vsel %vm217, %v2067, 0
    %v2152 = vsel %vm217, %v2149, 0
    %2154 = vmatprep.subr.mxu0 0.0
    %2155 = vmatpush1.xpose.msra.mxu0 0.0
    %2156 = vmatprep.subr.mxu0 0.0
    %2157 = vmatpush1.xpose.msra.mxu0 0.0
    %2158 = vmatprep.subr.mxu0 0.0
    %2159 = vmatpush1.xpose.msra.mxu0 0.0
    %2160 = vmatprep.subr.mxu0 0.0
    %2161 = vmatpush1.xpose.msra.mxu0 0.0
    %2162 = vmatprep.subr.mxu0 0.0
    %2163 = vmatpush1.xpose.msra.mxu0 0.0
    %2164 = vmatprep.subr.mxu0 0.0
    %2165 = vmatpush1.xpose.msra.mxu0 0.0
    %2166 = vmatprep.subr.mxu0 0.0
    %2167 = vmatpush1.xpose.msra.mxu0 0.0
    %2168 = vmatprep.subr.mxu0 0.0
    %2169 = vmatpush1.xpose.msra.mxu0 0.0
    %2170 = vmatprep.subr.mxu0 0.0
    %2171 = vmatpush1.xpose.msra.mxu0 0.0
    %2172 = vmatprep.subr.mxu0 0.0
    %2173 = vmatpush1.xpose.msra.mxu0 0.0
    %2174 = vmatprep.subr.mxu0 0.0
    %2175 = vmatpush1.xpose.msra.mxu0 0.0
    %2176 = vmatprep.subr.mxu0 0.0
    %2177 = vmatpush1.xpose.msra.mxu0 0.0
    %2178 = vmatprep.subr.mxu0 0.0
    %2179 = vmatpush1.xpose.msra.mxu0 0.0
    %2180 = vmatprep.subr.mxu0 0.0
    %2181 = vmatpush1.xpose.msra.mxu0 0.0
    %2182 = vmatprep.subr.mxu0 0.0
    %2183 = vmatpush1.xpose.msra.mxu0 0.0
    %2184 = vmatprep.subr.mxu0 0.0
    %2185 = vmatpush1.xpose.msra.mxu0 %v2152
    %2186 = vmatprep.subr.mxu0 0.0
    %2187 = vmatpush2.xpose.msra.mxu0 0.0
    %2188 = vmatprep.subr.mxu0 0.0
    %2189 = vmatpush2.xpose.msra.mxu0 0.0
    %2190 = vmatprep.subr.mxu0 0.0
    %2191 = vmatpush2.xpose.msra.mxu0 0.0
    %2192 = vmatprep.subr.mxu0 0.0
    %2193 = vmatpush2.xpose.msra.mxu0 0.0
    %2194 = vmatprep.subr.mxu0 0.0
    %2195 = vmatpush2.xpose.msra.mxu0 0.0
    %2196 = vmatprep.subr.mxu0 0.0
    %2197 = vmatpush2.xpose.msra.mxu0 0.0
    %2198 = vmatprep.subr.mxu0 0.0
    %2199 = vmatpush2.xpose.msra.mxu0 0.0
    %2200 = vmatprep.subr.mxu0 0.0
    %2201 = vmatpush2.xpose.msra.mxu0 0.0
    %2202 = vmatprep.subr.mxu0 0.0
    %2203 = vmatpush2.xpose.msra.mxu0 0.0
    %2204 = vmatprep.subr.mxu0 0.0
    %2205 = vmatpush2.xpose.msra.mxu0 0.0
    %2206 = vmatprep.subr.mxu0 0.0
    %2207 = vmatpush2.xpose.msra.mxu0 0.0
    %2208 = vmatprep.subr.mxu0 0.0
    %2209 = vmatpush2.xpose.msra.mxu0 0.0
    %2210 = vmatprep.subr.mxu0 0.0
    %2211 = vmatpush2.xpose.msra.mxu0 0.0
    %2212 = vmatprep.subr.mxu0 0.0
    %2213 = vmatpush2.xpose.msra.mxu0 0.0
    %2214 = vmatprep.subr.mxu0 0.0
    %2215 = vmatpush2.xpose.msra.mxu0 0.0
    %2216 = vmatprep.subr.mxu0 0.0
    %2217 = vmatpush2.xpose.msra.mxu0 0.0
    %2218 = vmatprep.mubr.f32.mxu0 0.0
    %2219 = vmatmul.mubr.f32.gmra.mxu0 %v2150
    %v2220 = vpop.f32.mrf.mxu0
    %v2221 = vadd.f32 0.0, %v2220
    %v2222 = vpop.f32.mrf.mxu0
    %2223 = vdwg.mxu0
    %v2224 = vmul.f32 %v2144, 0.35355338
    %v2225 = vmul.f32 %v2221, 0.35355338
    %v2226 = vadd.f32 %v2224, %v376
    %v2227 = vadd.f32 %v2225, %v380
    %v2228 = vsel %vm217, %v2226, -inf
    %2229 = vmax.xlane.f32.xlu0 %v2228
    %v2230 = vpop.xlane.xlu0 %2229
    %v2231 = vsel %vm217, %v2227, -inf
    %2232 = vmax.xlane.f32.xlu0 %v2231
    %v2233 = vpop.xlane.xlu0 %2232
    %v2234 = vsub.f32 %v2226, %v2230
    %v2235 = vsub.f32 %v2227, %v2233
    %v2236 = vmul.f32 %v2234, 1.442695
    %v2237 = vpow.pop %v2236
    %v2238 = vmul.f32 %v2235, 1.442695
    %v2239 = vpow.pop %v2238
    %v2240 = vsel %vm217, %v2237, 0.0
    %2241 = vadd.xlane.f32.xlu0 %v2240
    %v2242 = vpop.xlane.xlu0 %2241
    %v2243 = vsel %vm217, %v2239, 0.0
    %2244 = vadd.xlane.f32.xlu0 %v2243
    %v2245 = vpop.xlane.xlu0 %2244
    %v2246 = vrcp.pop %v2242
    %v2247 = vrcp.pop %v2245
    %v2248 = vmul.f32 %v2237, %v2246
    %v2249 = vmul.f32 %v2239, %v2247
    %2250 = vrot.lane.b32.xlu0 %v2062, 64
    %v2251 = vpop.permute.xlu0 %2250
    %v2254 = vsel %vm217, %v2248, 0
    %2256 = vmatprep.subr.mxu0 0.0
    %2257 = vmatpush1.msra.mxu0 0.0
    %2258 = vmatprep.subr.mxu0 0.0
    %2259 = vmatpush1.msra.mxu0 0.0
    %2260 = vmatprep.subr.mxu0 0.0
    %2261 = vmatpush1.msra.mxu0 0.0
    %2262 = vmatprep.subr.mxu0 0.0
    %2263 = vmatpush1.msra.mxu0 0.0
    %2264 = vmatprep.subr.mxu0 0.0
    %2265 = vmatpush1.msra.mxu0 0.0
    %2266 = vmatprep.subr.mxu0 0.0
    %2267 = vmatpush1.msra.mxu0 0.0
    %2268 = vmatprep.subr.mxu0 0.0
    %2269 = vmatpush1.msra.mxu0 0.0
    %2270 = vmatprep.subr.mxu0 0.0
    %2271 = vmatpush1.msra.mxu0 0.0
    %2272 = vmatprep.subr.mxu0 0.0
    %2273 = vmatpush1.msra.mxu0 0.0
    %2274 = vmatprep.subr.mxu0 0.0
    %2275 = vmatpush1.msra.mxu0 0.0
    %2276 = vmatprep.subr.mxu0 0.0
    %2277 = vmatpush1.msra.mxu0 0.0
    %2278 = vmatprep.subr.mxu0 0.0
    %2279 = vmatpush1.msra.mxu0 0.0
    %2280 = vmatprep.subr.mxu0 0.0
    %2281 = vmatpush1.msra.mxu0 0.0
    %2282 = vmatprep.subr.mxu0 0.0
    %2283 = vmatpush1.msra.mxu0 0.0
    %2284 = vmatprep.subr.mxu0 0.0
    %2285 = vmatpush1.msra.mxu0 0.0
    %2286 = vmatprep.subr.mxu0 0.0
    %2287 = vmatpush1.msra.mxu0 %v2251
    %2288 = vmatprep.subr.mxu0 0.0
    %2289 = vmatpush2.msra.mxu0 0.0
    %2290 = vmatprep.subr.mxu0 0.0
    %2291 = vmatpush2.msra.mxu0 0.0
    %2292 = vmatprep.subr.mxu0 0.0
    %2293 = vmatpush2.msra.mxu0 0.0
    %2294 = vmatprep.subr.mxu0 0.0
    %2295 = vmatpush2.msra.mxu0 0.0
    %2296 = vmatprep.subr.mxu0 0.0
    %2297 = vmatpush2.msra.mxu0 0.0
    %2298 = vmatprep.subr.mxu0 0.0
    %2299 = vmatpush2.msra.mxu0 0.0
    %2300 = vmatprep.subr.mxu0 0.0
    %2301 = vmatpush2.msra.mxu0 0.0
    %2302 = vmatprep.subr.mxu0 0.0
    %2303 = vmatpush2.msra.mxu0 0.0
    %2304 = vmatprep.subr.mxu0 0.0
    %2305 = vmatpush2.msra.mxu0 0.0
    %2306 = vmatprep.subr.mxu0 0.0
    %2307 = vmatpush2.msra.mxu0 0.0
    %2308 = vmatprep.subr.mxu0 0.0
    %2309 = vmatpush2.msra.mxu0 0.0
    %2310 = vmatprep.subr.mxu0 0.0
    %2311 = vmatpush2.msra.mxu0 0.0
    %2312 = vmatprep.subr.mxu0 0.0
    %2313 = vmatpush2.msra.mxu0 0.0
    %2314 = vmatprep.subr.mxu0 0.0
    %2315 = vmatpush2.msra.mxu0 0.0
    %2316 = vmatprep.subr.mxu0 0.0
    %2317 = vmatpush2.msra.mxu0 0.0
    %2318 = vmatprep.subr.mxu0 0.0
    %2319 = vmatpush2.msra.mxu0 0.0
    %2320 = vmatprep.mubr.f32.mxu0 0.0
    %2321 = vmatmul.mubr.f32.gmra.mxu0 %v2254
    %v2322 = vpop.f32.mrf.mxu0
    %v2323 = vadd.f32 0.0, %v2322
    %v2324 = vpop.f32.mrf.mxu0
    %2325 = vdwg.mxu0
    %2326 = vrot.lane.b32.xlu0 %v2067, 64
    %v2327 = vpop.permute.xlu0 %2326
    %v2330 = vsel %vm217, %v2249, 0
    %2332 = vmatprep.subr.mxu0 0.0
    %2333 = vmatpush1.msra.mxu0 0.0
    %2334 = vmatprep.subr.mxu0 0.0
    %2335 = vmatpush1.msra.mxu0 0.0
    %2336 = vmatprep.subr.mxu0 0.0
    %2337 = vmatpush1.msra.mxu0 0.0
    %2338 = vmatprep.subr.mxu0 0.0
    %2339 = vmatpush1.msra.mxu0 0.0
    %2340 = vmatprep.subr.mxu0 0.0
    %2341 = vmatpush1.msra.mxu0 0.0
    %2342 = vmatprep.subr.mxu0 0.0
    %2343 = vmatpush1.msra.mxu0 0.0
    %2344 = vmatprep.subr.mxu0 0.0
    %2345 = vmatpush1.msra.mxu0 0.0
    %2346 = vmatprep.subr.mxu0 0.0
    %2347 = vmatpush1.msra.mxu0 0.0
    %2348 = vmatprep.subr.mxu0 0.0
    %2349 = vmatpush1.msra.mxu0 0.0
    %2350 = vmatprep.subr.mxu0 0.0
    %2351 = vmatpush1.msra.mxu0 0.0
    %2352 = vmatprep.subr.mxu0 0.0
    %2353 = vmatpush1.msra.mxu0 0.0
    %2354 = vmatprep.subr.mxu0 0.0
    %2355 = vmatpush1.msra.mxu0 0.0
    %2356 = vmatprep.subr.mxu0 0.0
    %2357 = vmatpush1.msra.mxu0 0.0
    %2358 = vmatprep.subr.mxu0 0.0
    %2359 = vmatpush1.msra.mxu0 0.0
    %2360 = vmatprep.subr.mxu0 0.0
    %2361 = vmatpush1.msra.mxu0 0.0
    %2362 = vmatprep.subr.mxu0 0.0
    %2363 = vmatpush1.msra.mxu0 %v2327
    %2364 = vmatprep.subr.mxu0 0.0
    %2365 = vmatpush2.msra.mxu0 0.0
    %2366 = vmatprep.subr.mxu0 0.0
    %2367 = vmatpush2.msra.mxu0 0.0
    %2368 = vmatprep.subr.mxu0 0.0
    %2369 = vmatpush2.msra.mxu0 0.0
    %2370 = vmatprep.subr.mxu0 0.0
    %2371 = vmatpush2.msra.mxu0 0.0
    %2372 = vmatprep.subr.mxu0 0.0
    %2373 = vmatpush2.msra.mxu0 0.0
    %2374 = vmatprep.subr.mxu0 0.0
    %2375 = vmatpush2.msra.mxu0 0.0
    %2376 = vmatprep.subr.mxu0 0.0
    %2377 = vmatpush2.msra.mxu0 0.0
    %2378 = vmatprep.subr.mxu0 0.0
    %2379 = vmatpush2.msra.mxu0 0.0
    %2380 = vmatprep.subr.mxu0 0.0
    %2381 = vmatpush2.msra.mxu0 0.0
    %2382 = vmatprep.subr.mxu0 0.0
    %2383 = vmatpush2.msra.mxu0 0.0
    %2384 = vmatprep.subr.mxu0 0.0
    %2385 = vmatpush2.msra.mxu0 0.0
    %2386 = vmatprep.subr.mxu0 0.0
    %2387 = vmatpush2.msra.mxu0 0.0
    %2388 = vmatprep.subr.mxu0 0.0
    %2389 = vmatpush2.msra.mxu0 0.0
    %2390 = vmatprep.subr.mxu0 0.0
    %2391 = vmatpush2.msra.mxu0 0.0
    %2392 = vmatprep.subr.mxu0 0.0
    %2393 = vmatpush2.msra.mxu0 0.0
    %2394 = vmatprep.subr.mxu0 0.0
    %2395 = vmatpush2.msra.mxu0 0.0
    %2396 = vmatprep.mubr.f32.mxu0 0.0
    %2397 = vmatmul.mubr.f32.gmra.mxu0 %v2330
    %v2398 = vpop.f32.mrf.mxu0
    %v2399 = vadd.f32 0.0, %v2398
    %v2400 = vpop.f32.mrf.mxu0
    %2401 = vdwg.mxu0
    %2402 = vrot.lane.b32.xlu0 %v2062, 120
    %v2403 = vpop.permute.xlu0 %2402
    %2404 = vrot.lane.b32.xlu0 %v2062, 88
    %v2405 = vpop.permute.xlu0 %2404
    %v2406 = vsel %vm217, %v2403, 0
    %v2408 = vsel %vm217, %v2405, 0
    %2410 = vmatprep.subr.mxu0 0.0
    %2411 = vmatpush1.xpose.msra.mxu0 0.0
    %2412 = vmatprep.subr.mxu0 0.0
    %2413 = vmatpush1.xpose.msra.mxu0 0.0
    %2414 = vmatprep.subr.mxu0 0.0
    %2415 = vmatpush1.xpose.msra.mxu0 0.0
    %2416 = vmatprep.subr.mxu0 0.0
    %2417 = vmatpush1.xpose.msra.mxu0 0.0
    %2418 = vmatprep.subr.mxu0 0.0
    %2419 = vmatpush1.xpose.msra.mxu0 0.0
    %2420 = vmatprep.subr.mxu0 0.0
    %2421 = vmatpush1.xpose.msra.mxu0 0.0
    %2422 = vmatprep.subr.mxu0 0.0
    %2423 = vmatpush1.xpose.msra.mxu0 0.0
    %2424 = vmatprep.subr.mxu0 0.0
    %2425 = vmatpush1.xpose.msra.mxu0 0.0
    %2426 = vmatprep.subr.mxu0 0.0
    %2427 = vmatpush1.xpose.msra.mxu0 0.0
    %2428 = vmatprep.subr.mxu0 0.0
    %2429 = vmatpush1.xpose.msra.mxu0 0.0
    %2430 = vmatprep.subr.mxu0 0.0
    %2431 = vmatpush1.xpose.msra.mxu0 0.0
    %2432 = vmatprep.subr.mxu0 0.0
    %2433 = vmatpush1.xpose.msra.mxu0 0.0
    %2434 = vmatprep.subr.mxu0 0.0
    %2435 = vmatpush1.xpose.msra.mxu0 0.0
    %2436 = vmatprep.subr.mxu0 0.0
    %2437 = vmatpush1.xpose.msra.mxu0 0.0
    %2438 = vmatprep.subr.mxu0 0.0
    %2439 = vmatpush1.xpose.msra.mxu0 0.0
    %2440 = vmatprep.subr.mxu0 0.0
    %2441 = vmatpush1.xpose.msra.mxu0 %v2408
    %2442 = vmatprep.subr.mxu0 0.0
    %2443 = vmatpush2.xpose.msra.mxu0 0.0
    %2444 = vmatprep.subr.mxu0 0.0
    %2445 = vmatpush2.xpose.msra.mxu0 0.0
    %2446 = vmatprep.subr.mxu0 0.0
    %2447 = vmatpush2.xpose.msra.mxu0 0.0
    %2448 = vmatprep.subr.mxu0 0.0
    %2449 = vmatpush2.xpose.msra.mxu0 0.0
    %2450 = vmatprep.subr.mxu0 0.0
    %2451 = vmatpush2.xpose.msra.mxu0 0.0
    %2452 = vmatprep.subr.mxu0 0.0
    %2453 = vmatpush2.xpose.msra.mxu0 0.0
    %2454 = vmatprep.subr.mxu0 0.0
    %2455 = vmatpush2.xpose.msra.mxu0 0.0
    %2456 = vmatprep.subr.mxu0 0.0
    %2457 = vmatpush2.xpose.msra.mxu0 0.0
    %2458 = vmatprep.subr.mxu0 0.0
    %2459 = vmatpush2.xpose.msra.mxu0 0.0
    %2460 = vmatprep.subr.mxu0 0.0
    %2461 = vmatpush2.xpose.msra.mxu0 0.0
    %2462 = vmatprep.subr.mxu0 0.0
    %2463 = vmatpush2.xpose.msra.mxu0 0.0
    %2464 = vmatprep.subr.mxu0 0.0
    %2465 = vmatpush2.xpose.msra.mxu0 0.0
    %2466 = vmatprep.subr.mxu0 0.0
    %2467 = vmatpush2.xpose.msra.mxu0 0.0
    %2468 = vmatprep.subr.mxu0 0.0
    %2469 = vmatpush2.xpose.msra.mxu0 0.0
    %2470 = vmatprep.subr.mxu0 0.0
    %2471 = vmatpush2.xpose.msra.mxu0 0.0
    %2472 = vmatprep.subr.mxu0 0.0
    %2473 = vmatpush2.xpose.msra.mxu0 0.0
    %2474 = vmatprep.mubr.f32.mxu0 0.0
    %2475 = vmatmul.mubr.f32.gmra.mxu0 %v2406
    %v2476 = vpop.f32.mrf.mxu0
    %v2477 = vadd.f32 0.0, %v2476
    %v2478 = vpop.f32.mrf.mxu0
    %2479 = vdwg.mxu0
    %2480 = vrot.lane.b32.xlu0 %v2067, 120
    %v2481 = vpop.permute.xlu0 %2480
    %2482 = vrot.lane.b32.xlu0 %v2067, 88
    %v2483 = vpop.permute.xlu0 %2482
    %v2484 = vsel %vm217, %v2481, 0
    %v2486 = vsel %vm217, %v2483, 0
    %2488 = vmatprep.subr.mxu0 0.0
    %2489 = vmatpush1.xpose.msra.mxu0 0.0
    %2490 = vmatprep.subr.mxu0 0.0
    %2491 = vmatpush1.xpose.msra.mxu0 0.0
    %2492 = vmatprep.subr.mxu0 0.0
    %2493 = vmatpush1.xpose.msra.mxu0 0.0
    %2494 = vmatprep.subr.mxu0 0.0
    %2495 = vmatpush1.xpose.msra.mxu0 0.0
    %2496 = vmatprep.subr.mxu0 0.0
    %2497 = vmatpush1.xpose.msra.mxu0 0.0
    %2498 = vmatprep.subr.mxu0 0.0
    %2499 = vmatpush1.xpose.msra.mxu0 0.0
    %2500 = vmatprep.subr.mxu0 0.0
    %2501 = vmatpush1.xpose.msra.mxu0 0.0
    %2502 = vmatprep.subr.mxu0 0.0
    %2503 = vmatpush1.xpose.msra.mxu0 0.0
    %2504 = vmatprep.subr.mxu0 0.0
    %2505 = vmatpush1.xpose.msra.mxu0 0.0
    %2506 = vmatprep.subr.mxu0 0.0
    %2507 = vmatpush1.xpose.msra.mxu0 0.0
    %2508 = vmatprep.subr.mxu0 0.0
    %2509 = vmatpush1.xpose.msra.mxu0 0.0
    %2510 = vmatprep.subr.mxu0 0.0
    %2511 = vmatpush1.xpose.msra.mxu0 0.0
    %2512 = vmatprep.subr.mxu0 0.0
    %2513 = vmatpush1.xpose.msra.mxu0 0.0
    %2514 = vmatprep.subr.mxu0 0.0
    %2515 = vmatpush1.xpose.msra.mxu0 0.0
    %2516 = vmatprep.subr.mxu0 0.0
    %2517 = vmatpush1.xpose.msra.mxu0 0.0
    %2518 = vmatprep.subr.mxu0 0.0
    %2519 = vmatpush1.xpose.msra.mxu0 %v2486
    %2520 = vmatprep.subr.mxu0 0.0
    %2521 = vmatpush2.xpose.msra.mxu0 0.0
    %2522 = vmatprep.subr.mxu0 0.0
    %2523 = vmatpush2.xpose.msra.mxu0 0.0
    %2524 = vmatprep.subr.mxu0 0.0
    %2525 = vmatpush2.xpose.msra.mxu0 0.0
    %2526 = vmatprep.subr.mxu0 0.0
    %2527 = vmatpush2.xpose.msra.mxu0 0.0
    %2528 = vmatprep.subr.mxu0 0.0
    %2529 = vmatpush2.xpose.msra.mxu0 0.0
    %2530 = vmatprep.subr.mxu0 0.0
    %2531 = vmatpush2.xpose.msra.mxu0 0.0
    %2532 = vmatprep.subr.mxu0 0.0
    %2533 = vmatpush2.xpose.msra.mxu0 0.0
    %2534 = vmatprep.subr.mxu0 0.0
    %2535 = vmatpush2.xpose.msra.mxu0 0.0
    %2536 = vmatprep.subr.mxu0 0.0
    %2537 = vmatpush2.xpose.msra.mxu0 0.0
    %2538 = vmatprep.subr.mxu0 0.0
    %2539 = vmatpush2.xpose.msra.mxu0 0.0
    %2540 = vmatprep.subr.mxu0 0.0
    %2541 = vmatpush2.xpose.msra.mxu0 0.0
    %2542 = vmatprep.subr.mxu0 0.0
    %2543 = vmatpush2.xpose.msra.mxu0 0.0
    %2544 = vmatprep.subr.mxu0 0.0
    %2545 = vmatpush2.xpose.msra.mxu0 0.0
    %2546 = vmatprep.subr.mxu0 0.0
    %2547 = vmatpush2.xpose.msra.mxu0 0.0
    %2548 = vmatprep.subr.mxu0 0.0
    %2549 = vmatpush2.xpose.msra.mxu0 0.0
    %2550 = vmatprep.subr.mxu0 0.0
    %2551 = vmatpush2.xpose.msra.mxu0 0.0
    %2552 = vmatprep.mubr.f32.mxu0 0.0
    %2553 = vmatmul.mubr.f32.gmra.mxu0 %v2484
    %v2554 = vpop.f32.mrf.mxu0
    %v2555 = vadd.f32 0.0, %v2554
    %v2556 = vpop.f32.mrf.mxu0
    %2557 = vdwg.mxu0
    %v2558 = vmul.f32 %v2477, 0.35355338
    %v2559 = vmul.f32 %v2555, 0.35355338
    %v2560 = vadd.f32 %v2558, %v376
    %v2561 = vadd.f32 %v2559, %v380
    %v2562 = vsel %vm217, %v2560, -inf
    %2563 = vmax.xlane.f32.xlu0 %v2562
    %v2564 = vpop.xlane.xlu0 %2563
    %v2565 = vsel %vm217, %v2561, -inf
    %2566 = vmax.xlane.f32.xlu0 %v2565
    %v2567 = vpop.xlane.xlu0 %2566
    %v2568 = vsub.f32 %v2560, %v2564
    %v2569 = vsub.f32 %v2561, %v2567
    %v2570 = vmul.f32 %v2568, 1.442695
    %v2571 = vpow.pop %v2570
    %v2572 = vmul.f32 %v2569, 1.442695
    %v2573 = vpow.pop %v2572
    %v2574 = vsel %vm217, %v2571, 0.0
    %2575 = vadd.xlane.f32.xlu0 %v2574
    %v2576 = vpop.xlane.xlu0 %2575
    %v2577 = vsel %vm217, %v2573, 0.0
    %2578 = vadd.xlane.f32.xlu0 %v2577
    %v2579 = vpop.xlane.xlu0 %2578
    %v2580 = vrcp.pop %v2576
    %v2581 = vrcp.pop %v2579
    %v2582 = vmul.f32 %v2571, %v2580
    %v2583 = vmul.f32 %v2573, %v2581
    %2584 = vrot.lane.b32.xlu0 %v2062, 56
    %v2585 = vpop.permute.xlu0 %2584
    %v2588 = vsel %vm217, %v2582, 0
    %2590 = vmatprep.subr.mxu0 0.0
    %2591 = vmatpush1.msra.mxu0 0.0
    %2592 = vmatprep.subr.mxu0 0.0
    %2593 = vmatpush1.msra.mxu0 0.0
    %2594 = vmatprep.subr.mxu0 0.0
    %2595 = vmatpush1.msra.mxu0 0.0
    %2596 = vmatprep.subr.mxu0 0.0
    %2597 = vmatpush1.msra.mxu0 0.0
    %2598 = vmatprep.subr.mxu0 0.0
    %2599 = vmatpush1.msra.mxu0 0.0
    %2600 = vmatprep.subr.mxu0 0.0
    %2601 = vmatpush1.msra.mxu0 0.0
    %2602 = vmatprep.subr.mxu0 0.0
    %2603 = vmatpush1.msra.mxu0 0.0
    %2604 = vmatprep.subr.mxu0 0.0
    %2605 = vmatpush1.msra.mxu0 0.0
    %2606 = vmatprep.subr.mxu0 0.0
    %2607 = vmatpush1.msra.mxu0 0.0
    %2608 = vmatprep.subr.mxu0 0.0
    %2609 = vmatpush1.msra.mxu0 0.0
    %2610 = vmatprep.subr.mxu0 0.0
    %2611 = vmatpush1.msra.mxu0 0.0
    %2612 = vmatprep.subr.mxu0 0.0
    %2613 = vmatpush1.msra.mxu0 0.0
    %2614 = vmatprep.subr.mxu0 0.0
    %2615 = vmatpush1.msra.mxu0 0.0
    %2616 = vmatprep.subr.mxu0 0.0
    %2617 = vmatpush1.msra.mxu0 0.0
    %2618 = vmatprep.subr.mxu0 0.0
    %2619 = vmatpush1.msra.mxu0 0.0
    %2620 = vmatprep.subr.mxu0 0.0
    %2621 = vmatpush1.msra.mxu0 %v2585
    %2622 = vmatprep.subr.mxu0 0.0
    %2623 = vmatpush2.msra.mxu0 0.0
    %2624 = vmatprep.subr.mxu0 0.0
    %2625 = vmatpush2.msra.mxu0 0.0
    %2626 = vmatprep.subr.mxu0 0.0
    %2627 = vmatpush2.msra.mxu0 0.0
    %2628 = vmatprep.subr.mxu0 0.0
    %2629 = vmatpush2.msra.mxu0 0.0
    %2630 = vmatprep.subr.mxu0 0.0
    %2631 = vmatpush2.msra.mxu0 0.0
    %2632 = vmatprep.subr.mxu0 0.0
    %2633 = vmatpush2.msra.mxu0 0.0
    %2634 = vmatprep.subr.mxu0 0.0
    %2635 = vmatpush2.msra.mxu0 0.0
    %2636 = vmatprep.subr.mxu0 0.0
    %2637 = vmatpush2.msra.mxu0 0.0
    %2638 = vmatprep.subr.mxu0 0.0
    %2639 = vmatpush2.msra.mxu0 0.0
    %2640 = vmatprep.subr.mxu0 0.0
    %2641 = vmatpush2.msra.mxu0 0.0
    %2642 = vmatprep.subr.mxu0 0.0
    %2643 = vmatpush2.msra.mxu0 0.0
    %2644 = vmatprep.subr.mxu0 0.0
    %2645 = vmatpush2.msra.mxu0 0.0
    %2646 = vmatprep.subr.mxu0 0.0
    %2647 = vmatpush2.msra.mxu0 0.0
    %2648 = vmatprep.subr.mxu0 0.0
    %2649 = vmatpush2.msra.mxu0 0.0
    %2650 = vmatprep.subr.mxu0 0.0
    %2651 = vmatpush2.msra.mxu0 0.0
    %2652 = vmatprep.subr.mxu0 0.0
    %2653 = vmatpush2.msra.mxu0 0.0
    %2654 = vmatprep.mubr.f32.mxu0 0.0
    %2655 = vmatmul.mubr.f32.gmra.mxu0 %v2588
    %v2656 = vpop.f32.mrf.mxu0
    %v2657 = vadd.f32 0.0, %v2656
    %v2658 = vpop.f32.mrf.mxu0
    %2659 = vdwg.mxu0
    %2660 = vrot.lane.b32.xlu0 %v2067, 56
    %v2661 = vpop.permute.xlu0 %2660
    %v2664 = vsel %vm217, %v2583, 0
    %2666 = vmatprep.subr.mxu0 0.0
    %2667 = vmatpush1.msra.mxu0 0.0
    %2668 = vmatprep.subr.mxu0 0.0
    %2669 = vmatpush1.msra.mxu0 0.0
    %2670 = vmatprep.subr.mxu0 0.0
    %2671 = vmatpush1.msra.mxu0 0.0
    %2672 = vmatprep.subr.mxu0 0.0
    %2673 = vmatpush1.msra.mxu0 0.0
    %2674 = vmatprep.subr.mxu0 0.0
    %2675 = vmatpush1.msra.mxu0 0.0
    %2676 = vmatprep.subr.mxu0 0.0
    %2677 = vmatpush1.msra.mxu0 0.0
    %2678 = vmatprep.subr.mxu0 0.0
    %2679 = vmatpush1.msra.mxu0 0.0
    %2680 = vmatprep.subr.mxu0 0.0
    %2681 = vmatpush1.msra.mxu0 0.0
    %2682 = vmatprep.subr.mxu0 0.0
    %2683 = vmatpush1.msra.mxu0 0.0
    %2684 = vmatprep.subr.mxu0 0.0
    %2685 = vmatpush1.msra.mxu0 0.0
    %2686 = vmatprep.subr.mxu0 0.0
    %2687 = vmatpush1.msra.mxu0 0.0
    %2688 = vmatprep.subr.mxu0 0.0
    %2689 = vmatpush1.msra.mxu0 0.0
    %2690 = vmatprep.subr.mxu0 0.0
    %2691 = vmatpush1.msra.mxu0 0.0
    %2692 = vmatprep.subr.mxu0 0.0
    %2693 = vmatpush1.msra.mxu0 0.0
    %2694 = vmatprep.subr.mxu0 0.0
    %2695 = vmatpush1.msra.mxu0 0.0
    %2696 = vmatprep.subr.mxu0 0.0
    %2697 = vmatpush1.msra.mxu0 %v2661
    %2698 = vmatprep.subr.mxu0 0.0
    %2699 = vmatpush2.msra.mxu0 0.0
    %2700 = vmatprep.subr.mxu0 0.0
    %2701 = vmatpush2.msra.mxu0 0.0
    %2702 = vmatprep.subr.mxu0 0.0
    %2703 = vmatpush2.msra.mxu0 0.0
    %2704 = vmatprep.subr.mxu0 0.0
    %2705 = vmatpush2.msra.mxu0 0.0
    %2706 = vmatprep.subr.mxu0 0.0
    %2707 = vmatpush2.msra.mxu0 0.0
    %2708 = vmatprep.subr.mxu0 0.0
    %2709 = vmatpush2.msra.mxu0 0.0
    %2710 = vmatprep.subr.mxu0 0.0
    %2711 = vmatpush2.msra.mxu0 0.0
    %2712 = vmatprep.subr.mxu0 0.0
    %2713 = vmatpush2.msra.mxu0 0.0
    %2714 = vmatprep.subr.mxu0 0.0
    %2715 = vmatpush2.msra.mxu0 0.0
    %2716 = vmatprep.subr.mxu0 0.0
    %2717 = vmatpush2.msra.mxu0 0.0
    %2718 = vmatprep.subr.mxu0 0.0
    %2719 = vmatpush2.msra.mxu0 0.0
    %2720 = vmatprep.subr.mxu0 0.0
    %2721 = vmatpush2.msra.mxu0 0.0
    %2722 = vmatprep.subr.mxu0 0.0
    %2723 = vmatpush2.msra.mxu0 0.0
    %2724 = vmatprep.subr.mxu0 0.0
    %2725 = vmatpush2.msra.mxu0 0.0
    %2726 = vmatprep.subr.mxu0 0.0
    %2727 = vmatpush2.msra.mxu0 0.0
    %2728 = vmatprep.subr.mxu0 0.0
    %2729 = vmatpush2.msra.mxu0 0.0
    %2730 = vmatprep.mubr.f32.mxu0 0.0
    %2731 = vmatmul.mubr.f32.gmra.mxu0 %v2664
    %v2732 = vpop.f32.mrf.mxu0
    %v2733 = vadd.f32 0.0, %v2732
    %v2734 = vpop.f32.mrf.mxu0
    %2735 = vdwg.mxu0
    %2736 = vrot.lane.b32.xlu0 %v2062, 112
    %v2737 = vpop.permute.xlu0 %2736
    %2738 = vrot.lane.b32.xlu0 %v2062, 80
    %v2739 = vpop.permute.xlu0 %2738
    %v2740 = vsel %vm217, %v2737, 0
    %v2742 = vsel %vm217, %v2739, 0
    %2744 = vmatprep.subr.mxu0 0.0
    %2745 = vmatpush1.xpose.msra.mxu0 0.0
    %2746 = vmatprep.subr.mxu0 0.0
    %2747 = vmatpush1.xpose.msra.mxu0 0.0
    %2748 = vmatprep.subr.mxu0 0.0
    %2749 = vmatpush1.xpose.msra.mxu0 0.0
    %2750 = vmatprep.subr.mxu0 0.0
    %2751 = vmatpush1.xpose.msra.mxu0 0.0
    %2752 = vmatprep.subr.mxu0 0.0
    %2753 = vmatpush1.xpose.msra.mxu0 0.0
    %2754 = vmatprep.subr.mxu0 0.0
    %2755 = vmatpush1.xpose.msra.mxu0 0.0
    %2756 = vmatprep.subr.mxu0 0.0
    %2757 = vmatpush1.xpose.msra.mxu0 0.0
    %2758 = vmatprep.subr.mxu0 0.0
    %2759 = vmatpush1.xpose.msra.mxu0 0.0
    %2760 = vmatprep.subr.mxu0 0.0
    %2761 = vmatpush1.xpose.msra.mxu0 0.0
    %2762 = vmatprep.subr.mxu0 0.0
    %2763 = vmatpush1.xpose.msra.mxu0 0.0
    %2764 = vmatprep.subr.mxu0 0.0
    %2765 = vmatpush1.xpose.msra.mxu0 0.0
    %2766 = vmatprep.subr.mxu0 0.0
    %2767 = vmatpush1.xpose.msra.mxu0 0.0
    %2768 = vmatprep.subr.mxu0 0.0
    %2769 = vmatpush1.xpose.msra.mxu0 0.0
    %2770 = vmatprep.subr.mxu0 0.0
    %2771 = vmatpush1.xpose.msra.mxu0 0.0
    %2772 = vmatprep.subr.mxu0 0.0
    %2773 = vmatpush1.xpose.msra.mxu0 0.0
    %2774 = vmatprep.subr.mxu0 0.0
    %2775 = vmatpush1.xpose.msra.mxu0 %v2742
    %2776 = vmatprep.subr.mxu0 0.0
    %2777 = vmatpush2.xpose.msra.mxu0 0.0
    %2778 = vmatprep.subr.mxu0 0.0
    %2779 = vmatpush2.xpose.msra.mxu0 0.0
    %2780 = vmatprep.subr.mxu0 0.0
    %2781 = vmatpush2.xpose.msra.mxu0 0.0
    %2782 = vmatprep.subr.mxu0 0.0
    %2783 = vmatpush2.xpose.msra.mxu0 0.0
    %2784 = vmatprep.subr.mxu0 0.0
    %2785 = vmatpush2.xpose.msra.mxu0 0.0
    %2786 = vmatprep.subr.mxu0 0.0
    %2787 = vmatpush2.xpose.msra.mxu0 0.0
    %2788 = vmatprep.subr.mxu0 0.0
    %2789 = vmatpush2.xpose.msra.mxu0 0.0
    %2790 = vmatprep.subr.mxu0 0.0
    %2791 = vmatpush2.xpose.msra.mxu0 0.0
    %2792 = vmatprep.subr.mxu0 0.0
    %2793 = vmatpush2.xpose.msra.mxu0 0.0
    %2794 = vmatprep.subr.mxu0 0.0
    %2795 = vmatpush2.xpose.msra.mxu0 0.0
    %2796 = vmatprep.subr.mxu0 0.0
    %2797 = vmatpush2.xpose.msra.mxu0 0.0
    %2798 = vmatprep.subr.mxu0 0.0
    %2799 = vmatpush2.xpose.msra.mxu0 0.0
    %2800 = vmatprep.subr.mxu0 0.0
    %2801 = vmatpush2.xpose.msra.mxu0 0.0
    %2802 = vmatprep.subr.mxu0 0.0
    %2803 = vmatpush2.xpose.msra.mxu0 0.0
    %2804 = vmatprep.subr.mxu0 0.0
    %2805 = vmatpush2.xpose.msra.mxu0 0.0
    %2806 = vmatprep.subr.mxu0 0.0
    %2807 = vmatpush2.xpose.msra.mxu0 0.0
    %2808 = vmatprep.mubr.f32.mxu0 0.0
    %2809 = vmatmul.mubr.f32.gmra.mxu0 %v2740
    %v2810 = vpop.f32.mrf.mxu0
    %v2811 = vadd.f32 0.0, %v2810
    %v2812 = vpop.f32.mrf.mxu0
    %2813 = vdwg.mxu0
    %2814 = vrot.lane.b32.xlu0 %v2067, 112
    %v2815 = vpop.permute.xlu0 %2814
    %2816 = vrot.lane.b32.xlu0 %v2067, 80
    %v2817 = vpop.permute.xlu0 %2816
    %v2818 = vsel %vm217, %v2815, 0
    %v2820 = vsel %vm217, %v2817, 0
    %2822 = vmatprep.subr.mxu0 0.0
    %2823 = vmatpush1.xpose.msra.mxu0 0.0
    %2824 = vmatprep.subr.mxu0 0.0
    %2825 = vmatpush1.xpose.msra.mxu0 0.0
    %2826 = vmatprep.subr.mxu0 0.0
    %2827 = vmatpush1.xpose.msra.mxu0 0.0
    %2828 = vmatprep.subr.mxu0 0.0
    %2829 = vmatpush1.xpose.msra.mxu0 0.0
    %2830 = vmatprep.subr.mxu0 0.0
    %2831 = vmatpush1.xpose.msra.mxu0 0.0
    %2832 = vmatprep.subr.mxu0 0.0
    %2833 = vmatpush1.xpose.msra.mxu0 0.0
    %2834 = vmatprep.subr.mxu0 0.0
    %2835 = vmatpush1.xpose.msra.mxu0 0.0
    %2836 = vmatprep.subr.mxu0 0.0
    %2837 = vmatpush1.xpose.msra.mxu0 0.0
    %2838 = vmatprep.subr.mxu0 0.0
    %2839 = vmatpush1.xpose.msra.mxu0 0.0
    %2840 = vmatprep.subr.mxu0 0.0
    %2841 = vmatpush1.xpose.msra.mxu0 0.0
    %2842 = vmatprep.subr.mxu0 0.0
    %2843 = vmatpush1.xpose.msra.mxu0 0.0
    %2844 = vmatprep.subr.mxu0 0.0
    %2845 = vmatpush1.xpose.msra.mxu0 0.0
    %2846 = vmatprep.subr.mxu0 0.0
    %2847 = vmatpush1.xpose.msra.mxu0 0.0
    %2848 = vmatprep.subr.mxu0 0.0
    %2849 = vmatpush1.xpose.msra.mxu0 0.0
    %2850 = vmatprep.subr.mxu0 0.0
    %2851 = vmatpush1.xpose.msra.mxu0 0.0
    %2852 = vmatprep.subr.mxu0 0.0
    %2853 = vmatpush1.xpose.msra.mxu0 %v2820
    %2854 = vmatprep.subr.mxu0 0.0
    %2855 = vmatpush2.xpose.msra.mxu0 0.0
    %2856 = vmatprep.subr.mxu0 0.0
    %2857 = vmatpush2.xpose.msra.mxu0 0.0
    %2858 = vmatprep.subr.mxu0 0.0
    %2859 = vmatpush2.xpose.msra.mxu0 0.0
    %2860 = vmatprep.subr.mxu0 0.0
    %2861 = vmatpush2.xpose.msra.mxu0 0.0
    %2862 = vmatprep.subr.mxu0 0.0
    %2863 = vmatpush2.xpose.msra.mxu0 0.0
    %2864 = vmatprep.subr.mxu0 0.0
    %2865 = vmatpush2.xpose.msra.mxu0 0.0
    %2866 = vmatprep.subr.mxu0 0.0
    %2867 = vmatpush2.xpose.msra.mxu0 0.0
    %2868 = vmatprep.subr.mxu0 0.0
    %2869 = vmatpush2.xpose.msra.mxu0 0.0
    %2870 = vmatprep.subr.mxu0 0.0
    %2871 = vmatpush2.xpose.msra.mxu0 0.0
    %2872 = vmatprep.subr.mxu0 0.0
    %2873 = vmatpush2.xpose.msra.mxu0 0.0
    %2874 = vmatprep.subr.mxu0 0.0
    %2875 = vmatpush2.xpose.msra.mxu0 0.0
    %2876 = vmatprep.subr.mxu0 0.0
    %2877 = vmatpush2.xpose.msra.mxu0 0.0
    %2878 = vmatprep.subr.mxu0 0.0
    %2879 = vmatpush2.xpose.msra.mxu0 0.0
    %2880 = vmatprep.subr.mxu0 0.0
    %2881 = vmatpush2.xpose.msra.mxu0 0.0
    %2882 = vmatprep.subr.mxu0 0.0
    %2883 = vmatpush2.xpose.msra.mxu0 0.0
    %2884 = vmatprep.subr.mxu0 0.0
    %2885 = vmatpush2.xpose.msra.mxu0 0.0
    %2886 = vmatprep.mubr.f32.mxu0 0.0
    %2887 = vmatmul.mubr.f32.gmra.mxu0 %v2818
    %v2888 = vpop.f32.mrf.mxu0
    %v2889 = vadd.f32 0.0, %v2888
    %v2890 = vpop.f32.mrf.mxu0
    %2891 = vdwg.mxu0
    %v2892 = vmul.f32 %v2811, 0.35355338
    %v2893 = vmul.f32 %v2889, 0.35355338
    %v2894 = vadd.f32 %v2892, %v376
    %v2895 = vadd.f32 %v2893, %v380
    %v2896 = vsel %vm217, %v2894, -inf
    %2897 = vmax.xlane.f32.xlu0 %v2896
    %v2898 = vpop.xlane.xlu0 %2897
    %v2899 = vsel %vm217, %v2895, -inf
    %2900 = vmax.xlane.f32.xlu0 %v2899
    %v2901 = vpop.xlane.xlu0 %2900
    %v2902 = vsub.f32 %v2894, %v2898
    %v2903 = vsub.f32 %v2895, %v2901
    %v2904 = vmul.f32 %v2902, 1.442695
    %v2905 = vpow.pop %v2904
    %v2906 = vmul.f32 %v2903, 1.442695
    %v2907 = vpow.pop %v2906
    %v2908 = vsel %vm217, %v2905, 0.0
    %2909 = vadd.xlane.f32.xlu0 %v2908
    %v2910 = vpop.xlane.xlu0 %2909
    %v2911 = vsel %vm217, %v2907, 0.0
    %2912 = vadd.xlane.f32.xlu0 %v2911
    %v2913 = vpop.xlane.xlu0 %2912
    %v2914 = vrcp.pop %v2910
    %v2915 = vrcp.pop %v2913
    %v2916 = vmul.f32 %v2905, %v2914
    %v2917 = vmul.f32 %v2907, %v2915
    %2918 = vrot.lane.b32.xlu0 %v2062, 48
    %v2919 = vpop.permute.xlu0 %2918
    %v2922 = vsel %vm217, %v2916, 0
    %2924 = vmatprep.subr.mxu0 0.0
    %2925 = vmatpush1.msra.mxu0 0.0
    %2926 = vmatprep.subr.mxu0 0.0
    %2927 = vmatpush1.msra.mxu0 0.0
    %2928 = vmatprep.subr.mxu0 0.0
    %2929 = vmatpush1.msra.mxu0 0.0
    %2930 = vmatprep.subr.mxu0 0.0
    %2931 = vmatpush1.msra.mxu0 0.0
    %2932 = vmatprep.subr.mxu0 0.0
    %2933 = vmatpush1.msra.mxu0 0.0
    %2934 = vmatprep.subr.mxu0 0.0
    %2935 = vmatpush1.msra.mxu0 0.0
    %2936 = vmatprep.subr.mxu0 0.0
    %2937 = vmatpush1.msra.mxu0 0.0
    %2938 = vmatprep.subr.mxu0 0.0
    %2939 = vmatpush1.msra.mxu0 0.0
    %2940 = vmatprep.subr.mxu0 0.0
    %2941 = vmatpush1.msra.mxu0 0.0
    %2942 = vmatprep.subr.mxu0 0.0
    %2943 = vmatpush1.msra.mxu0 0.0
    %2944 = vmatprep.subr.mxu0 0.0
    %2945 = vmatpush1.msra.mxu0 0.0
    %2946 = vmatprep.subr.mxu0 0.0
    %2947 = vmatpush1.msra.mxu0 0.0
    %2948 = vmatprep.subr.mxu0 0.0
    %2949 = vmatpush1.msra.mxu0 0.0
    %2950 = vmatprep.subr.mxu0 0.0
    %2951 = vmatpush1.msra.mxu0 0.0
    %2952 = vmatprep.subr.mxu0 0.0
    %2953 = vmatpush1.msra.mxu0 0.0
    %2954 = vmatprep.subr.mxu0 0.0
    %2955 = vmatpush1.msra.mxu0 %v2919
    %2956 = vmatprep.subr.mxu0 0.0
    %2957 = vmatpush2.msra.mxu0 0.0
    %2958 = vmatprep.subr.mxu0 0.0
    %2959 = vmatpush2.msra.mxu0 0.0
    %2960 = vmatprep.subr.mxu0 0.0
    %2961 = vmatpush2.msra.mxu0 0.0
    %2962 = vmatprep.subr.mxu0 0.0
    %2963 = vmatpush2.msra.mxu0 0.0
    %2964 = vmatprep.subr.mxu0 0.0
    %2965 = vmatpush2.msra.mxu0 0.0
    %2966 = vmatprep.subr.mxu0 0.0
    %2967 = vmatpush2.msra.mxu0 0.0
    %2968 = vmatprep.subr.mxu0 0.0
    %2969 = vmatpush2.msra.mxu0 0.0
    %2970 = vmatprep.subr.mxu0 0.0
    %2971 = vmatpush2.msra.mxu0 0.0
    %2972 = vmatprep.subr.mxu0 0.0
    %2973 = vmatpush2.msra.mxu0 0.0
    %2974 = vmatprep.subr.mxu0 0.0
    %2975 = vmatpush2.msra.mxu0 0.0
    %2976 = vmatprep.subr.mxu0 0.0
    %2977 = vmatpush2.msra.mxu0 0.0
    %2978 = vmatprep.subr.mxu0 0.0
    %2979 = vmatpush2.msra.mxu0 0.0
    %2980 = vmatprep.subr.mxu0 0.0
    %2981 = vmatpush2.msra.mxu0 0.0
    %2982 = vmatprep.subr.mxu0 0.0
    %2983 = vmatpush2.msra.mxu0 0.0
    %2984 = vmatprep.subr.mxu0 0.0
    %2985 = vmatpush2.msra.mxu0 0.0
    %2986 = vmatprep.subr.mxu0 0.0
    %2987 = vmatpush2.msra.mxu0 0.0
    %2988 = vmatprep.mubr.f32.mxu0 0.0
    %2989 = vmatmul.mubr.f32.gmra.mxu0 %v2922
    %v2990 = vpop.f32.mrf.mxu0
    %v2991 = vadd.f32 0.0, %v2990
    %v2992 = vpop.f32.mrf.mxu0
    %2993 = vdwg.mxu0
    %2994 = vrot.lane.b32.xlu0 %v2067, 48
    %v2995 = vpop.permute.xlu0 %2994
    %v2998 = vsel %vm217, %v2917, 0
    %3000 = vmatprep.subr.mxu0 0.0
    %3001 = vmatpush1.msra.mxu0 0.0
    %3002 = vmatprep.subr.mxu0 0.0
    %3003 = vmatpush1.msra.mxu0 0.0
    %3004 = vmatprep.subr.mxu0 0.0
    %3005 = vmatpush1.msra.mxu0 0.0
    %3006 = vmatprep.subr.mxu0 0.0
    %3007 = vmatpush1.msra.mxu0 0.0
    %3008 = vmatprep.subr.mxu0 0.0
    %3009 = vmatpush1.msra.mxu0 0.0
    %3010 = vmatprep.subr.mxu0 0.0
    %3011 = vmatpush1.msra.mxu0 0.0
    %3012 = vmatprep.subr.mxu0 0.0
    %3013 = vmatpush1.msra.mxu0 0.0
    %3014 = vmatprep.subr.mxu0 0.0
    %3015 = vmatpush1.msra.mxu0 0.0
    %3016 = vmatprep.subr.mxu0 0.0
    %3017 = vmatpush1.msra.mxu0 0.0
    %3018 = vmatprep.subr.mxu0 0.0
    %3019 = vmatpush1.msra.mxu0 0.0
    %3020 = vmatprep.subr.mxu0 0.0
    %3021 = vmatpush1.msra.mxu0 0.0
    %3022 = vmatprep.subr.mxu0 0.0
    %3023 = vmatpush1.msra.mxu0 0.0
    %3024 = vmatprep.subr.mxu0 0.0
    %3025 = vmatpush1.msra.mxu0 0.0
    %3026 = vmatprep.subr.mxu0 0.0
    %3027 = vmatpush1.msra.mxu0 0.0
    %3028 = vmatprep.subr.mxu0 0.0
    %3029 = vmatpush1.msra.mxu0 0.0
    %3030 = vmatprep.subr.mxu0 0.0
    %3031 = vmatpush1.msra.mxu0 %v2995
    %3032 = vmatprep.subr.mxu0 0.0
    %3033 = vmatpush2.msra.mxu0 0.0
    %3034 = vmatprep.subr.mxu0 0.0
    %3035 = vmatpush2.msra.mxu0 0.0
    %3036 = vmatprep.subr.mxu0 0.0
    %3037 = vmatpush2.msra.mxu0 0.0
    %3038 = vmatprep.subr.mxu0 0.0
    %3039 = vmatpush2.msra.mxu0 0.0
    %3040 = vmatprep.subr.mxu0 0.0
    %3041 = vmatpush2.msra.mxu0 0.0
    %3042 = vmatprep.subr.mxu0 0.0
    %3043 = vmatpush2.msra.mxu0 0.0
    %3044 = vmatprep.subr.mxu0 0.0
    %3045 = vmatpush2.msra.mxu0 0.0
    %3046 = vmatprep.subr.mxu0 0.0
    %3047 = vmatpush2.msra.mxu0 0.0
    %3048 = vmatprep.subr.mxu0 0.0
    %3049 = vmatpush2.msra.mxu0 0.0
    %3050 = vmatprep.subr.mxu0 0.0
    %3051 = vmatpush2.msra.mxu0 0.0
    %3052 = vmatprep.subr.mxu0 0.0
    %3053 = vmatpush2.msra.mxu0 0.0
    %3054 = vmatprep.subr.mxu0 0.0
    %3055 = vmatpush2.msra.mxu0 0.0
    %3056 = vmatprep.subr.mxu0 0.0
    %3057 = vmatpush2.msra.mxu0 0.0
    %3058 = vmatprep.subr.mxu0 0.0
    %3059 = vmatpush2.msra.mxu0 0.0
    %3060 = vmatprep.subr.mxu0 0.0
    %3061 = vmatpush2.msra.mxu0 0.0
    %3062 = vmatprep.subr.mxu0 0.0
    %3063 = vmatpush2.msra.mxu0 0.0
    %3064 = vmatprep.mubr.f32.mxu0 0.0
    %3065 = vmatmul.mubr.f32.gmra.mxu0 %v2998
    %v3066 = vpop.f32.mrf.mxu0
    %v3067 = vadd.f32 0.0, %v3066
    %v3068 = vpop.f32.mrf.mxu0
    %3069 = vdwg.mxu0
    %3070 = vrot.lane.b32.xlu0 %v2062, 104
    %v3071 = vpop.permute.xlu0 %3070
    %3072 = vrot.lane.b32.xlu0 %v2062, 72
    %v3073 = vpop.permute.xlu0 %3072
    %v3074 = vsel %vm217, %v3071, 0
    %v3076 = vsel %vm217, %v3073, 0
    %3078 = vmatprep.subr.mxu0 0.0
    %3079 = vmatpush1.xpose.msra.mxu0 0.0
    %3080 = vmatprep.subr.mxu0 0.0
    %3081 = vmatpush1.xpose.msra.mxu0 0.0
    %3082 = vmatprep.subr.mxu0 0.0
    %3083 = vmatpush1.xpose.msra.mxu0 0.0
    %3084 = vmatprep.subr.mxu0 0.0
    %3085 = vmatpush1.xpose.msra.mxu0 0.0
    %3086 = vmatprep.subr.mxu0 0.0
    %3087 = vmatpush1.xpose.msra.mxu0 0.0
    %3088 = vmatprep.subr.mxu0 0.0
    %3089 = vmatpush1.xpose.msra.mxu0 0.0
    %3090 = vmatprep.subr.mxu0 0.0
    %3091 = vmatpush1.xpose.msra.mxu0 0.0
    %3092 = vmatprep.subr.mxu0 0.0
    %3093 = vmatpush1.xpose.msra.mxu0 0.0
    %3094 = vmatprep.subr.mxu0 0.0
    %3095 = vmatpush1.xpose.msra.mxu0 0.0
    %3096 = vmatprep.subr.mxu0 0.0
    %3097 = vmatpush1.xpose.msra.mxu0 0.0
    %3098 = vmatprep.subr.mxu0 0.0
    %3099 = vmatpush1.xpose.msra.mxu0 0.0
    %3100 = vmatprep.subr.mxu0 0.0
    %3101 = vmatpush1.xpose.msra.mxu0 0.0
    %3102 = vmatprep.subr.mxu0 0.0
    %3103 = vmatpush1.xpose.msra.mxu0 0.0
    %3104 = vmatprep.subr.mxu0 0.0
    %3105 = vmatpush1.xpose.msra.mxu0 0.0
    %3106 = vmatprep.subr.mxu0 0.0
    %3107 = vmatpush1.xpose.msra.mxu0 0.0
    %3108 = vmatprep.subr.mxu0 0.0
    %3109 = vmatpush1.xpose.msra.mxu0 %v3076
    %3110 = vmatprep.subr.mxu0 0.0
    %3111 = vmatpush2.xpose.msra.mxu0 0.0
    %3112 = vmatprep.subr.mxu0 0.0
    %3113 = vmatpush2.xpose.msra.mxu0 0.0
    %3114 = vmatprep.subr.mxu0 0.0
    %3115 = vmatpush2.xpose.msra.mxu0 0.0
    %3116 = vmatprep.subr.mxu0 0.0
    %3117 = vmatpush2.xpose.msra.mxu0 0.0
    %3118 = vmatprep.subr.mxu0 0.0
    %3119 = vmatpush2.xpose.msra.mxu0 0.0
    %3120 = vmatprep.subr.mxu0 0.0
    %3121 = vmatpush2.xpose.msra.mxu0 0.0
    %3122 = vmatprep.subr.mxu0 0.0
    %3123 = vmatpush2.xpose.msra.mxu0 0.0
    %3124 = vmatprep.subr.mxu0 0.0
    %3125 = vmatpush2.xpose.msra.mxu0 0.0
    %3126 = vmatprep.subr.mxu0 0.0
    %3127 = vmatpush2.xpose.msra.mxu0 0.0
    %3128 = vmatprep.subr.mxu0 0.0
    %3129 = vmatpush2.xpose.msra.mxu0 0.0
    %3130 = vmatprep.subr.mxu0 0.0
    %3131 = vmatpush2.xpose.msra.mxu0 0.0
    %3132 = vmatprep.subr.mxu0 0.0
    %3133 = vmatpush2.xpose.msra.mxu0 0.0
    %3134 = vmatprep.subr.mxu0 0.0
    %3135 = vmatpush2.xpose.msra.mxu0 0.0
    %3136 = vmatprep.subr.mxu0 0.0
    %3137 = vmatpush2.xpose.msra.mxu0 0.0
    %3138 = vmatprep.subr.mxu0 0.0
    %3139 = vmatpush2.xpose.msra.mxu0 0.0
    %3140 = vmatprep.subr.mxu0 0.0
    %3141 = vmatpush2.xpose.msra.mxu0 0.0
    %3142 = vmatprep.mubr.f32.mxu0 0.0
    %3143 = vmatmul.mubr.f32.gmra.mxu0 %v3074
    %v3144 = vpop.f32.mrf.mxu0
    %v3145 = vadd.f32 0.0, %v3144
    %v3146 = vpop.f32.mrf.mxu0
    %3147 = vdwg.mxu0
    %3148 = vrot.lane.b32.xlu0 %v2067, 104
    %v3149 = vpop.permute.xlu0 %3148
    %3150 = vrot.lane.b32.xlu0 %v2067, 72
    %v3151 = vpop.permute.xlu0 %3150
    %v3152 = vsel %vm217, %v3149, 0
    %v3154 = vsel %vm217, %v3151, 0
    %3156 = vmatprep.subr.mxu0 0.0
    %3157 = vmatpush1.xpose.msra.mxu0 0.0
    %3158 = vmatprep.subr.mxu0 0.0
    %3159 = vmatpush1.xpose.msra.mxu0 0.0
    %3160 = vmatprep.subr.mxu0 0.0
    %3161 = vmatpush1.xpose.msra.mxu0 0.0
    %3162 = vmatprep.subr.mxu0 0.0
    %3163 = vmatpush1.xpose.msra.mxu0 0.0
    %3164 = vmatprep.subr.mxu0 0.0
    %3165 = vmatpush1.xpose.msra.mxu0 0.0
    %3166 = vmatprep.subr.mxu0 0.0
    %3167 = vmatpush1.xpose.msra.mxu0 0.0
    %3168 = vmatprep.subr.mxu0 0.0
    %3169 = vmatpush1.xpose.msra.mxu0 0.0
    %3170 = vmatprep.subr.mxu0 0.0
    %3171 = vmatpush1.xpose.msra.mxu0 0.0
    %3172 = vmatprep.subr.mxu0 0.0
    %3173 = vmatpush1.xpose.msra.mxu0 0.0
    %3174 = vmatprep.subr.mxu0 0.0
    %3175 = vmatpush1.xpose.msra.mxu0 0.0
    %3176 = vmatprep.subr.mxu0 0.0
    %3177 = vmatpush1.xpose.msra.mxu0 0.0
    %3178 = vmatprep.subr.mxu0 0.0
    %3179 = vmatpush1.xpose.msra.mxu0 0.0
    %3180 = vmatprep.subr.mxu0 0.0
    %3181 = vmatpush1.xpose.msra.mxu0 0.0
    %3182 = vmatprep.subr.mxu0 0.0
    %3183 = vmatpush1.xpose.msra.mxu0 0.0
    %3184 = vmatprep.subr.mxu0 0.0
    %3185 = vmatpush1.xpose.msra.mxu0 0.0
    %3186 = vmatprep.subr.mxu0 0.0
    %3187 = vmatpush1.xpose.msra.mxu0 %v3154
    %3188 = vmatprep.subr.mxu0 0.0
    %3189 = vmatpush2.xpose.msra.mxu0 0.0
    %3190 = vmatprep.subr.mxu0 0.0
    %3191 = vmatpush2.xpose.msra.mxu0 0.0
    %3192 = vmatprep.subr.mxu0 0.0
    %3193 = vmatpush2.xpose.msra.mxu0 0.0
    %3194 = vmatprep.subr.mxu0 0.0
    %3195 = vmatpush2.xpose.msra.mxu0 0.0
    %3196 = vmatprep.subr.mxu0 0.0
    %3197 = vmatpush2.xpose.msra.mxu0 0.0
    %3198 = vmatprep.subr.mxu0 0.0
    %3199 = vmatpush2.xpose.msra.mxu0 0.0
    %3200 = vmatprep.subr.mxu0 0.0
    %3201 = vmatpush2.xpose.msra.mxu0 0.0
    %3202 = vmatprep.subr.mxu0 0.0
    %3203 = vmatpush2.xpose.msra.mxu0 0.0
    %3204 = vmatprep.subr.mxu0 0.0
    %3205 = vmatpush2.xpose.msra.mxu0 0.0
    %3206 = vmatprep.subr.mxu0 0.0
    %3207 = vmatpush2.xpose.msra.mxu0 0.0
    %3208 = vmatprep.subr.mxu0 0.0
    %3209 = vmatpush2.xpose.msra.mxu0 0.0
    %3210 = vmatprep.subr.mxu0 0.0
    %3211 = vmatpush2.xpose.msra.mxu0 0.0
    %3212 = vmatprep.subr.mxu0 0.0
    %3213 = vmatpush2.xpose.msra.mxu0 0.0
    %3214 = vmatprep.subr.mxu0 0.0
    %3215 = vmatpush2.xpose.msra.mxu0 0.0
    %3216 = vmatprep.subr.mxu0 0.0
    %3217 = vmatpush2.xpose.msra.mxu0 0.0
    %3218 = vmatprep.subr.mxu0 0.0
    %3219 = vmatpush2.xpose.msra.mxu0 0.0
    %3220 = vmatprep.mubr.f32.mxu0 0.0
    %3221 = vmatmul.mubr.f32.gmra.mxu0 %v3152
    %v3222 = vpop.f32.mrf.mxu0
    %v3223 = vadd.f32 0.0, %v3222
    %v3224 = vpop.f32.mrf.mxu0
    %3225 = vdwg.mxu0
    %v3226 = vmul.f32 %v3145, 0.35355338
    %v3227 = vmul.f32 %v3223, 0.35355338
    %v3228 = vadd.f32 %v3226, %v376
    %v3229 = vadd.f32 %v3227, %v380
    %v3230 = vsel %vm217, %v3228, -inf
    %3231 = vmax.xlane.f32.xlu0 %v3230
    %v3232 = vpop.xlane.xlu0 %3231
    %v3233 = vsel %vm217, %v3229, -inf
    %3234 = vmax.xlane.f32.xlu0 %v3233
    %v3235 = vpop.xlane.xlu0 %3234
    %v3236 = vsub.f32 %v3228, %v3232
    %v3237 = vsub.f32 %v3229, %v3235
    %v3238 = vmul.f32 %v3236, 1.442695
    %v3239 = vpow.pop %v3238
    %v3240 = vmul.f32 %v3237, 1.442695
    %v3241 = vpow.pop %v3240
    %v3242 = vsel %vm217, %v3239, 0.0
    %3243 = vadd.xlane.f32.xlu0 %v3242
    %v3244 = vpop.xlane.xlu0 %3243
    %v3245 = vsel %vm217, %v3241, 0.0
    %3246 = vadd.xlane.f32.xlu0 %v3245
    %v3247 = vpop.xlane.xlu0 %3246
    %v3248 = vrcp.pop %v3244
    %v3249 = vrcp.pop %v3247
    %v3250 = vmul.f32 %v3239, %v3248
    %v3251 = vmul.f32 %v3241, %v3249
    %3252 = vrot.lane.b32.xlu0 %v2062, 40
    %v3253 = vpop.permute.xlu0 %3252
    %v3256 = vsel %vm217, %v3250, 0
    %3258 = vmatprep.subr.mxu0 0.0
    %3259 = vmatpush1.msra.mxu0 0.0
    %3260 = vmatprep.subr.mxu0 0.0
    %3261 = vmatpush1.msra.mxu0 0.0
    %3262 = vmatprep.subr.mxu0 0.0
    %3263 = vmatpush1.msra.mxu0 0.0
    %3264 = vmatprep.subr.mxu0 0.0
    %3265 = vmatpush1.msra.mxu0 0.0
    %3266 = vmatprep.subr.mxu0 0.0
    %3267 = vmatpush1.msra.mxu0 0.0
    %3268 = vmatprep.subr.mxu0 0.0
    %3269 = vmatpush1.msra.mxu0 0.0
    %3270 = vmatprep.subr.mxu0 0.0
    %3271 = vmatpush1.msra.mxu0 0.0
    %3272 = vmatprep.subr.mxu0 0.0
    %3273 = vmatpush1.msra.mxu0 0.0
    %3274 = vmatprep.subr.mxu0 0.0
    %3275 = vmatpush1.msra.mxu0 0.0
    %3276 = vmatprep.subr.mxu0 0.0
    %3277 = vmatpush1.msra.mxu0 0.0
    %3278 = vmatprep.subr.mxu0 0.0
    %3279 = vmatpush1.msra.mxu0 0.0
    %3280 = vmatprep.subr.mxu0 0.0
    %3281 = vmatpush1.msra.mxu0 0.0
    %3282 = vmatprep.subr.mxu0 0.0
    %3283 = vmatpush1.msra.mxu0 0.0
    %3284 = vmatprep.subr.mxu0 0.0
    %3285 = vmatpush1.msra.mxu0 0.0
    %3286 = vmatprep.subr.mxu0 0.0
    %3287 = vmatpush1.msra.mxu0 0.0
    %3288 = vmatprep.subr.mxu0 0.0
    %3289 = vmatpush1.msra.mxu0 %v3253
    %3290 = vmatprep.subr.mxu0 0.0
    %3291 = vmatpush2.msra.mxu0 0.0
    %3292 = vmatprep.subr.mxu0 0.0
    %3293 = vmatpush2.msra.mxu0 0.0
    %3294 = vmatprep.subr.mxu0 0.0
    %3295 = vmatpush2.msra.mxu0 0.0
    %3296 = vmatprep.subr.mxu0 0.0
    %3297 = vmatpush2.msra.mxu0 0.0
    %3298 = vmatprep.subr.mxu0 0.0
    %3299 = vmatpush2.msra.mxu0 0.0
    %3300 = vmatprep.subr.mxu0 0.0
    %3301 = vmatpush2.msra.mxu0 0.0
    %3302 = vmatprep.subr.mxu0 0.0
    %3303 = vmatpush2.msra.mxu0 0.0
    %3304 = vmatprep.subr.mxu0 0.0
    %3305 = vmatpush2.msra.mxu0 0.0
    %3306 = vmatprep.subr.mxu0 0.0
    %3307 = vmatpush2.msra.mxu0 0.0
    %3308 = vmatprep.subr.mxu0 0.0
    %3309 = vmatpush2.msra.mxu0 0.0
    %3310 = vmatprep.subr.mxu0 0.0
    %3311 = vmatpush2.msra.mxu0 0.0
    %3312 = vmatprep.subr.mxu0 0.0
    %3313 = vmatpush2.msra.mxu0 0.0
    %3314 = vmatprep.subr.mxu0 0.0
    %3315 = vmatpush2.msra.mxu0 0.0
    %3316 = vmatprep.subr.mxu0 0.0
    %3317 = vmatpush2.msra.mxu0 0.0
    %3318 = vmatprep.subr.mxu0 0.0
    %3319 = vmatpush2.msra.mxu0 0.0
    %3320 = vmatprep.subr.mxu0 0.0
    %3321 = vmatpush2.msra.mxu0 0.0
    %3322 = vmatprep.mubr.f32.mxu0 0.0
    %3323 = vmatmul.mubr.f32.gmra.mxu0 %v3256
    %v3324 = vpop.f32.mrf.mxu0
    %v3325 = vadd.f32 0.0, %v3324
    %v3326 = vpop.f32.mrf.mxu0
    %3327 = vdwg.mxu0
    %3328 = vrot.lane.b32.xlu0 %v2067, 40
    %v3329 = vpop.permute.xlu0 %3328
    %v3332 = vsel %vm217, %v3251, 0
    %3334 = vmatprep.subr.mxu0 0.0
    %3335 = vmatpush1.msra.mxu0 0.0
    %3336 = vmatprep.subr.mxu0 0.0
    %3337 = vmatpush1.msra.mxu0 0.0
    %3338 = vmatprep.subr.mxu0 0.0
    %3339 = vmatpush1.msra.mxu0 0.0
    %3340 = vmatprep.subr.mxu0 0.0
    %3341 = vmatpush1.msra.mxu0 0.0
    %3342 = vmatprep.subr.mxu0 0.0
    %3343 = vmatpush1.msra.mxu0 0.0
    %3344 = vmatprep.subr.mxu0 0.0
    %3345 = vmatpush1.msra.mxu0 0.0
    %3346 = vmatprep.subr.mxu0 0.0
    %3347 = vmatpush1.msra.mxu0 0.0
    %3348 = vmatprep.subr.mxu0 0.0
    %3349 = vmatpush1.msra.mxu0 0.0
    %3350 = vmatprep.subr.mxu0 0.0
    %3351 = vmatpush1.msra.mxu0 0.0
    %3352 = vmatprep.subr.mxu0 0.0
    %3353 = vmatpush1.msra.mxu0 0.0
    %3354 = vmatprep.subr.mxu0 0.0
    %3355 = vmatpush1.msra.mxu0 0.0
    %3356 = vmatprep.subr.mxu0 0.0
    %3357 = vmatpush1.msra.mxu0 0.0
    %3358 = vmatprep.subr.mxu0 0.0
    %3359 = vmatpush1.msra.mxu0 0.0
    %3360 = vmatprep.subr.mxu0 0.0
    %3361 = vmatpush1.msra.mxu0 0.0
    %3362 = vmatprep.subr.mxu0 0.0
    %3363 = vmatpush1.msra.mxu0 0.0
    %3364 = vmatprep.subr.mxu0 0.0
    %3365 = vmatpush1.msra.mxu0 %v3329
    %3366 = vmatprep.subr.mxu0 0.0
    %3367 = vmatpush2.msra.mxu0 0.0
    %3368 = vmatprep.subr.mxu0 0.0
    %3369 = vmatpush2.msra.mxu0 0.0
    %3370 = vmatprep.subr.mxu0 0.0
    %3371 = vmatpush2.msra.mxu0 0.0
    %3372 = vmatprep.subr.mxu0 0.0
    %3373 = vmatpush2.msra.mxu0 0.0
    %3374 = vmatprep.subr.mxu0 0.0
    %3375 = vmatpush2.msra.mxu0 0.0
    %3376 = vmatprep.subr.mxu0 0.0
    %3377 = vmatpush2.msra.mxu0 0.0
    %3378 = vmatprep.subr.mxu0 0.0
    %3379 = vmatpush2.msra.mxu0 0.0
    %3380 = vmatprep.subr.mxu0 0.0
    %3381 = vmatpush2.msra.mxu0 0.0
    %3382 = vmatprep.subr.mxu0 0.0
    %3383 = vmatpush2.msra.mxu0 0.0
    %3384 = vmatprep.subr.mxu0 0.0
    %3385 = vmatpush2.msra.mxu0 0.0
    %3386 = vmatprep.subr.mxu0 0.0
    %3387 = vmatpush2.msra.mxu0 0.0
    %3388 = vmatprep.subr.mxu0 0.0
    %3389 = vmatpush2.msra.mxu0 0.0
    %3390 = vmatprep.subr.mxu0 0.0
    %3391 = vmatpush2.msra.mxu0 0.0
    %3392 = vmatprep.subr.mxu0 0.0
    %3393 = vmatpush2.msra.mxu0 0.0
    %3394 = vmatprep.subr.mxu0 0.0
    %3395 = vmatpush2.msra.mxu0 0.0
    %3396 = vmatprep.subr.mxu0 0.0
    %3397 = vmatpush2.msra.mxu0 0.0
    %3398 = vmatprep.mubr.f32.mxu0 0.0
    %3399 = vmatmul.mubr.f32.gmra.mxu0 %v3332
    %v3400 = vpop.f32.mrf.mxu0
    %v3401 = vadd.f32 0.0, %v3400
    %v3402 = vpop.f32.mrf.mxu0
    %3403 = vdwg.mxu0
    %3406 = vrot.lane.b32.xlu0 %v2657, 8
    %v3407 = vpop.permute.xlu0 %3406
    %3408 = vrot.lane.b32.xlu0 %v2733, 8
    %v3409 = vpop.permute.xlu0 %3408
    %3414 = vrot.lane.b32.xlu0 %v2991, 16
    %v3415 = vpop.permute.xlu0 %3414
    %3416 = vrot.lane.b32.xlu0 %v3067, 16
    %v3417 = vpop.permute.xlu0 %3416
    %3422 = vrot.lane.b32.xlu0 %v3325, 24
    %v3423 = vpop.permute.xlu0 %3422
    %3424 = vrot.lane.b32.xlu0 %v3401, 24
    %v3425 = vpop.permute.xlu0 %3424
    %v3428 = vsel %vm217, %v2323, %v3407
    %v3429 = vsel %vm217, %v2399, %v3409
    %v3430 = vsel %vm1587, %v3428, %v3415
    %v3431 = vsel %vm1587, %v3429, %v3417
    %v3432 = vsel %vm1590, %v3430, %v3423
    %v3433 = vsel %vm1590, %v3431, %v3425
    %s3434 = scalar_lea.vmem %s7, 32
    %v3435 = vld [vmem:[%s3434] sm:$0xff]
    %v3436 = vld [vmem:[%s3434 + $0x8] sm:$0xff]
    %v3437 = vld [vmem:[%s3434 + $0x10] sm:$0xff]
    %v3438 = vld [vmem:[%s3434 + $0x18] sm:$0xff]
    %s3439 = scalar_lea.vmem %s8, 1
    %v3440 = vld [vmem:[%s3439] sm:$0x1]
    %v3442 = vlaneseq
    %v3443 = vshrl.u32 %v3442, 7
    %v3444 = vsub.s32 0, %v3443
    %v3445 = vrot.slane %v3440, %v3444
    %v3448 = vsel %vm78, %v3432, 0
    %v3451 = vsel %vm78, %v3433, 0
    %3453 = vmatprep.subr.mxu0 0.0
    %3454 = vmatpush1.msra.mxu0 0.0
    %3455 = vmatprep.subr.mxu0 0.0
    %3456 = vmatpush1.msra.mxu0 0.0
    %3457 = vmatprep.subr.mxu0 0.0
    %3458 = vmatpush1.msra.mxu0 0.0
    %3459 = vmatprep.subr.mxu0 0.0
    %3460 = vmatpush1.msra.mxu0 0.0
    %3461 = vmatprep.subr.mxu0 0.0
    %3462 = vmatpush1.msra.mxu0 0.0
    %3463 = vmatprep.subr.mxu0 0.0
    %3464 = vmatpush1.msra.mxu0 0.0
    %3465 = vmatprep.subr.mxu0 0.0
    %3466 = vmatpush1.msra.mxu0 0.0
    %3467 = vmatprep.subr.mxu0 0.0
    %3468 = vmatpush1.msra.mxu0 0.0
    %3469 = vmatprep.subr.mxu0 0.0
    %3470 = vmatpush1.msra.mxu0 0.0
    %3471 = vmatprep.subr.mxu0 0.0
    %3472 = vmatpush1.msra.mxu0 0.0
    %3473 = vmatprep.subr.mxu0 0.0
    %3474 = vmatpush1.msra.mxu0 0.0
    %3475 = vmatprep.subr.mxu0 0.0
    %3476 = vmatpush1.msra.mxu0 0.0
    %3477 = vmatprep.subr.mxu0 0.0
    %3478 = vmatpush1.msra.mxu0 %v3438
    %3479 = vmatprep.subr.mxu0 0.0
    %3480 = vmatpush1.msra.mxu0 %v3437
    %3481 = vmatprep.subr.mxu0 0.0
    %3482 = vmatpush1.msra.mxu0 %v3436
    %3483 = vmatprep.subr.mxu0 0.0
    %3484 = vmatpush1.msra.mxu0 %v3435
    %3485 = vmatprep.subr.mxu0 0.0
    %3486 = vmatpush2.msra.mxu0 0.0
    %3487 = vmatprep.subr.mxu0 0.0
    %3488 = vmatpush2.msra.mxu0 0.0
    %3489 = vmatprep.subr.mxu0 0.0
    %3490 = vmatpush2.msra.mxu0 0.0
    %3491 = vmatprep.subr.mxu0 0.0
    %3492 = vmatpush2.msra.mxu0 0.0
    %3493 = vmatprep.subr.mxu0 0.0
    %3494 = vmatpush2.msra.mxu0 0.0
    %3495 = vmatprep.subr.mxu0 0.0
    %3496 = vmatpush2.msra.mxu0 0.0
    %3497 = vmatprep.subr.mxu0 0.0
    %3498 = vmatpush2.msra.mxu0 0.0
    %3499 = vmatprep.subr.mxu0 0.0
    %3500 = vmatpush2.msra.mxu0 0.0
    %3501 = vmatprep.subr.mxu0 0.0
    %3502 = vmatpush2.msra.mxu0 0.0
    %3503 = vmatprep.subr.mxu0 0.0
    %3504 = vmatpush2.msra.mxu0 0.0
    %3505 = vmatprep.subr.mxu0 0.0
    %3506 = vmatpush2.msra.mxu0 0.0
    %3507 = vmatprep.subr.mxu0 0.0
    %3508 = vmatpush2.msra.mxu0 0.0
    %3509 = vmatprep.subr.mxu0 0.0
    %3510 = vmatpush2.msra.mxu0 0.0
    %3511 = vmatprep.subr.mxu0 0.0
    %3512 = vmatpush2.msra.mxu0 0.0
    %3513 = vmatprep.subr.mxu0 0.0
    %3514 = vmatpush2.msra.mxu0 0.0
    %3515 = vmatprep.subr.mxu0 0.0
    %3516 = vmatpush2.msra.mxu0 0.0
    %3517 = vmatprep.mubr.f32.mxu0 0.0
    %3518 = vmatmul.mubr.f32.gmra.mxu0 %v3448
    %v3519 = vpop.f32.mrf.mxu0
    %v3520 = vadd.f32 %v3445, %v3519
    %v3521 = vpop.f32.mrf.mxu0
    %3522 = vmatprep.mubr.f32.mxu0 0.0
    %3523 = vmatmul.mubr.f32.gmra.mxu0 %v3451
    %v3524 = vpop.f32.mrf.mxu0
    %v3525 = vadd.f32 %v3445, %v3524
    %v3526 = vpop.f32.mrf.mxu0
    %3527 = vdwg.mxu0
    %v3528 = vadd.f32 %v3520, %v1974
    %v3529 = vadd.f32 %v3525, %v1975
    %s3530 = scalar_lea.vmem %s9, 1
    %v3531 = vld [vmem:[%s3530] sm:$0x1]
    %s3532 = scalar_lea.vmem %s10, 1
    %v3533 = vld [vmem:[%s3532] sm:$0x1]
    %v3534 = vsel %vm78, %v3528, 0.0
    %3535 = vadd.xlane.f32.xlu0 %v3534
    %v3536 = vpop.xlane.xlu0 %3535
    %v3537 = vsel %vm78, %v3529, 0.0
    %3538 = vadd.xlane.f32.xlu0 %v3537
    %v3539 = vpop.xlane.xlu0 %3538
    %v3540 = vmul.f32 %v3536, %v85
    %v3541 = vmul.f32 %v3539, %v85
    %v3542 = vsub.f32 %v3528, %v3540
    %v3543 = vsub.f32 %v3529, %v3541
    %v3544 = vmul.f32 %v3542, %v3542
    %v3545 = vmul.f32 %v3543, %v3543
    %v3546 = vsel %vm78, %v3544, 0.0
    %3547 = vadd.xlane.f32.xlu0 %v3546
    %v3548 = vpop.xlane.xlu0 %3547
    %v3549 = vsel %vm78, %v3545, 0.0
    %3550 = vadd.xlane.f32.xlu0 %v3549
    %v3551 = vpop.xlane.xlu0 %3550
    %v3552 = vmul.f32 %v3548, %v85
    %v3553 = vmul.f32 %v3551, %v85
    %v3554 = vadd.f32 %v3552, 1e-12
    %v3555 = vadd.f32 %v3553, 1e-12
    %v3556 = vrsqrt.pop %v3554
    %v3557 = vrsqrt.pop %v3555
    %v3558 = vmul.f32 %v3542, %v3556
    %v3559 = vmul.f32 %v3543, %v3557
    %v3561 = vlaneseq
    %v3562 = vshrl.u32 %v3561, 7
    %v3563 = vsub.s32 0, %v3562
    %v3564 = vrot.slane %v3531, %v3563
    %v3566 = vmul.f32 %v3558, %v3564
    %v3567 = vmul.f32 %v3559, %v3564
    %v3569 = vlaneseq
    %v3570 = vshrl.u32 %v3569, 7
    %v3571 = vsub.s32 0, %v3570
    %v3572 = vrot.slane %v3533, %v3571
    %v3574 = vadd.f32 %v3566, %v3572
    %v3575 = vadd.f32 %v3567, %v3572
    %s3576 = scalar_lea.vmem %s11, 32
    %v3577 = vld [vmem:[%s3576] sm:$0xff]
    %v3578 = vld [vmem:[%s3576 + $0x8] sm:$0xff]
    %v3579 = vld [vmem:[%s3576 + $0x10] sm:$0xff]
    %v3580 = vld [vmem:[%s3576 + $0x18] sm:$0xff]
    %s3581 = scalar_lea.vmem %s12, 1
    %v3582 = vld [vmem:[%s3581] sm:$0x1]
    %v3584 = vlaneseq
    %v3585 = vshrl.u32 %v3584, 7
    %v3586 = vsub.s32 0, %v3585
    %v3587 = vrot.slane %v3582, %v3586
    %v3590 = vsel %vm78, %v3574, 0
    %v3593 = vsel %vm78, %v3575, 0
    %3595 = vmatprep.subr.mxu0 0.0
    %3596 = vmatpush1.msra.mxu0 0.0
    %3597 = vmatprep.subr.mxu0 0.0
    %3598 = vmatpush1.msra.mxu0 0.0
    %3599 = vmatprep.subr.mxu0 0.0
    %3600 = vmatpush1.msra.mxu0 0.0
    %3601 = vmatprep.subr.mxu0 0.0
    %3602 = vmatpush1.msra.mxu0 0.0
    %3603 = vmatprep.subr.mxu0 0.0
    %3604 = vmatpush1.msra.mxu0 0.0
    %3605 = vmatprep.subr.mxu0 0.0
    %3606 = vmatpush1.msra.mxu0 0.0
    %3607 = vmatprep.subr.mxu0 0.0
    %3608 = vmatpush1.msra.mxu0 0.0
    %3609 = vmatprep.subr.mxu0 0.0
    %3610 = vmatpush1.msra.mxu0 0.0
    %3611 = vmatprep.subr.mxu0 0.0
    %3612 = vmatpush1.msra.mxu0 0.0
    %3613 = vmatprep.subr.mxu0 0.0
    %3614 = vmatpush1.msra.mxu0 0.0
    %3615 = vmatprep.subr.mxu0 0.0
    %3616 = vmatpush1.msra.mxu0 0.0
    %3617 = vmatprep.subr.mxu0 0.0
    %3618 = vmatpush1.msra.mxu0 0.0
    %3619 = vmatprep.subr.mxu0 0.0
    %3620 = vmatpush1.msra.mxu0 %v3580
    %3621 = vmatprep.subr.mxu0 0.0
    %3622 = vmatpush1.msra.mxu0 %v3579
    %3623 = vmatprep.subr.mxu0 0.0
    %3624 = vmatpush1.msra.mxu0 %v3578
    %3625 = vmatprep.subr.mxu0 0.0
    %3626 = vmatpush1.msra.mxu0 %v3577
    %3627 = vmatprep.subr.mxu0 0.0
    %3628 = vmatpush2.msra.mxu0 0.0
    %3629 = vmatprep.subr.mxu0 0.0
    %3630 = vmatpush2.msra.mxu0 0.0
    %3631 = vmatprep.subr.mxu0 0.0
    %3632 = vmatpush2.msra.mxu0 0.0
    %3633 = vmatprep.subr.mxu0 0.0
    %3634 = vmatpush2.msra.mxu0 0.0
    %3635 = vmatprep.subr.mxu0 0.0
    %3636 = vmatpush2.msra.mxu0 0.0
    %3637 = vmatprep.subr.mxu0 0.0
    %3638 = vmatpush2.msra.mxu0 0.0
    %3639 = vmatprep.subr.mxu0 0.0
    %3640 = vmatpush2.msra.mxu0 0.0
    %3641 = vmatprep.subr.mxu0 0.0
    %3642 = vmatpush2.msra.mxu0 0.0
    %3643 = vmatprep.subr.mxu0 0.0
    %3644 = vmatpush2.msra.mxu0 0.0
    %3645 = vmatprep.subr.mxu0 0.0
    %3646 = vmatpush2.msra.mxu0 0.0
    %3647 = vmatprep.subr.mxu0 0.0
    %3648 = vmatpush2.msra.mxu0 0.0
    %3649 = vmatprep.subr.mxu0 0.0
    %3650 = vmatpush2.msra.mxu0 0.0
    %3651 = vmatprep.subr.mxu0 0.0
    %3652 = vmatpush2.msra.mxu0 0.0
    %3653 = vmatprep.subr.mxu0 0.0
    %3654 = vmatpush2.msra.mxu0 0.0
    %3655 = vmatprep.subr.mxu0 0.0
    %3656 = vmatpush2.msra.mxu0 0.0
    %3657 = vmatprep.subr.mxu0 0.0
    %3658 = vmatpush2.msra.mxu0 0.0
    %3659 = vmatprep.mubr.f32.mxu0 0.0
    %3660 = vmatmul.mubr.f32.gmra.mxu0 %v3590
    %v3661 = vpop.f32.mrf.mxu0
    %v3662 = vadd.f32 %v3587, %v3661
    %v3663 = vpop.f32.mrf.mxu0
    %3664 = vmatprep.mubr.f32.mxu0 0.0
    %3665 = vmatmul.mubr.f32.gmra.mxu0 %v3593
    %v3666 = vpop.f32.mrf.mxu0
    %v3667 = vadd.f32 %v3587, %v3666
    %v3668 = vpop.f32.mrf.mxu0
    %3669 = vdwg.mxu0
    %v3670 = vmul.f32 %v3662, 0.5
    %v3671 = vmul.f32 %v3667, 0.5
    %v3672 = vmul.f32 %v3662, 0.70710677
    %v3673 = vmul.f32 %v3667, 0.70710677
    %v3674 = verf.f32.pop %v3672
    %v3675 = verf.f32.pop %v3673
    %v3676 = vadd.f32 %v3674, 1.0
    %v3677 = vadd.f32 %v3675, 1.0
    %v3678 = vmul.f32 %v3670, %v3676
    %v3679 = vmul.f32 %v3671, %v3677
    %s3680 = scalar_lea.vmem %s13, 64
    %v3681 = vld [vmem:[%s3680] sm:$0xff]
    %v3682 = vld [vmem:[%s3680 + $0x8] sm:$0xff]
    %v3683 = vld [vmem:[%s3680 + $0x10] sm:$0xff]
    %v3684 = vld [vmem:[%s3680 + $0x18] sm:$0xff]
    %v3685 = vld [vmem:[%s3680 + $0x20] sm:$0xff]
    %v3686 = vld [vmem:[%s3680 + $0x28] sm:$0xff]
    %v3687 = vld [vmem:[%s3680 + $0x30] sm:$0xff]
    %v3688 = vld [vmem:[%s3680 + $0x38] sm:$0xff]
    %s3689 = scalar_lea.vmem %s14, 1
    %v3690 = vld [vmem:[%s3689] sm:$0x1]
    %v3692 = vlaneseq
    %v3693 = vshrl.u32 %v3692, 7
    %v3694 = vsub.s32 0, %v3693
    %v3695 = vrot.slane %v3690, %v3694
    %v3698 = vsel %vm1848, %v3678, 0
    %v3701 = vsel %vm1848, %v3679, 0
    %3703 = vmatprep.subr.mxu0 0.0
    %3704 = vmatpush1.msra.mxu0 0.0
    %3705 = vmatprep.subr.mxu0 0.0
    %3706 = vmatpush1.msra.mxu0 0.0
    %3707 = vmatprep.subr.mxu0 0.0
    %3708 = vmatpush1.msra.mxu0 0.0
    %3709 = vmatprep.subr.mxu0 0.0
    %3710 = vmatpush1.msra.mxu0 0.0
    %3711 = vmatprep.subr.mxu0 0.0
    %3712 = vmatpush1.msra.mxu0 0.0
    %3713 = vmatprep.subr.mxu0 0.0
    %3714 = vmatpush1.msra.mxu0 0.0
    %3715 = vmatprep.subr.mxu0 0.0
    %3716 = vmatpush1.msra.mxu0 0.0
    %3717 = vmatprep.subr.mxu0 0.0
    %3718 = vmatpush1.msra.mxu0 0.0
    %3719 = vmatprep.subr.mxu0 0.0
    %3720 = vmatpush1.msra.mxu0 %v3688
    %3721 = vmatprep.subr.mxu0 0.0
    %3722 = vmatpush1.msra.mxu0 %v3687
    %3723 = vmatprep.subr.mxu0 0.0
    %3724 = vmatpush1.msra.mxu0 %v3686
    %3725 = vmatprep.subr.mxu0 0.0
    %3726 = vmatpush1.msra.mxu0 %v3685
    %3727 = vmatprep.subr.mxu0 0.0
    %3728 = vmatpush1.msra.mxu0 %v3684
    %3729 = vmatprep.subr.mxu0 0.0
    %3730 = vmatpush1.msra.mxu0 %v3683
    %3731 = vmatprep.subr.mxu0 0.0
    %3732 = vmatpush1.msra.mxu0 %v3682
    %3733 = vmatprep.subr.mxu0 0.0
    %3734 = vmatpush1.msra.mxu0 %v3681
    %3735 = vmatprep.subr.mxu0 0.0
    %3736 = vmatpush2.msra.mxu0 0.0
    %3737 = vmatprep.subr.mxu0 0.0
    %3738 = vmatpush2.msra.mxu0 0.0
    %3739 = vmatprep.subr.mxu0 0.0
    %3740 = vmatpush2.msra.mxu0 0.0
    %3741 = vmatprep.subr.mxu0 0.0
    %3742 = vmatpush2.msra.mxu0 0.0
    %3743 = vmatprep.subr.mxu0 0.0
    %3744 = vmatpush2.msra.mxu0 0.0
    %3745 = vmatprep.subr.mxu0 0.0
    %3746 = vmatpush2.msra.mxu0 0.0
    %3747 = vmatprep.subr.mxu0 0.0
    %3748 = vmatpush2.msra.mxu0 0.0
    %3749 = vmatprep.subr.mxu0 0.0
    %3750 = vmatpush2.msra.mxu0 0.0
    %3751 = vmatprep.subr.mxu0 0.0
    %3752 = vmatpush2.msra.mxu0 0.0
    %3753 = vmatprep.subr.mxu0 0.0
    %3754 = vmatpush2.msra.mxu0 0.0
    %3755 = vmatprep.subr.mxu0 0.0
    %3756 = vmatpush2.msra.mxu0 0.0
    %3757 = vmatprep.subr.mxu0 0.0
    %3758 = vmatpush2.msra.mxu0 0.0
    %3759 = vmatprep.subr.mxu0 0.0
    %3760 = vmatpush2.msra.mxu0 0.0
    %3761 = vmatprep.subr.mxu0 0.0
    %3762 = vmatpush2.msra.mxu0 0.0
    %3763 = vmatprep.subr.mxu0 0.0
    %3764 = vmatpush2.msra.mxu0 0.0
    %3765 = vmatprep.subr.mxu0 0.0
    %3766 = vmatpush2.msra.mxu0 0.0
    %3767 = vmatprep.mubr.f32.mxu0 0.0
    %3768 = vmatmul.mubr.f32.gmra.mxu0 %v3698
    %v3769 = vpop.f32.mrf.mxu0
    %v3770 = vadd.f32 %v3695, %v3769
    %v3771 = vpop.f32.mrf.mxu0
    %3772 = vmatprep.mubr.f32.mxu0 0.0
    %3773 = vmatmul.mubr.f32.gmra.mxu0 %v3701
    %v3774 = vpop.f32.mrf.mxu0
    %v3775 = vadd.f32 %v3695, %v3774
    %v3776 = vpop.f32.mrf.mxu0
    %3777 = vdwg.mxu0
    %v3778 = vadd.f32 %v3770, %v3574
    %v3779 = vadd.f32 %v3775, %v3575
    %s3780 = scalar_lea.vmem %s15, 1
    %v3781 = vld [vmem:[%s3780] sm:$0x1]
    %s3782 = scalar_lea.vmem %s16, 1
    %v3783 = vld [vmem:[%s3782] sm:$0x1]
    %v3784 = vsel %vm78, %v3778, 0.0
    %3785 = vadd.xlane.f32.xlu0 %v3784
    %v3786 = vpop.xlane.xlu0 %3785
    %v3787 = vsel %vm78, %v3779, 0.0
    %3788 = vadd.xlane.f32.xlu0 %v3787
    %v3789 = vpop.xlane.xlu0 %3788
    %v3790 = vmul.f32 %v3786, %v85
    %v3791 = vmul.f32 %v3789, %v85
    %v3792 = vsub.f32 %v3778, %v3790
    %v3793 = vsub.f32 %v3779, %v3791
    %v3794 = vmul.f32 %v3792, %v3792
    %v3795 = vmul.f32 %v3793, %v3793
    %v3796 = vsel %vm78, %v3794, 0.0
    %3797 = vadd.xlane.f32.xlu0 %v3796
    %v3798 = vpop.xlane.xlu0 %3797
    %v3799 = vsel %vm78, %v3795, 0.0
    %3800 = vadd.xlane.f32.xlu0 %v3799
    %v3801 = vpop.xlane.xlu0 %3800
    %v3802 = vmul.f32 %v3798, %v85
    %v3803 = vmul.f32 %v3801, %v85
    %v3804 = vadd.f32 %v3802, 1e-12
    %v3805 = vadd.f32 %v3803, 1e-12
    %v3806 = vrsqrt.pop %v3804
    %v3807 = vrsqrt.pop %v3805
    %v3808 = vmul.f32 %v3792, %v3806
    %v3809 = vmul.f32 %v3793, %v3807
    %v3811 = vlaneseq
    %v3812 = vshrl.u32 %v3811, 7
    %v3813 = vsub.s32 0, %v3812
    %v3814 = vrot.slane %v3781, %v3813
    %v3816 = vmul.f32 %v3808, %v3814
    %v3817 = vmul.f32 %v3809, %v3814
    %v3819 = vlaneseq
    %v3820 = vshrl.u32 %v3819, 7
    %v3821 = vsub.s32 0, %v3820
    %v3822 = vrot.slane %v3783, %v3821
    %v3824 = vadd.f32 %v3816, %v3822
    %v3825 = vadd.f32 %v3817, %v3822
    %v3827 = vrot.slane %v3825, 7
    %vm3829 = vcmask 1040384
    %v3830 = vsel %vm3829, %v3824, %v3827
    %v3831 = vld [vmem:[%s17] sm:$0xff]
    %v3832 = vld [vmem:[%s17 + $0x8] sm:$0xff]
    %v3833 = vld [vmem:[%s17 + $0x10] sm:$0xff]
    %v3834 = vld [vmem:[%s17 + $0x18] sm:$0xff]
    %v3835 = vld [vmem:[%s18] sm:$0x1]
    %v3837 = vlaneseq
    %v3838 = vshrl.u32 %v3837, 7
    %v3839 = vsub.s32 0, %v3838
    %v3840 = vrot.slane %v3835, %v3839
    %v3843 = vsel %vm78, %v3830, 0
    %3845 = vmatprep.subr.mxu0 0.0
    %3846 = vmatpush1.msra.mxu0 0.0
    %3847 = vmatprep.subr.mxu0 0.0
    %3848 = vmatpush1.msra.mxu0 0.0
    %3849 = vmatprep.subr.mxu0 0.0
    %3850 = vmatpush1.msra.mxu0 0.0
    %3851 = vmatprep.subr.mxu0 0.0
    %3852 = vmatpush1.msra.mxu0 0.0
    %3853 = vmatprep.subr.mxu0 0.0
    %3854 = vmatpush1.msra.mxu0 0.0
    %3855 = vmatprep.subr.mxu0 0.0
    %3856 = vmatpush1.msra.mxu0 0.0
    %3857 = vmatprep.subr.mxu0 0.0
    %3858 = vmatpush1.msra.mxu0 0.0
    %3859 = vmatprep.subr.mxu0 0.0
    %3860 = vmatpush1.msra.mxu0 0.0
    %3861 = vmatprep.subr.mxu0 0.0
    %3862 = vmatpush1.msra.mxu0 0.0
    %3863 = vmatprep.subr.mxu0 0.0
    %3864 = vmatpush1.msra.mxu0 0.0
    %3865 = vmatprep.subr.mxu0 0.0
    %3866 = vmatpush1.msra.mxu0 0.0
    %3867 = vmatprep.subr.mxu0 0.0
    %3868 = vmatpush1.msra.mxu0 0.0
    %3869 = vmatprep.subr.mxu0 0.0
    %3870 = vmatpush1.msra.mxu0 %v3834
    %3871 = vmatprep.subr.mxu0 0.0
    %3872 = vmatpush1.msra.mxu0 %v3833
    %3873 = vmatprep.subr.mxu0 0.0
    %3874 = vmatpush1.msra.mxu0 %v3832
    %3875 = vmatprep.subr.mxu0 0.0
    %3876 = vmatpush1.msra.mxu0 %v3831
    %3877 = vmatprep.subr.mxu0 0.0
    %3878 = vmatpush2.msra.mxu0 0.0
    %3879 = vmatprep.subr.mxu0 0.0
    %3880 = vmatpush2.msra.mxu0 0.0
    %3881 = vmatprep.subr.mxu0 0.0
    %3882 = vmatpush2.msra.mxu0 0.0
    %3883 = vmatprep.subr.mxu0 0.0
    %3884 = vmatpush2.msra.mxu0 0.0
    %3885 = vmatprep.subr.mxu0 0.0
    %3886 = vmatpush2.msra.mxu0 0.0
    %3887 = vmatprep.subr.mxu0 0.0
    %3888 = vmatpush2.msra.mxu0 0.0
    %3889 = vmatprep.subr.mxu0 0.0
    %3890 = vmatpush2.msra.mxu0 0.0
    %3891 = vmatprep.subr.mxu0 0.0
    %3892 = vmatpush2.msra.mxu0 0.0
    %3893 = vmatprep.subr.mxu0 0.0
    %3894 = vmatpush2.msra.mxu0 0.0
    %3895 = vmatprep.subr.mxu0 0.0
    %3896 = vmatpush2.msra.mxu0 0.0
    %3897 = vmatprep.subr.mxu0 0.0
    %3898 = vmatpush2.msra.mxu0 0.0
    %3899 = vmatprep.subr.mxu0 0.0
    %3900 = vmatpush2.msra.mxu0 0.0
    %3901 = vmatprep.subr.mxu0 0.0
    %3902 = vmatpush2.msra.mxu0 0.0
    %3903 = vmatprep.subr.mxu0 0.0
    %3904 = vmatpush2.msra.mxu0 0.0
    %3905 = vmatprep.subr.mxu0 0.0
    %3906 = vmatpush2.msra.mxu0 0.0
    %3907 = vmatprep.subr.mxu0 0.0
    %3908 = vmatpush2.msra.mxu0 0.0
    %3909 = vmatprep.mubr.f32.mxu0 0.0
    %3910 = vmatmul.mubr.f32.gmra.mxu0 %v3843
    %v3911 = vpop.f32.mrf.mxu0
    %v3912 = vadd.f32 %v3840, %v3911
    %v3913 = vpop.f32.mrf.mxu0
    %3914 = vdwg.mxu0
    %v3915 = vtanh.pop %v3912
    %v3916 = vld [vmem:[%s19] sm:$0xff]
    %v3917 = vld [vmem:[%s19 + $0x8] sm:$0xff]
    %v3918 = vld [vmem:[%s19 + $0x10] sm:$0xff]
    %v3919 = vld [vmem:[%s19 + $0x18] sm:$0xff]
    %v3920 = vld [vmem:[%s20] sm:$0x1]
    %v3922 = vlaneseq
    %v3923 = vshrl.u32 %v3922, 7
    %v3924 = vsub.s32 0, %v3923
    %v3925 = vrot.slane %v3920, %v3924
    %v3928 = vsel %vm78, %v3915, 0
    %3930 = vmatprep.subr.mxu0 0.0
    %3931 = vmatpush1.msra.mxu0 0.0
    %3932 = vmatprep.subr.mxu0 0.0
    %3933 = vmatpush1.msra.mxu0 0.0
    %3934 = vmatprep.subr.mxu0 0.0
    %3935 = vmatpush1.msra.mxu0 0.0
    %3936 = vmatprep.subr.mxu0 0.0
    %3937 = vmatpush1.msra.mxu0 0.0
    %3938 = vmatprep.subr.mxu0 0.0
    %3939 = vmatpush1.msra.mxu0 0.0
    %3940 = vmatprep.subr.mxu0 0.0
    %3941 = vmatpush1.msra.mxu0 0.0
    %3942 = vmatprep.subr.mxu0 0.0
    %3943 = vmatpush1.msra.mxu0 0.0
    %3944 = vmatprep.subr.mxu0 0.0
    %3945 = vmatpush1.msra.mxu0 0.0
    %3946 = vmatprep.subr.mxu0 0.0
    %3947 = vmatpush1.msra.mxu0 0.0
    %3948 = vmatprep.subr.mxu0 0.0
    %3949 = vmatpush1.msra.mxu0 0.0
    %3950 = vmatprep.subr.mxu0 0.0
    %3951 = vmatpush1.msra.mxu0 0.0
    %3952 = vmatprep.subr.mxu0 0.0
    %3953 = vmatpush1.msra.mxu0 0.0
    %3954 = vmatprep.subr.mxu0 0.0
    %3955 = vmatpush1.msra.mxu0 %v3919
    %3956 = vmatprep.subr.mxu0 0.0
    %3957 = vmatpush1.msra.mxu0 %v3918
    %3958 = vmatprep.subr.mxu0 0.0
    %3959 = vmatpush1.msra.mxu0 %v3917
    %3960 = vmatprep.subr.mxu0 0.0
    %3961 = vmatpush1.msra.mxu0 %v3916
    %3962 = vmatprep.subr.mxu0 0.0
    %3963 = vmatpush2.msra.mxu0 0.0
    %3964 = vmatprep.subr.mxu0 0.0
    %3965 = vmatpush2.msra.mxu0 0.0
    %3966 = vmatprep.subr.mxu0 0.0
    %3967 = vmatpush2.msra.mxu0 0.0
    %3968 = vmatprep.subr.mxu0 0.0
    %3969 = vmatpush2.msra.mxu0 0.0
    %3970 = vmatprep.subr.mxu0 0.0
    %3971 = vmatpush2.msra.mxu0 0.0
    %3972 = vmatprep.subr.mxu0 0.0
    %3973 = vmatpush2.msra.mxu0 0.0
    %3974 = vmatprep.subr.mxu0 0.0
    %3975 = vmatpush2.msra.mxu0 0.0
    %3976 = vmatprep.subr.mxu0 0.0
    %3977 = vmatpush2.msra.mxu0 0.0
    %3978 = vmatprep.subr.mxu0 0.0
    %3979 = vmatpush2.msra.mxu0 0.0
    %3980 = vmatprep.subr.mxu0 0.0
    %3981 = vmatpush2.msra.mxu0 0.0
    %3982 = vmatprep.subr.mxu0 0.0
    %3983 = vmatpush2.msra.mxu0 0.0
    %3984 = vmatprep.subr.mxu0 0.0
    %3985 = vmatpush2.msra.mxu0 0.0
    %3986 = vmatprep.subr.mxu0 0.0
    %3987 = vmatpush2.msra.mxu0 0.0
    %3988 = vmatprep.subr.mxu0 0.0
    %3989 = vmatpush2.msra.mxu0 0.0
    %3990 = vmatprep.subr.mxu0 0.0
    %3991 = vmatpush2.msra.mxu0 0.0
    %3992 = vmatprep.subr.mxu0 0.0
    %3993 = vmatpush2.msra.mxu0 0.0
    %3994 = vmatprep.mubr.f32.mxu0 0.0
    %3995 = vmatmul.mubr.f32.gmra.mxu0 %v3928
    %v3996 = vpop.f32.mrf.mxu0
    %v3997 = vadd.f32 %v3925, %v3996
    %v3998 = vpop.f32.mrf.mxu0
    %3999 = vdwg.mxu0
    %vm4000 = vcmask 17408
    %4001 = vst.msk [vmem:[#allocation2] sm:$0x3] %vm4000, %v3997
    %v4002 = vsel %vm4000, %v3997, -inf
    %4003 = vmax.xlane.f32.xlu0 %v4002
    %v4004 = vpop.xlane.xlu0 %4003
    %v4005 = vsub.f32 %v3997, %v4004
    %v4006 = vmul.f32 %v4005, 1.442695
    %v4007 = vpow.pop %v4006
    %v4008 = vsel %vm4000, %v4007, 0.0
    %4009 = vadd.xlane.f32.xlu0 %v4008
    %v4010 = vpop.xlane.xlu0 %4009
    %v4011 = vlog2.pop %v4010
    %v4012 = vmul.f32 %v4011, 0.6931472
    %v4013 = vsub.f32 %v4005, %v4012
    %v4014 = vld [vmem:[%s2] sm:$0x3]
    %v4015 = vmul.f32 %v4013, %v4014
    %v4016 = vsel %vm4000, %v4015, 0.0
    %4017 = vadd.xlane.f32.xlu0 %v4016
    %v4018 = vpop.xlane.xlu0 %4017
    %v4019 = vsub.f32 0.0, %v4018
    %vm4020 = vcmask 1024
    %v4021 = vsel %vm4020, %v4019, 0.0
    %4022 = vadd.xlane.f32.xlu0 %v4021
    %v4023 = vpop.xlane.xlu0 %4022
    %v4024 = vrot.slane %v4023, 4
    %v4025 = vadd.f32 %v4023, %v4024
    %v4026 = vrot.slane %v4025, 2
    %v4027 = vadd.f32 %v4025, %v4026
    %v4028 = vrot.slane %v4027, 1
    %v4029 = vadd.f32 %v4027, %v4028
    %s4030 = vtos %v4029
    %v4031 = vstv %s4030
    %v4032 = vrcp.pop 2.0
    %v4033 = vmul.f32 %v4031, %v4032
    %vm4034 = vcmask 0
    %4035 = vst.msk [vmem:[#allocation4] sm:$0x1] %vm4034, %v4033
    // Predicated region
    $region86: #{sentiment_classifier_forward.1} parent=1 // pred_check
      _
    $region87: #{sentiment_classifier_forward.1} parent=1 // pred_check_branch
      %4037 = sbr.rel (0) target = $region89
    $region88: #{sentiment_classifier_forward.1} parent=1 // pred_region
      %s4039 = ssub.s32 32, 32
      %4040 = vsyncadd [#allocation3], %s4039
      %s4042 = sshll.u32 [#allocation2], 4
      %s4043 = int_to_ptr.vmem [resolvable:$true] %s4042
      %4045 = dma.vmem_to_hbm [thread:$0]  %s4043, 32, %s21, [#allocation3]
    $region89: #{sentiment_classifier_forward.1} parent=1 // pred_fallthru
      _
    // Predicated region
    $region90: #{sentiment_classifier_forward.1} parent=1 // pred_check
      _
    $region91: #{sentiment_classifier_forward.1} parent=1 // pred_check_branch
      %4047 = sbr.rel (0) target = $region93
    $region92: #{sentiment_classifier_forward.1} parent=1 // pred_region
      %s4049 = ssub.s32 16, 16
      %4050 = vsyncadd [#allocation5], %s4049
      %s4052 = sshll.u32 [#allocation4], 4
      %s4053 = int_to_ptr.vmem [resolvable:$true] %s4052
      %4055 = dma.vmem_to_hbm [thread:$0]  %s4053, 16, %s22, [#allocation5]
    $region93: #{sentiment_classifier_forward.1} parent=1 // pred_fallthru
      _
    // Predicated region
    $region94: #{sentiment_classifier_forward.1} parent=1 // pred_check
      _
    $region95: #{sentiment_classifier_forward.1} parent=1 // pred_check_branch
      %4057 = sbr.rel (0) target = $region97
    $region96: #{sentiment_classifier_forward.1} parent=1 // pred_region
      %4058 = dma.done [#allocation3], 32
    $region97: #{sentiment_classifier_forward.1} parent=1 // pred_fallthru
      _
    // Predicated region
    $region98: #{sentiment_classifier_forward.1} parent=1 // pred_check
      _
    $region99: #{sentiment_classifier_forward.1} parent=1 // pred_check_branch
      %4060 = sbr.rel (0) target = $region101
    $region100: #{sentiment_classifier_forward.1} parent=1 // pred_region
      %4061 = dma.done [#allocation5], 16
    $region101: #{sentiment_classifier_forward.1} parent=1 // pred_fallthru
      _
    %4062 = vsyncpa [#allocation3], 1
    %4063 = vsyncpa [#allocation5], 1

</llo_original>
